<compile_context>
chip_gen: v5e
topology: v5e:2x2
jax: 0.10.0
libtpu: 0.0.40
codegen_flags: <defaults>
</compile_context>

<pallas_src>
import math
import jax
import jax.numpy as jnp
import numpy as np
from jax import lax
from jax.experimental import pallas as pl
from jax.experimental.pallas import tpu as pltpu

# ---- model hyperparameters (fixed by the module's __init__ defaults) ----
WORD_EMB = 50
POS_EMB = 5
D_MODEL = WORD_EMB + 2 * POS_EMB      # 60
NUM_HEADS = 10
HEAD_DIM = D_MODEL // NUM_HEADS       # 6
DIM_FF = 2048                         # nn.TransformerEncoderLayer default
NUM_LAYERS = 2
LN_EPS = 1e-5
VEC_W = 256                           # lane-padded width of packed small-vector slab


def _layernorm(x, w, b):
    mu = jnp.mean(x, axis=-1, keepdims=True)
    var = jnp.mean((x - mu) ** 2, axis=-1, keepdims=True)
    return (x - mu) * lax.rsqrt(var + LN_EPS) * w + b


def encoder_kernel(x_ref, wqkvo_ref, w1_ref, b1_ref, w2_ref, vecs_ref, o_ref):
    # x_ref block: (1, S, D) -- one batch element per grid step; both layers
    # of the encoder run inside this kernel body.
    S = x_ref.shape[1]
    D = D_MODEL
    H = NUM_HEADS

    x = x_ref[0].astype(jnp.float32)                                   # (S, D)

    # Head-indicator matrices (constants, built once per grid step):
    #   ind[d, h]   = 1.0 if feature d belongs to head h
    #   ind_t[h, d] = ind[d, h]
    d_i = lax.broadcasted_iota(jnp.int32, (D, H), 0)
    h_i = lax.broadcasted_iota(jnp.int32, (D, H), 1) * HEAD_DIM
    ind = ((d_i >= h_i) & (d_i < h_i + HEAD_DIM)).astype(jnp.float32)  # (D, H)
    h_j = lax.broadcasted_iota(jnp.int32, (H, D), 0) * HEAD_DIM
    d_j = lax.broadcasted_iota(jnp.int32, (H, D), 1)
    ind_t = ((d_j >= h_j) & (d_j < h_j + HEAD_DIM)).astype(jnp.float32)  # (H, D)

    for l in range(NUM_LAYERS):                       # static unroll: 2 layers
        wqkvo = wqkvo_ref[l]                          # (D, 4D) fused q|k|v|o weights
        vec = vecs_ref[l]                             # (8, VEC_W) packed small vectors
        bqkv = vec[0:1, 0:3 * D]                      # (1, 3D)
        bo   = vec[1:2, 0:D]
        ln1w = vec[2:3, 0:D]
        ln1b = vec[3:4, 0:D]
        b2   = vec[4:5, 0:D]
        ln2w = vec[5:6, 0:D]
        ln2b = vec[6:7, 0:D]

        # --- multi-head self-attention (all heads at once) ---
        # fused QKV projection; 1/sqrt(head_dim) already folded into q weights/bias
        qkv = jnp.dot(x, wqkvo[:, 0:3 * D],
                      preferred_element_type=jnp.float32) + bqkv      # (S, 3D)
        q = qkv[:, 0:D]
        k = qkv[:, D:2 * D]
        v = qkv[:, 2 * D:3 * D]

        # scores[i, j, h] = sum_d q[i,d] * k[j,d] * ind[d,h]
        e = (q[:, None, :] * k[None, :, :]).reshape(S * S, D)         # (S*S, D)
        s = jnp.dot(e, ind, preferred_element_type=jnp.float32)       # (S*S, H)
        s = s.reshape(S, S, H)                                        # (i, j, h)

        # softmax over the key axis (axis=1)
        s = s - jnp.max(s, axis=1, keepdims=True)
        p = jnp.exp(s)
        p = p * pl.reciprocal(jnp.sum(p, axis=1, keepdims=True), approx=True)

        # expand probabilities back to feature space and contract with V:
        # ctx[i, d] = sum_j p[i, j, head(d)] * v[j, d]
        pe = jnp.dot(p.reshape(S * S, H), ind_t,
                     preferred_element_type=jnp.float32).reshape(S, S, D)
        ctx = jnp.sum(pe * v[None, :, :], axis=1)                     # (S, D)

        attn = jnp.dot(ctx, wqkvo[:, 3 * D:4 * D],
                       preferred_element_type=jnp.float32) + bo

        # post-norm residual 1 (dropout is identity at inference)
        x1 = _layernorm(x + attn, ln1w, ln1b)

        # --- feed-forward ---
        hmid = jnp.maximum(
            jnp.dot(x1, w1_ref[l], preferred_element_type=jnp.float32) + b1_ref[l],
            0.0)
        ff = jnp.dot(hmid, w2_ref[l], preferred_element_type=jnp.float32) + b2

        # post-norm residual 2
        x = _layernorm(x1 + ff, ln2w, ln2b)

    o_ref[0] = x.astype(o_ref.dtype)


def pack_params(layer_params):
    """Pack per-layer params into a few large, lane-friendly slabs."""
    scale = 1.0 / math.sqrt(HEAD_DIM)
    wqkvo_l, w1_l, b1_l, w2_l, vecs_l = [], [], [], [], []
    for p in layer_params:
        # fused q|k|v|o weight; fold the attention scale into the q columns
        wqkvo_l.append(jnp.concatenate(
            [p["wq"] * scale, p["wk"], p["wv"], p["wo"]], axis=1))     # (D, 4D)
        w1_l.append(p["w1"])                                           # (D, FF)
        b1_l.append(p["b1"])                                           # (1, FF)
        w2_l.append(p["w2"])                                           # (FF, D)

        bqkv = jnp.concatenate([p["bq"] * scale, p["bk"], p["bv"]], axis=1)  # (1, 3D)
        vec = jnp.zeros((8, VEC_W), jnp.float32)
        vec = vec.at[0, 0:3 * D_MODEL].set(bqkv[0])
        vec = vec.at[1, 0:D_MODEL].set(p["bo"][0])
        vec = vec.at[2, 0:D_MODEL].set(p["ln1w"][0])
        vec = vec.at[3, 0:D_MODEL].set(p["ln1b"][0])
        vec = vec.at[4, 0:D_MODEL].set(p["b2"][0])
        vec = vec.at[5, 0:D_MODEL].set(p["ln2w"][0])
        vec = vec.at[6, 0:D_MODEL].set(p["ln2b"][0])
        vecs_l.append(vec)

    return (jnp.stack(wqkvo_l),   # (L, D, 4D)
            jnp.stack(w1_l),      # (L, D, FF)
            jnp.stack(b1_l),      # (L, 1, FF)
            jnp.stack(w2_l),      # (L, FF, D)
            jnp.stack(vecs_l))    # (L, 8, VEC_W)


def encoder_forward(inputs_snd, layer_params):
    """Mirrors Encoder.forward: inputs (S, N, D) -> (S, N, D)."""
    x = jnp.transpose(inputs_snd, (1, 0, 2))        # (N, S, D)
    N, S, D = x.shape
    wqkvo, w1, b1, w2, vecs = pack_params(layer_params)

    const3 = lambda b: (0, 0, 0)                    # weights: fetched once, reused
    out = pl.pallas_call(
        encoder_kernel,
        out_shape=jax.ShapeDtypeStruct((N, S, D), x.dtype),
        grid=(N,),
        in_specs=[
            pl.BlockSpec((1, S, D), lambda b: (b, 0, 0)),
            pl.BlockSpec(wqkvo.shape, const3),
            pl.BlockSpec(w1.shape, const3),
            pl.BlockSpec(b1.shape, const3),
            pl.BlockSpec(w2.shape, const3),
            pl.BlockSpec(vecs.shape, const3),
        ],
        out_specs=pl.BlockSpec((1, S, D), lambda b: (b, 0, 0)),
        compiler_params=pltpu.CompilerParams(
            dimension_semantics=("parallel",)),      # batch over both TCs on v7x
    )(x, wqkvo, w1, b1, w2, vecs)
    return jnp.transpose(out, (1, 0, 2))             # back to (S, N, D)


# ---------------- deterministic parameter init (synthetic) ----------------
def init_layer_params(key):
    ks = jax.random.split(key, 12)
    s = 0.05
    n = jax.random.normal
    return {
        # attention in-projection, stored pre-transposed so kernel does x @ W
        "wq": n(ks[0], (D_MODEL, D_MODEL), jnp.float32) * s,
        "bq": n(ks[1], (1, D_MODEL), jnp.float32) * s,
        "wk": n(ks[2], (D_MODEL, D_MODEL), jnp.float32) * s,
        "bk": n(ks[3], (1, D_MODEL), jnp.float32) * s,
        "wv": n(ks[4], (D_MODEL, D_MODEL), jnp.float32) * s,
        "bv": n(ks[5], (1, D_MODEL), jnp.float32) * s,
        "wo": n(ks[6], (D_MODEL, D_MODEL), jnp.float32) * s,
        "bo": n(ks[7], (1, D_MODEL), jnp.float32) * s,
        "ln1w": jnp.ones((1, D_MODEL), jnp.float32),
        "ln1b": jnp.zeros((1, D_MODEL), jnp.float32),
        "w1": n(ks[8], (D_MODEL, DIM_FF), jnp.float32) * s,
        "b1": n(ks[9], (1, DIM_FF), jnp.float32) * s,
        "w2": n(ks[10], (DIM_FF, D_MODEL), jnp.float32) * s,
        "b2": n(ks[11], (1, D_MODEL), jnp.float32) * s,
        "ln2w": jnp.ones((1, D_MODEL), jnp.float32),
        "ln2b": jnp.zeros((1, D_MODEL), jnp.float32),
    }


# ---------------- pure-JAX reference (PyTorch semantics, unpacked params) ----
def ref_layer(x, p):  # x: (N, S, D)
    q = x @ p["wq"] + p["bq"]
    k = x @ p["wk"] + p["bk"]
    v = x @ p["wv"] + p["bv"]
    N, S, D = x.shape
    qh = q.reshape(N, S, NUM_HEADS, HEAD_DIM)
    kh = k.reshape(N, S, NUM_HEADS, HEAD_DIM)
    vh = v.reshape(N, S, NUM_HEADS, HEAD_DIM)
    s = jnp.einsum("nqhd,nkhd->nhqk", qh, kh) / math.sqrt(HEAD_DIM)
    p_attn = jax.nn.softmax(s, axis=-1)
    ctx = jnp.einsum("nhqk,nkhd->nqhd", p_attn, vh).reshape(N, S, D)
    attn = ctx @ p["wo"] + p["bo"]
    x1 = _layernorm(x + attn, p["ln1w"], p["ln1b"])
    ff = jnp.maximum(x1 @ p["w1"] + p["b1"], 0.0) @ p["w2"] + p["b2"]
    return _layernorm(x1 + ff, p["ln2w"], p["ln2b"])


def ref_forward(inputs_snd, layer_params):
    x = jnp.transpose(inputs_snd, (1, 0, 2))
    for p in layer_params:
        x = ref_layer(x, p)
    return jnp.transpose(x, (1, 0, 2))


if __name__ == "__main__":
    MAX_LENGTH = 8   # seq length
    BATCH = 2

    key = jax.random.PRNGKey(0)
    k_in, k_l0, k_l1 = jax.random.split(key, 3)

    # PyTorch Encoder.forward input: (seq, batch, embedding_dim)
    inputs = jax.random.normal(k_in, (MAX_LENGTH, BATCH, D_MODEL), jnp.float32)
    layer_params = [init_layer_params(k_l0), init_layer_params(k_l1)]

    fwd = jax.jit(encoder_forward)
    out = jax.block_until_ready(fwd(inputs, layer_params))

    ref = jax.block_until_ready(ref_forward(inputs, layer_params))
    # tolerance slightly above 1e-3: approx-reciprocal softmax + fused/folded
    # weight packing shift numerics by a few 1e-4 vs. the pure-f32 reference.
    np.testing.assert_allclose(np.asarray(out), np.asarray(ref),
                               rtol=2e-3, atol=2e-3)

    assert out.shape == (MAX_LENGTH, BATCH, D_MODEL)
    print("KERNEL_OK")
</pallas_src>

<mosaic_0001>
module attributes {stable_mosaic.version = 11 : i64} {
  func.func @encoder_kernel(%arg0: i32, %arg1: memref<1x8x60xf32, #tpu.memory_space<vmem>>, %arg2: memref<2x60x240xf32, #tpu.memory_space<vmem>>, %arg3: memref<2x60x2048xf32, #tpu.memory_space<vmem>>, %arg4: memref<2x1x2048xf32, #tpu.memory_space<vmem>>, %arg5: memref<2x2048x60xf32, #tpu.memory_space<vmem>>, %arg6: memref<2x8x256xf32, #tpu.memory_space<vmem>>, %arg7: memref<1x8x60xf32, #tpu.memory_space<vmem>>) attributes {dimension_semantics = [#tpu.dimension_semantics<parallel>], iteration_bounds = array<i64: 2>, scalar_prefetch = 0 : i64, scratch_operands = 0 : i64, tpu.core_type = #tpu.core_type<tc>, window_params = [{transform_indices = @transform_0, window_bounds = array<i64: 1, 8, 60>}, {pipeline_mode = #tpu.pipeline_mode<synchronous>, transform_indices = @transform_1, window_bounds = array<i64: 2, 60, 240>}, {pipeline_mode = #tpu.pipeline_mode<synchronous>, transform_indices = @transform_2, window_bounds = array<i64: 2, 60, 2048>}, {pipeline_mode = #tpu.pipeline_mode<synchronous>, transform_indices = @transform_3, window_bounds = array<i64: 2, 1, 2048>}, {pipeline_mode = #tpu.pipeline_mode<synchronous>, transform_indices = @transform_4, window_bounds = array<i64: 2, 2048, 60>}, {pipeline_mode = #tpu.pipeline_mode<synchronous>, transform_indices = @transform_5, window_bounds = array<i64: 2, 8, 256>}, {transform_indices = @transform_6, window_bounds = array<i64: 1, 8, 60>}]} {
    %c0 = arith.constant 0 : index
    %c0_0 = arith.constant 0 : index
    %c0_1 = arith.constant 0 : index
    %0 = vector.load %arg1[%c0, %c0_0, %c0_1] : memref<1x8x60xf32, #tpu.memory_space<vmem>>, vector<1x8x60xf32>
    %1 = vector.shape_cast %0 : vector<1x8x60xf32> to vector<8x60xf32>
    %2 = tpu.iota {dimensions = array<i32: 0>} : vector<60x10xi32>
    %3 = tpu.iota {dimensions = array<i32: 1>} : vector<60x10xi32>
    %c6_i32 = arith.constant 6 : i32
    %4 = vector.broadcast %c6_i32 : i32 to vector<60x10xi32>
    %5 = arith.muli %3, %4 : vector<60x10xi32>
    %6 = arith.cmpi sge, %2, %5 : vector<60x10xi32>
    %c6_i32_2 = arith.constant 6 : i32
    %7 = vector.broadcast %c6_i32_2 : i32 to vector<60x10xi32>
    %8 = arith.addi %5, %7 : vector<60x10xi32>
    %9 = arith.cmpi slt, %2, %8 : vector<60x10xi32>
    %10 = arith.andi %6, %9 : vector<60x10xi1>
    %11 = arith.extui %10 : vector<60x10xi1> to vector<60x10xi32>
    %12 = arith.sitofp %11 : vector<60x10xi32> to vector<60x10xf32>
    %13 = tpu.iota {dimensions = array<i32: 0>} : vector<10x60xi32>
    %c6_i32_3 = arith.constant 6 : i32
    %14 = vector.broadcast %c6_i32_3 : i32 to vector<10x60xi32>
    %15 = arith.muli %13, %14 : vector<10x60xi32>
    %16 = tpu.iota {dimensions = array<i32: 1>} : vector<10x60xi32>
    %17 = arith.cmpi sge, %16, %15 : vector<10x60xi32>
    %c6_i32_4 = arith.constant 6 : i32
    %18 = vector.broadcast %c6_i32_4 : i32 to vector<10x60xi32>
    %19 = arith.addi %15, %18 : vector<10x60xi32>
    %20 = arith.cmpi slt, %16, %19 : vector<10x60xi32>
    %21 = arith.andi %17, %20 : vector<10x60xi1>
    %22 = arith.extui %21 : vector<10x60xi1> to vector<10x60xi32>
    %23 = arith.sitofp %22 : vector<10x60xi32> to vector<10x60xf32>
    %c0_5 = arith.constant 0 : index
    %c0_6 = arith.constant 0 : index
    %c0_7 = arith.constant 0 : index
    %24 = vector.load %arg2[%c0_5, %c0_6, %c0_7] : memref<2x60x240xf32, #tpu.memory_space<vmem>>, vector<1x60x240xf32>
    %25 = vector.shape_cast %24 : vector<1x60x240xf32> to vector<60x240xf32>
    %c0_8 = arith.constant 0 : index
    %c0_9 = arith.constant 0 : index
    %c0_10 = arith.constant 0 : index
    %26 = vector.load %arg6[%c0_8, %c0_9, %c0_10] : memref<2x8x256xf32, #tpu.memory_space<vmem>>, vector<1x8x256xf32>
    %27 = vector.shape_cast %26 : vector<1x8x256xf32> to vector<8x256xf32>
    %28 = vector.extract_strided_slice %27 {offsets = [0, 0], sizes = [1, 180], strides = [1, 1]} : vector<8x256xf32> to vector<1x180xf32>
    %29 = vector.extract_strided_slice %27 {offsets = [1, 0], sizes = [1, 60], strides = [1, 1]} : vector<8x256xf32> to vector<1x60xf32>
    %30 = vector.extract_strided_slice %27 {offsets = [2, 0], sizes = [1, 60], strides = [1, 1]} : vector<8x256xf32> to vector<1x60xf32>
    %31 = vector.extract_strided_slice %27 {offsets = [3, 0], sizes = [1, 60], strides = [1, 1]} : vector<8x256xf32> to vector<1x60xf32>
    %32 = vector.extract_strided_slice %27 {offsets = [4, 0], sizes = [1, 60], strides = [1, 1]} : vector<8x256xf32> to vector<1x60xf32>
    %33 = vector.extract_strided_slice %27 {offsets = [5, 0], sizes = [1, 60], strides = [1, 1]} : vector<8x256xf32> to vector<1x60xf32>
    %34 = vector.extract_strided_slice %27 {offsets = [6, 0], sizes = [1, 60], strides = [1, 1]} : vector<8x256xf32> to vector<1x60xf32>
    %35 = vector.extract_strided_slice %25 {offsets = [0, 0], sizes = [60, 180], strides = [1, 1]} : vector<60x240xf32> to vector<60x180xf32>
    %cst = arith.constant dense<0.000000e+00> : vector<8x180xf32>
    %36 = tpu.matmul %1, %35, %cst {dimension_numbers = #tpu.dot_dimension_numbers<[1], [0], [0], [1], [0, 0, 1, 1], [], []>} : vector<8x60xf32>, vector<60x180xf32>, vector<8x180xf32> -> vector<8x180xf32>
    %37 = vector.broadcast %28 : vector<1x180xf32> to vector<8x180xf32>
    %38 = arith.addf %36, %37 : vector<8x180xf32>
    %39 = vector.extract_strided_slice %38 {offsets = [0, 0], sizes = [8, 60], strides = [1, 1]} : vector<8x180xf32> to vector<8x60xf32>
    %40 = vector.extract_strided_slice %38 {offsets = [0, 60], sizes = [8, 60], strides = [1, 1]} : vector<8x180xf32> to vector<8x60xf32>
    %41 = vector.extract_strided_slice %38 {offsets = [0, 120], sizes = [8, 60], strides = [1, 1]} : vector<8x180xf32> to vector<8x60xf32>
    %42 = vector.shape_cast %39 : vector<8x60xf32> to vector<8x1x60xf32>
    %43 = vector.shape_cast %40 : vector<8x60xf32> to vector<1x8x60xf32>
    %44 = vector.broadcast %42 : vector<8x1x60xf32> to vector<8x8x60xf32>
    %45 = vector.broadcast %43 : vector<1x8x60xf32> to vector<8x8x60xf32>
    %46 = arith.mulf %44, %45 : vector<8x8x60xf32>
    %47 = vector.shape_cast %46 : vector<8x8x60xf32> to vector<64x60xf32>
    %cst_11 = arith.constant dense<0.000000e+00> : vector<64x10xf32>
    %48 = tpu.matmul %47, %12, %cst_11 {dimension_numbers = #tpu.dot_dimension_numbers<[1], [0], [0], [1], [0, 0, 1, 1], [], []>} : vector<64x60xf32>, vector<60x10xf32>, vector<64x10xf32> -> vector<64x10xf32>
    %49 = vector.shape_cast %48 : vector<64x10xf32> to vector<8x8x10xf32>
    %cst_12 = arith.constant dense<0xFF800000> : vector<8x10xf32>
    %50 = vector.multi_reduction <maximumf>, %49, %cst_12 [1] : vector<8x8x10xf32> to vector<8x10xf32>
    %51 = vector.shape_cast %50 : vector<8x10xf32> to vector<8x1x10xf32>
    %52 = vector.broadcast %51 : vector<8x1x10xf32> to vector<8x8x10xf32>
    %53 = arith.subf %49, %52 : vector<8x8x10xf32>
    %54 = math.exp %53 : vector<8x8x10xf32>
    %cst_13 = arith.constant dense<0.000000e+00> : vector<8x10xf32>
    %55 = vector.multi_reduction <add>, %54, %cst_13 [1] : vector<8x8x10xf32> to vector<8x10xf32>
    %56 = vector.shape_cast %55 : vector<8x10xf32> to vector<8x1x10xf32>
    %57 = tpu.reciprocal %56 {approx = true} : vector<8x1x10xf32> -> vector<8x1x10xf32>
    %58 = vector.broadcast %57 : vector<8x1x10xf32> to vector<8x8x10xf32>
    %59 = arith.mulf %54, %58 : vector<8x8x10xf32>
    %60 = vector.shape_cast %59 : vector<8x8x10xf32> to vector<64x10xf32>
    %cst_14 = arith.constant dense<0.000000e+00> : vector<64x60xf32>
    %61 = tpu.matmul %60, %23, %cst_14 {dimension_numbers = #tpu.dot_dimension_numbers<[1], [0], [0], [1], [0, 0, 1, 1], [], []>} : vector<64x10xf32>, vector<10x60xf32>, vector<64x60xf32> -> vector<64x60xf32>
    %62 = vector.shape_cast %61 : vector<64x60xf32> to vector<8x8x60xf32>
    %63 = vector.shape_cast %41 : vector<8x60xf32> to vector<1x8x60xf32>
    %64 = vector.broadcast %63 : vector<1x8x60xf32> to vector<8x8x60xf32>
    %65 = arith.mulf %62, %64 : vector<8x8x60xf32>
    %cst_15 = arith.constant dense<0.000000e+00> : vector<8x60xf32>
    %66 = vector.multi_reduction <add>, %65, %cst_15 [1] : vector<8x8x60xf32> to vector<8x60xf32>
    %67 = vector.extract_strided_slice %25 {offsets = [0, 180], sizes = [60, 60], strides = [1, 1]} : vector<60x240xf32> to vector<60x60xf32>
    %cst_16 = arith.constant dense<0.000000e+00> : vector<8x60xf32>
    %68 = tpu.matmul %66, %67, %cst_16 {dimension_numbers = #tpu.dot_dimension_numbers<[1], [0], [0], [1], [0, 0, 1, 1], [], []>} : vector<8x60xf32>, vector<60x60xf32>, vector<8x60xf32> -> vector<8x60xf32>
    %69 = vector.broadcast %29 : vector<1x60xf32> to vector<8x60xf32>
    %70 = arith.addf %68, %69 : vector<8x60xf32>
    %71 = arith.addf %1, %70 : vector<8x60xf32>
    %cst_17 = arith.constant dense<0.000000e+00> : vector<8xf32>
    %72 = vector.multi_reduction <add>, %71, %cst_17 [1] : vector<8x60xf32> to vector<8xf32>
    %73 = vector.shape_cast %72 : vector<8xf32> to vector<8x1xf32>
    %cst_18 = arith.constant 6.000000e+01 : f32
    %74 = vector.broadcast %cst_18 : f32 to vector<8x1xf32>
    %75 = arith.divf %73, %74 : vector<8x1xf32>
    %76 = vector.broadcast %75 : vector<8x1xf32> to vector<8x60xf32>
    %77 = arith.subf %71, %76 : vector<8x60xf32>
    %78 = arith.mulf %77, %77 : vector<8x60xf32>
    %cst_19 = arith.constant dense<0.000000e+00> : vector<8xf32>
    %79 = vector.multi_reduction <add>, %78, %cst_19 [1] : vector<8x60xf32> to vector<8xf32>
    %80 = vector.shape_cast %79 : vector<8xf32> to vector<8x1xf32>
    %cst_20 = arith.constant 6.000000e+01 : f32
    %81 = vector.broadcast %cst_20 : f32 to vector<8x1xf32>
    %82 = arith.divf %80, %81 : vector<8x1xf32>
    %83 = vector.broadcast %75 : vector<8x1xf32> to vector<8x60xf32>
    %84 = arith.subf %71, %83 : vector<8x60xf32>
    %cst_21 = arith.constant 9.99999974E-6 : f32
    %85 = vector.broadcast %cst_21 : f32 to vector<8x1xf32>
    %86 = arith.addf %82, %85 : vector<8x1xf32>
    %87 = math.rsqrt %86 : vector<8x1xf32>
    %88 = vector.broadcast %87 : vector<8x1xf32> to vector<8x60xf32>
    %89 = arith.mulf %84, %88 : vector<8x60xf32>
    %90 = vector.broadcast %30 : vector<1x60xf32> to vector<8x60xf32>
    %91 = arith.mulf %89, %90 : vector<8x60xf32>
    %92 = vector.broadcast %31 : vector<1x60xf32> to vector<8x60xf32>
    %93 = arith.addf %91, %92 : vector<8x60xf32>
    %c0_22 = arith.constant 0 : index
    %c0_23 = arith.constant 0 : index
    %c0_24 = arith.constant 0 : index
    %94 = vector.load %arg3[%c0_22, %c0_23, %c0_24] : memref<2x60x2048xf32, #tpu.memory_space<vmem>>, vector<1x60x2048xf32>
    %95 = vector.shape_cast %94 : vector<1x60x2048xf32> to vector<60x2048xf32>
    %cst_25 = arith.constant dense<0.000000e+00> : vector<8x2048xf32>
    %96 = tpu.matmul %93, %95, %cst_25 {dimension_numbers = #tpu.dot_dimension_numbers<[1], [0], [0], [1], [0, 0, 1, 1], [], []>} : vector<8x60xf32>, vector<60x2048xf32>, vector<8x2048xf32> -> vector<8x2048xf32>
    %c0_26 = arith.constant 0 : index
    %c0_27 = arith.constant 0 : index
    %c0_28 = arith.constant 0 : index
    %97 = vector.load %arg4[%c0_26, %c0_27, %c0_28] : memref<2x1x2048xf32, #tpu.memory_space<vmem>>, vector<1x1x2048xf32>
    %98 = vector.shape_cast %97 : vector<1x1x2048xf32> to vector<1x2048xf32>
    %99 = vector.broadcast %98 : vector<1x2048xf32> to vector<8x2048xf32>
    %100 = arith.addf %96, %99 : vector<8x2048xf32>
    %cst_29 = arith.constant 0.000000e+00 : f32
    %101 = vector.broadcast %cst_29 : f32 to vector<8x2048xf32>
    %102 = arith.maximumf %100, %101 : vector<8x2048xf32>
    %c0_30 = arith.constant 0 : index
    %c0_31 = arith.constant 0 : index
    %c0_32 = arith.constant 0 : index
    %103 = vector.load %arg5[%c0_30, %c0_31, %c0_32] : memref<2x2048x60xf32, #tpu.memory_space<vmem>>, vector<1x2048x60xf32>
    %104 = vector.shape_cast %103 : vector<1x2048x60xf32> to vector<2048x60xf32>
    %cst_33 = arith.constant dense<0.000000e+00> : vector<8x60xf32>
    %105 = tpu.matmul %102, %104, %cst_33 {dimension_numbers = #tpu.dot_dimension_numbers<[1], [0], [0], [1], [0, 0, 1, 1], [], []>} : vector<8x2048xf32>, vector<2048x60xf32>, vector<8x60xf32> -> vector<8x60xf32>
    %106 = vector.broadcast %32 : vector<1x60xf32> to vector<8x60xf32>
    %107 = arith.addf %105, %106 : vector<8x60xf32>
    %108 = arith.addf %93, %107 : vector<8x60xf32>
    %cst_34 = arith.constant dense<0.000000e+00> : vector<8xf32>
    %109 = vector.multi_reduction <add>, %108, %cst_34 [1] : vector<8x60xf32> to vector<8xf32>
    %110 = vector.shape_cast %109 : vector<8xf32> to vector<8x1xf32>
    %cst_35 = arith.constant 6.000000e+01 : f32
    %111 = vector.broadcast %cst_35 : f32 to vector<8x1xf32>
    %112 = arith.divf %110, %111 : vector<8x1xf32>
    %113 = vector.broadcast %112 : vector<8x1xf32> to vector<8x60xf32>
    %114 = arith.subf %108, %113 : vector<8x60xf32>
    %115 = arith.mulf %114, %114 : vector<8x60xf32>
    %cst_36 = arith.constant dense<0.000000e+00> : vector<8xf32>
    %116 = vector.multi_reduction <add>, %115, %cst_36 [1] : vector<8x60xf32> to vector<8xf32>
    %117 = vector.shape_cast %116 : vector<8xf32> to vector<8x1xf32>
    %cst_37 = arith.constant 6.000000e+01 : f32
    %118 = vector.broadcast %cst_37 : f32 to vector<8x1xf32>
    %119 = arith.divf %117, %118 : vector<8x1xf32>
    %120 = vector.broadcast %112 : vector<8x1xf32> to vector<8x60xf32>
    %121 = arith.subf %108, %120 : vector<8x60xf32>
    %cst_38 = arith.constant 9.99999974E-6 : f32
    %122 = vector.broadcast %cst_38 : f32 to vector<8x1xf32>
    %123 = arith.addf %119, %122 : vector<8x1xf32>
    %124 = math.rsqrt %123 : vector<8x1xf32>
    %125 = vector.broadcast %124 : vector<8x1xf32> to vector<8x60xf32>
    %126 = arith.mulf %121, %125 : vector<8x60xf32>
    %127 = vector.broadcast %33 : vector<1x60xf32> to vector<8x60xf32>
    %128 = arith.mulf %126, %127 : vector<8x60xf32>
    %129 = vector.broadcast %34 : vector<1x60xf32> to vector<8x60xf32>
    %130 = arith.addf %128, %129 : vector<8x60xf32>
    %c1 = arith.constant 1 : index
    %c0_39 = arith.constant 0 : index
    %c0_40 = arith.constant 0 : index
    %131 = vector.load %arg2[%c1, %c0_39, %c0_40] : memref<2x60x240xf32, #tpu.memory_space<vmem>>, vector<1x60x240xf32>
    %132 = vector.shape_cast %131 : vector<1x60x240xf32> to vector<60x240xf32>
    %c1_41 = arith.constant 1 : index
    %c0_42 = arith.constant 0 : index
    %c0_43 = arith.constant 0 : index
    %133 = vector.load %arg6[%c1_41, %c0_42, %c0_43] : memref<2x8x256xf32, #tpu.memory_space<vmem>>, vector<1x8x256xf32>
    %134 = vector.shape_cast %133 : vector<1x8x256xf32> to vector<8x256xf32>
    %135 = vector.extract_strided_slice %134 {offsets = [0, 0], sizes = [1, 180], strides = [1, 1]} : vector<8x256xf32> to vector<1x180xf32>
    %136 = vector.extract_strided_slice %134 {offsets = [1, 0], sizes = [1, 60], strides = [1, 1]} : vector<8x256xf32> to vector<1x60xf32>
    %137 = vector.extract_strided_slice %134 {offsets = [2, 0], sizes = [1, 60], strides = [1, 1]} : vector<8x256xf32> to vector<1x60xf32>
    %138 = vector.extract_strided_slice %134 {offsets = [3, 0], sizes = [1, 60], strides = [1, 1]} : vector<8x256xf32> to vector<1x60xf32>
    %139 = vector.extract_strided_slice %134 {offsets = [4, 0], sizes = [1, 60], strides = [1, 1]} : vector<8x256xf32> to vector<1x60xf32>
    %140 = vector.extract_strided_slice %134 {offsets = [5, 0], sizes = [1, 60], strides = [1, 1]} : vector<8x256xf32> to vector<1x60xf32>
    %141 = vector.extract_strided_slice %134 {offsets = [6, 0], sizes = [1, 60], strides = [1, 1]} : vector<8x256xf32> to vector<1x60xf32>
    %142 = vector.extract_strided_slice %132 {offsets = [0, 0], sizes = [60, 180], strides = [1, 1]} : vector<60x240xf32> to vector<60x180xf32>
    %cst_44 = arith.constant dense<0.000000e+00> : vector<8x180xf32>
    %143 = tpu.matmul %130, %142, %cst_44 {dimension_numbers = #tpu.dot_dimension_numbers<[1], [0], [0], [1], [0, 0, 1, 1], [], []>} : vector<8x60xf32>, vector<60x180xf32>, vector<8x180xf32> -> vector<8x180xf32>
    %144 = vector.broadcast %135 : vector<1x180xf32> to vector<8x180xf32>
    %145 = arith.addf %143, %144 : vector<8x180xf32>
    %146 = vector.extract_strided_slice %145 {offsets = [0, 0], sizes = [8, 60], strides = [1, 1]} : vector<8x180xf32> to vector<8x60xf32>
    %147 = vector.extract_strided_slice %145 {offsets = [0, 60], sizes = [8, 60], strides = [1, 1]} : vector<8x180xf32> to vector<8x60xf32>
    %148 = vector.extract_strided_slice %145 {offsets = [0, 120], sizes = [8, 60], strides = [1, 1]} : vector<8x180xf32> to vector<8x60xf32>
    %149 = vector.shape_cast %146 : vector<8x60xf32> to vector<8x1x60xf32>
    %150 = vector.shape_cast %147 : vector<8x60xf32> to vector<1x8x60xf32>
    %151 = vector.broadcast %149 : vector<8x1x60xf32> to vector<8x8x60xf32>
    %152 = vector.broadcast %150 : vector<1x8x60xf32> to vector<8x8x60xf32>
    %153 = arith.mulf %151, %152 : vector<8x8x60xf32>
    %154 = vector.shape_cast %153 : vector<8x8x60xf32> to vector<64x60xf32>
    %cst_45 = arith.constant dense<0.000000e+00> : vector<64x10xf32>
    %155 = tpu.matmul %154, %12, %cst_45 {dimension_numbers = #tpu.dot_dimension_numbers<[1], [0], [0], [1], [0, 0, 1, 1], [], []>} : vector<64x60xf32>, vector<60x10xf32>, vector<64x10xf32> -> vector<64x10xf32>
    %156 = vector.shape_cast %155 : vector<64x10xf32> to vector<8x8x10xf32>
    %cst_46 = arith.constant dense<0xFF800000> : vector<8x10xf32>
    %157 = vector.multi_reduction <maximumf>, %156, %cst_46 [1] : vector<8x8x10xf32> to vector<8x10xf32>
    %158 = vector.shape_cast %157 : vector<8x10xf32> to vector<8x1x10xf32>
    %159 = vector.broadcast %158 : vector<8x1x10xf32> to vector<8x8x10xf32>
    %160 = arith.subf %156, %159 : vector<8x8x10xf32>
    %161 = math.exp %160 : vector<8x8x10xf32>
    %cst_47 = arith.constant dense<0.000000e+00> : vector<8x10xf32>
    %162 = vector.multi_reduction <add>, %161, %cst_47 [1] : vector<8x8x10xf32> to vector<8x10xf32>
    %163 = vector.shape_cast %162 : vector<8x10xf32> to vector<8x1x10xf32>
    %164 = tpu.reciprocal %163 {approx = true} : vector<8x1x10xf32> -> vector<8x1x10xf32>
    %165 = vector.broadcast %164 : vector<8x1x10xf32> to vector<8x8x10xf32>
    %166 = arith.mulf %161, %165 : vector<8x8x10xf32>
    %167 = vector.shape_cast %166 : vector<8x8x10xf32> to vector<64x10xf32>
    %cst_48 = arith.constant dense<0.000000e+00> : vector<64x60xf32>
    %168 = tpu.matmul %167, %23, %cst_48 {dimension_numbers = #tpu.dot_dimension_numbers<[1], [0], [0], [1], [0, 0, 1, 1], [], []>} : vector<64x10xf32>, vector<10x60xf32>, vector<64x60xf32> -> vector<64x60xf32>
    %169 = vector.shape_cast %168 : vector<64x60xf32> to vector<8x8x60xf32>
    %170 = vector.shape_cast %148 : vector<8x60xf32> to vector<1x8x60xf32>
    %171 = vector.broadcast %170 : vector<1x8x60xf32> to vector<8x8x60xf32>
    %172 = arith.mulf %169, %171 : vector<8x8x60xf32>
    %cst_49 = arith.constant dense<0.000000e+00> : vector<8x60xf32>
    %173 = vector.multi_reduction <add>, %172, %cst_49 [1] : vector<8x8x60xf32> to vector<8x60xf32>
    %174 = vector.extract_strided_slice %132 {offsets = [0, 180], sizes = [60, 60], strides = [1, 1]} : vector<60x240xf32> to vector<60x60xf32>
    %cst_50 = arith.constant dense<0.000000e+00> : vector<8x60xf32>
    %175 = tpu.matmul %173, %174, %cst_50 {dimension_numbers = #tpu.dot_dimension_numbers<[1], [0], [0], [1], [0, 0, 1, 1], [], []>} : vector<8x60xf32>, vector<60x60xf32>, vector<8x60xf32> -> vector<8x60xf32>
    %176 = vector.broadcast %136 : vector<1x60xf32> to vector<8x60xf32>
    %177 = arith.addf %175, %176 : vector<8x60xf32>
    %178 = arith.addf %130, %177 : vector<8x60xf32>
    %cst_51 = arith.constant dense<0.000000e+00> : vector<8xf32>
    %179 = vector.multi_reduction <add>, %178, %cst_51 [1] : vector<8x60xf32> to vector<8xf32>
    %180 = vector.shape_cast %179 : vector<8xf32> to vector<8x1xf32>
    %cst_52 = arith.constant 6.000000e+01 : f32
    %181 = vector.broadcast %cst_52 : f32 to vector<8x1xf32>
    %182 = arith.divf %180, %181 : vector<8x1xf32>
    %183 = vector.broadcast %182 : vector<8x1xf32> to vector<8x60xf32>
    %184 = arith.subf %178, %183 : vector<8x60xf32>
    %185 = arith.mulf %184, %184 : vector<8x60xf32>
    %cst_53 = arith.constant dense<0.000000e+00> : vector<8xf32>
    %186 = vector.multi_reduction <add>, %185, %cst_53 [1] : vector<8x60xf32> to vector<8xf32>
    %187 = vector.shape_cast %186 : vector<8xf32> to vector<8x1xf32>
    %cst_54 = arith.constant 6.000000e+01 : f32
    %188 = vector.broadcast %cst_54 : f32 to vector<8x1xf32>
    %189 = arith.divf %187, %188 : vector<8x1xf32>
    %190 = vector.broadcast %182 : vector<8x1xf32> to vector<8x60xf32>
    %191 = arith.subf %178, %190 : vector<8x60xf32>
    %cst_55 = arith.constant 9.99999974E-6 : f32
    %192 = vector.broadcast %cst_55 : f32 to vector<8x1xf32>
    %193 = arith.addf %189, %192 : vector<8x1xf32>
    %194 = math.rsqrt %193 : vector<8x1xf32>
    %195 = vector.broadcast %194 : vector<8x1xf32> to vector<8x60xf32>
    %196 = arith.mulf %191, %195 : vector<8x60xf32>
    %197 = vector.broadcast %137 : vector<1x60xf32> to vector<8x60xf32>
    %198 = arith.mulf %196, %197 : vector<8x60xf32>
    %199 = vector.broadcast %138 : vector<1x60xf32> to vector<8x60xf32>
    %200 = arith.addf %198, %199 : vector<8x60xf32>
    %c1_56 = arith.constant 1 : index
    %c0_57 = arith.constant 0 : index
    %c0_58 = arith.constant 0 : index
    %201 = vector.load %arg3[%c1_56, %c0_57, %c0_58] : memref<2x60x2048xf32, #tpu.memory_space<vmem>>, vector<1x60x2048xf32>
    %202 = vector.shape_cast %201 : vector<1x60x2048xf32> to vector<60x2048xf32>
    %cst_59 = arith.constant dense<0.000000e+00> : vector<8x2048xf32>
    %203 = tpu.matmul %200, %202, %cst_59 {dimension_numbers = #tpu.dot_dimension_numbers<[1], [0], [0], [1], [0, 0, 1, 1], [], []>} : vector<8x60xf32>, vector<60x2048xf32>, vector<8x2048xf32> -> vector<8x2048xf32>
    %c1_60 = arith.constant 1 : index
    %c0_61 = arith.constant 0 : index
    %c0_62 = arith.constant 0 : index
    %204 = vector.load %arg4[%c1_60, %c0_61, %c0_62] : memref<2x1x2048xf32, #tpu.memory_space<vmem>>, vector<1x1x2048xf32>
    %205 = vector.shape_cast %204 : vector<1x1x2048xf32> to vector<1x2048xf32>
    %206 = vector.broadcast %205 : vector<1x2048xf32> to vector<8x2048xf32>
    %207 = arith.addf %203, %206 : vector<8x2048xf32>
    %cst_63 = arith.constant 0.000000e+00 : f32
    %208 = vector.broadcast %cst_63 : f32 to vector<8x2048xf32>
    %209 = arith.maximumf %207, %208 : vector<8x2048xf32>
    %c1_64 = arith.constant 1 : index
    %c0_65 = arith.constant 0 : index
    %c0_66 = arith.constant 0 : index
    %210 = vector.load %arg5[%c1_64, %c0_65, %c0_66] : memref<2x2048x60xf32, #tpu.memory_space<vmem>>, vector<1x2048x60xf32>
    %211 = vector.shape_cast %210 : vector<1x2048x60xf32> to vector<2048x60xf32>
    %cst_67 = arith.constant dense<0.000000e+00> : vector<8x60xf32>
    %212 = tpu.matmul %209, %211, %cst_67 {dimension_numbers = #tpu.dot_dimension_numbers<[1], [0], [0], [1], [0, 0, 1, 1], [], []>} : vector<8x2048xf32>, vector<2048x60xf32>, vector<8x60xf32> -> vector<8x60xf32>
    %213 = vector.broadcast %139 : vector<1x60xf32> to vector<8x60xf32>
    %214 = arith.addf %212, %213 : vector<8x60xf32>
    %215 = arith.addf %200, %214 : vector<8x60xf32>
    %cst_68 = arith.constant dense<0.000000e+00> : vector<8xf32>
    %216 = vector.multi_reduction <add>, %215, %cst_68 [1] : vector<8x60xf32> to vector<8xf32>
    %217 = vector.shape_cast %216 : vector<8xf32> to vector<8x1xf32>
    %cst_69 = arith.constant 6.000000e+01 : f32
    %218 = vector.broadcast %cst_69 : f32 to vector<8x1xf32>
    %219 = arith.divf %217, %218 : vector<8x1xf32>
    %220 = vector.broadcast %219 : vector<8x1xf32> to vector<8x60xf32>
    %221 = arith.subf %215, %220 : vector<8x60xf32>
    %222 = arith.mulf %221, %221 : vector<8x60xf32>
    %cst_70 = arith.constant dense<0.000000e+00> : vector<8xf32>
    %223 = vector.multi_reduction <add>, %222, %cst_70 [1] : vector<8x60xf32> to vector<8xf32>
    %224 = vector.shape_cast %223 : vector<8xf32> to vector<8x1xf32>
    %cst_71 = arith.constant 6.000000e+01 : f32
    %225 = vector.broadcast %cst_71 : f32 to vector<8x1xf32>
    %226 = arith.divf %224, %225 : vector<8x1xf32>
    %227 = vector.broadcast %219 : vector<8x1xf32> to vector<8x60xf32>
    %228 = arith.subf %215, %227 : vector<8x60xf32>
    %cst_72 = arith.constant 9.99999974E-6 : f32
    %229 = vector.broadcast %cst_72 : f32 to vector<8x1xf32>
    %230 = arith.addf %226, %229 : vector<8x1xf32>
    %231 = math.rsqrt %230 : vector<8x1xf32>
    %232 = vector.broadcast %231 : vector<8x1xf32> to vector<8x60xf32>
    %233 = arith.mulf %228, %232 : vector<8x60xf32>
    %234 = vector.broadcast %140 : vector<1x60xf32> to vector<8x60xf32>
    %235 = arith.mulf %233, %234 : vector<8x60xf32>
    %236 = vector.broadcast %141 : vector<1x60xf32> to vector<8x60xf32>
    %237 = arith.addf %235, %236 : vector<8x60xf32>
    %c0_73 = arith.constant 0 : index
    %c0_74 = arith.constant 0 : index
    %c0_75 = arith.constant 0 : index
    %238 = vector.load %arg7[%c0_73, %c0_74, %c0_75] : memref<1x8x60xf32, #tpu.memory_space<vmem>>, vector<1x8x60xf32>
    %239 = vector.shape_cast %238 : vector<1x8x60xf32> to vector<8x60xf32>
    %240 = vector.shape_cast %237 : vector<8x60xf32> to vector<1x8x60xf32>
    tpu.vector_store %arg7[%c0_73, %c0_74, %c0_75], %240 {strides = array<i32>} : memref<1x8x60xf32, #tpu.memory_space<vmem>>, vector<1x8x60xf32>,
    return
  }
  func.func @transform_0(%arg0: i32) -> (i32, i32, i32) {
    %c0_i32 = arith.constant 0 : i32
    %c0_i32_0 = arith.constant 0 : i32
    %c0_i32_1 = arith.constant 0 : i32
    return %arg0, %c0_i32, %c0_i32_0 : i32, i32, i32
  }
  func.func @transform_1(%arg0: i32) -> (i32, i32, i32) {
    %c0_i32 = arith.constant 0 : i32
    %c0_i32_0 = arith.constant 0 : i32
    %c0_i32_1 = arith.constant 0 : i32
    %c0_i32_2 = arith.constant 0 : i32
    return %c0_i32, %c0_i32_0, %c0_i32_1 : i32, i32, i32
  }
  func.func @transform_2(%arg0: i32) -> (i32, i32, i32) {
    %c0_i32 = arith.constant 0 : i32
    %c0_i32_0 = arith.constant 0 : i32
    %c0_i32_1 = arith.constant 0 : i32
    %c0_i32_2 = arith.constant 0 : i32
    return %c0_i32, %c0_i32_0, %c0_i32_1 : i32, i32, i32
  }
  func.func @transform_3(%arg0: i32) -> (i32, i32, i32) {
    %c0_i32 = arith.constant 0 : i32
    %c0_i32_0 = arith.constant 0 : i32
    %c0_i32_1 = arith.constant 0 : i32
    %c0_i32_2 = arith.constant 0 : i32
    return %c0_i32, %c0_i32_0, %c0_i32_1 : i32, i32, i32
  }
  func.func @transform_4(%arg0: i32) -> (i32, i32, i32) {
    %c0_i32 = arith.constant 0 : i32
    %c0_i32_0 = arith.constant 0 : i32
    %c0_i32_1 = arith.constant 0 : i32
    %c0_i32_2 = arith.constant 0 : i32
    return %c0_i32, %c0_i32_0, %c0_i32_1 : i32, i32, i32
  }
  func.func @transform_5(%arg0: i32) -> (i32, i32, i32) {
    %c0_i32 = arith.constant 0 : i32
    %c0_i32_0 = arith.constant 0 : i32
    %c0_i32_1 = arith.constant 0 : i32
    %c0_i32_2 = arith.constant 0 : i32
    return %c0_i32, %c0_i32_0, %c0_i32_1 : i32, i32, i32
  }
  func.func @transform_6(%arg0: i32) -> (i32, i32, i32) {
    %c0_i32 = arith.constant 0 : i32
    %c0_i32_0 = arith.constant 0 : i32
    %c0_i32_1 = arith.constant 0 : i32
    return %arg0, %c0_i32, %c0_i32_0 : i32, i32, i32
  }
}

</mosaic_0001>

<llo_original>
// kernel: encoder_forward.1
$region0: #{encoder_forward.1}
  #allocation0 [shape = 'u32[]', space=smem, size = 0x4, offset = 0x4, fixed_abs, tag = 'smem constant byte address 0x4 - core index']
  #allocation1 [shape = 'u32[72,128]{1,0:T(1,128)}', space=vmem, size = 0x9000, scoped, tag = 'internal scratch']
  %s0 = inlined_call_operand.vmem [shape: f32[2,8,60], index: 0, kind: input, shape index: {}]
  %s1 = inlined_call_operand.vmem [shape: f32[2,60,240], index: 1, kind: input, shape index: {}]
  %s2 = inlined_call_operand.vmem [shape: f32[2,60,2048], index: 2, kind: input, shape index: {}]
  %s3 = inlined_call_operand.vmem [shape: f32[2,1,2048], index: 3, kind: input, shape index: {}]
  %s4 = inlined_call_operand.vmem [shape: f32[2,2048,60], index: 4, kind: input, shape index: {}]
  %s5 = inlined_call_operand.vmem [shape: f32[2,8,256], index: 5, kind: input, shape index: {}]
  %s6 = inlined_call_operand.vmem [shape: f32[2,8,60], index: 6, kind: output, shape index: {}]
  %s7 = sld [smem:[#allocation0]]
  $region57: #{encoder_forward.1} parent=0
    _
  %s9 = ssub.s32 1, %s7
  %s10 = scalar_select 0, %s9, %s7
  loop: start=0, step=1, limit=4
  $region2: #{encoder_forward.1} parent=0 // loop_pre_header
    _
  $region3: #{encoder_forward.1} parent=0 // loop_header
    %s12 = sphi 0, %s16
    %p13 = scmp.ge.s32.totalorder %s12, 4
    %s22 = sphi 0, %s24
    %s25 = sphi 0, %s22
    %s26 = sphi 0, %s25
    %s42 = sphi 0, %s26
    %s46 = sphi 0, %s46
    %s48 = sphi 0, %s46
    %s49 = sphi 0, %s48
    %s63 = sphi 0, %s49
    %s67 = sphi 0, %s67
    %s69 = sphi 0, %s67
    %s70 = sphi 0, %s69
    %s84 = sphi 0, %s70
    %s88 = sphi 0, %s88
    %s90 = sphi 0, %s88
    %s91 = sphi 0, %s90
    %s105 = sphi 0, %s91
    %s109 = sphi 0, %s109
    %s111 = sphi 0, %s109
    %s112 = sphi 0, %s111
    %s126 = sphi 0, %s112
    %s130 = sphi 0, %s130
    %s132 = sphi 0, %s130
    %s133 = sphi 0, %s132
    %s147 = sphi 0, %s133
    %s153 = sphi 0, %s155
    %s156 = sphi 0, %s153
    %s157 = sphi 0, %s156
    %s173 = sphi 0, %s157
  $region4: #{encoder_forward.1} parent=0 // loop_header_branch
    %15 = sbr.rel (%p13) target = $region8
  $region5: #{encoder_forward.1} parent=0 // loop_body
    %s17 = ssub.s32 %s12, 1
    %s18 = ssub.s32 %s12, 2
    %s19 = sadd.s32 %s12, 1
    %s20 = ssub.s32 %s12, %s19
    %p21 = scmp.eq.s32.totalorder %s20, 0
    %s23 = sadd.s32 %s22, 1
    %s24 = scalar_select %p21, %s22, %s23
    %p27 = pneg %p21
    %p28 = scmp.eq.s32.totalorder %s12, 1
    %p29 = por %p27, %p28
    %p30 = scmp.ne.s32.totalorder %s22, %s25
    %p31 = scmp.eq.s32.totalorder %s12, 0
    %p32 = por %p30, %p31
    %p33 = scmp.ne.s32.totalorder %s22, %s25
    %p34 = scmp.eq.s32.totalorder %s17, 1
    %p35 = por %p33, %p34
    %p36 = scmp.ne.s32.totalorder %s25, %s26
    %p37 = scmp.eq.s32.totalorder %s17, 0
    %p38 = por %p36, %p37
    %p39 = scmp.ne.s32.totalorder %s25, %s26
    %p40 = scmp.eq.s32.totalorder %s18, 1
    %p41 = por %p39, %p40
    %p43 = scmp.ne.s32.totalorder %s26, %s42
    %p44 = scmp.eq.s32.totalorder %s18, 0
    %p45 = por %p43, %p44
    %s47 = sadd.s32 %s46, 1
    %p50 = scmp.eq.s32.totalorder %s12, 1
    %p51 = scmp.ne.s32.totalorder %s46, %s48
    %p52 = scmp.eq.s32.totalorder %s12, 0
    %p53 = por %p51, %p52
    %p54 = scmp.ne.s32.totalorder %s46, %s48
    %p55 = scmp.eq.s32.totalorder %s17, 1
    %p56 = por %p54, %p55
    %p57 = scmp.ne.s32.totalorder %s48, %s49
    %p58 = scmp.eq.s32.totalorder %s17, 0
    %p59 = por %p57, %p58
    %p60 = scmp.ne.s32.totalorder %s48, %s49
    %p61 = scmp.eq.s32.totalorder %s18, 1
    %p62 = por %p60, %p61
    %p64 = scmp.ne.s32.totalorder %s49, %s63
    %p65 = scmp.eq.s32.totalorder %s18, 0
    %p66 = por %p64, %p65
    %s68 = sadd.s32 %s67, 1
    %p71 = scmp.eq.s32.totalorder %s12, 1
    %p72 = scmp.ne.s32.totalorder %s67, %s69
    %p73 = scmp.eq.s32.totalorder %s12, 0
    %p74 = por %p72, %p73
    %p75 = scmp.ne.s32.totalorder %s67, %s69
    %p76 = scmp.eq.s32.totalorder %s17, 1
    %p77 = por %p75, %p76
    %p78 = scmp.ne.s32.totalorder %s69, %s70
    %p79 = scmp.eq.s32.totalorder %s17, 0
    %p80 = por %p78, %p79
    %p81 = scmp.ne.s32.totalorder %s69, %s70
    %p82 = scmp.eq.s32.totalorder %s18, 1
    %p83 = por %p81, %p82
    %p85 = scmp.ne.s32.totalorder %s70, %s84
    %p86 = scmp.eq.s32.totalorder %s18, 0
    %p87 = por %p85, %p86
    %s89 = sadd.s32 %s88, 1
    %p92 = scmp.eq.s32.totalorder %s12, 1
    %p93 = scmp.ne.s32.totalorder %s88, %s90
    %p94 = scmp.eq.s32.totalorder %s12, 0
    %p95 = por %p93, %p94
    %p96 = scmp.ne.s32.totalorder %s88, %s90
    %p97 = scmp.eq.s32.totalorder %s17, 1
    %p98 = por %p96, %p97
    %p99 = scmp.ne.s32.totalorder %s90, %s91
    %p100 = scmp.eq.s32.totalorder %s17, 0
    %p101 = por %p99, %p100
    %p102 = scmp.ne.s32.totalorder %s90, %s91
    %p103 = scmp.eq.s32.totalorder %s18, 1
    %p104 = por %p102, %p103
    %p106 = scmp.ne.s32.totalorder %s91, %s105
    %p107 = scmp.eq.s32.totalorder %s18, 0
    %p108 = por %p106, %p107
    %s110 = sadd.s32 %s109, 1
    %p113 = scmp.eq.s32.totalorder %s12, 1
    %p114 = scmp.ne.s32.totalorder %s109, %s111
    %p115 = scmp.eq.s32.totalorder %s12, 0
    %p116 = por %p114, %p115
    %p117 = scmp.ne.s32.totalorder %s109, %s111
    %p118 = scmp.eq.s32.totalorder %s17, 1
    %p119 = por %p117, %p118
    %p120 = scmp.ne.s32.totalorder %s111, %s112
    %p121 = scmp.eq.s32.totalorder %s17, 0
    %p122 = por %p120, %p121
    %p123 = scmp.ne.s32.totalorder %s111, %s112
    %p124 = scmp.eq.s32.totalorder %s18, 1
    %p125 = por %p123, %p124
    %p127 = scmp.ne.s32.totalorder %s112, %s126
    %p128 = scmp.eq.s32.totalorder %s18, 0
    %p129 = por %p127, %p128
    %s131 = sadd.s32 %s130, 1
    %p134 = scmp.eq.s32.totalorder %s12, 1
    %p135 = scmp.ne.s32.totalorder %s130, %s132
    %p136 = scmp.eq.s32.totalorder %s12, 0
    %p137 = por %p135, %p136
    %p138 = scmp.ne.s32.totalorder %s130, %s132
    %p139 = scmp.eq.s32.totalorder %s17, 1
    %p140 = por %p138, %p139
    %p141 = scmp.ne.s32.totalorder %s132, %s133
    %p142 = scmp.eq.s32.totalorder %s17, 0
    %p143 = por %p141, %p142
    %p144 = scmp.ne.s32.totalorder %s132, %s133
    %p145 = scmp.eq.s32.totalorder %s18, 1
    %p146 = por %p144, %p145
    %p148 = scmp.ne.s32.totalorder %s133, %s147
    %p149 = scmp.eq.s32.totalorder %s18, 0
    %p150 = por %p148, %p149
    %s151 = ssub.s32 %s12, %s19
    %p152 = scmp.eq.s32.totalorder %s151, 0
    %s154 = sadd.s32 %s153, 1
    %s155 = scalar_select %p152, %s153, %s154
    %p158 = pneg %p152
    %p159 = scmp.eq.s32.totalorder %s12, 1
    %p160 = por %p158, %p159
    %p161 = scmp.ne.s32.totalorder %s153, %s156
    %p162 = scmp.eq.s32.totalorder %s12, 0
    %p163 = por %p161, %p162
    %p164 = scmp.ne.s32.totalorder %s153, %s156
    %p165 = scmp.eq.s32.totalorder %s17, 1
    %p166 = por %p164, %p165
    %p167 = scmp.ne.s32.totalorder %s156, %s157
    %p168 = scmp.eq.s32.totalorder %s17, 0
    %p169 = por %p167, %p168
    %p170 = scmp.ne.s32.totalorder %s156, %s157
    %p171 = scmp.eq.s32.totalorder %s18, 1
    %p172 = por %p170, %p171
    %p174 = scmp.ne.s32.totalorder %s157, %s173
    %p175 = scmp.eq.s32.totalorder %s18, 0
    %p176 = por %p174, %p175
    %p177 = scmp.le.s32.totalorder 1, %s12
    %p178 = scmp.lt.s32.totalorder %s12, 3
    %p179 = pnand %p177, %p178
    %p180 = pneg %p179
    // Predicated region
    $region9: #{encoder_forward.1} parent=5 // pred_check
      _
    $region10: #{encoder_forward.1} parent=5 // pred_check_branch
      %182 = sbr.rel (%p179) target = $region12
    $region11: #{encoder_forward.1} parent=5 // pred_region
      %s183 = ssub.s32 %s12, 1
      // Predicated region
      $region13: #{encoder_forward.1} parent=11 // pred_check
        %p184 = pneg %p59
      $region14: #{encoder_forward.1} parent=11 // pred_check_branch
        %186 = sbr.rel (%p184) target = $region16
      $region15: #{encoder_forward.1} parent=11 // pred_region
        _
      $region16: #{encoder_forward.1} parent=11 // pred_fallthru
        _
      // Predicated region
      $region17: #{encoder_forward.1} parent=11 // pred_check
        %p187 = pneg %p80
      $region18: #{encoder_forward.1} parent=11 // pred_check_branch
        %189 = sbr.rel (%p187) target = $region20
      $region19: #{encoder_forward.1} parent=11 // pred_region
        _
      $region20: #{encoder_forward.1} parent=11 // pred_fallthru
        _
      // Predicated region
      $region21: #{encoder_forward.1} parent=11 // pred_check
        %p190 = pneg %p101
      $region22: #{encoder_forward.1} parent=11 // pred_check_branch
        %192 = sbr.rel (%p190) target = $region24
      $region23: #{encoder_forward.1} parent=11 // pred_region
        _
      $region24: #{encoder_forward.1} parent=11 // pred_fallthru
        _
      // Predicated region
      $region25: #{encoder_forward.1} parent=11 // pred_check
        %p193 = pneg %p122
      $region26: #{encoder_forward.1} parent=11 // pred_check_branch
        %195 = sbr.rel (%p193) target = $region28
      $region27: #{encoder_forward.1} parent=11 // pred_region
        _
      $region28: #{encoder_forward.1} parent=11 // pred_fallthru
        _
      // Predicated region
      $region29: #{encoder_forward.1} parent=11 // pred_check
        %p196 = pneg %p143
      $region30: #{encoder_forward.1} parent=11 // pred_check_branch
        %198 = sbr.rel (%p196) target = $region32
      $region31: #{encoder_forward.1} parent=11 // pred_region
        _
      $region32: #{encoder_forward.1} parent=11 // pred_fallthru
        _
    $region12: #{encoder_forward.1} parent=5 // pred_fallthru
      _
    %p199 = scmp.lt.s32.totalorder %s12, 2
    // Predicated region
    $region33: #{encoder_forward.1} parent=5 // pred_check
      %p200 = pneg %p199
    $region34: #{encoder_forward.1} parent=5 // pred_check_branch
      %202 = sbr.rel (%p200) target = $region36
    $region35: #{encoder_forward.1} parent=5 // pred_region
      // Predicated region
      $region37: #{encoder_forward.1} parent=35 // pred_check
        %p203 = pneg %p32
      $region38: #{encoder_forward.1} parent=35 // pred_check_branch
        %205 = sbr.rel (%p203) target = $region40
      $region39: #{encoder_forward.1} parent=35 // pred_region
        %p206 = scmp.lt.s32.totalorder %s12, 1
        %s207 = scalar_select %p206, %s12, 1
        %s208 = smul.addr %s207, 8
        %s209 = scalar_lea.vmem %s0, %s208
      $region40: #{encoder_forward.1} parent=35 // pred_fallthru
        _
    $region36: #{encoder_forward.1} parent=5 // pred_fallthru
      _
    %p210 = scmp.le.s32.totalorder 1, %s12
    %p211 = scmp.lt.s32.totalorder %s12, 3
    %p212 = pnand %p210, %p211
    %p213 = pneg %p212
    // Predicated region
    $region41: #{encoder_forward.1} parent=5 // pred_check
      _
    $region42: #{encoder_forward.1} parent=5 // pred_check_branch
      %215 = sbr.rel (%p212) target = $region44
    $region43: #{encoder_forward.1} parent=5 // pred_region
      %s216 = ssub.s32 %s12, 1
      %p217 = scmp.lt.s32.totalorder %s17, 1
      %s218 = scalar_select %p217, %s17, 1
      %s219 = smul.addr %s218, 8
      %s220 = scalar_lea.vmem %s0, %s219
      %p221 = pneg %p38
      %p222 = pneg %p35
      %p223 = pneg %p59
      %p224 = pneg %p56
      %p225 = pneg %p80
      %p226 = pneg %p77
      %p227 = pneg %p101
      %p228 = pneg %p98
      %p229 = pneg %p122
      %p230 = pneg %p119
      %p231 = pneg %p143
      %p232 = pneg %p140
      %p233 = pneg %p169
      %p234 = pneg %p166
      %p235 = scmp.lt.s32.totalorder %s17, 1
      %s236 = scalar_select %p235, %s17, 1
      %s237 = smul.addr %s236, 8
      %s238 = scalar_lea.vmem %s6, %s237
      %p239 = scmp.lt.s32.totalorder %s17, 1
      %s240 = scalar_select %p239, %s17, 1
      %s241 = smul.addr %s240, 8
      %s242 = scalar_lea.vmem %s0, %s241
      %p243 = scmp.lt.s32.totalorder %s17, 1
      %s244 = scalar_select %p243, %s17, 1
      %s245 = smul.addr %s244, 8
      %s246 = scalar_lea.vmem %s6, %s245
      %v247 = vld [vmem:[%s242] sm:$0xff]
      %v248 = vlaneseq
      %v249 = vshrl.u32 %v248, 7
      %v250 = vadd.s32 %v249, 8
      %v251 = vadd.s32 %v249, 16
      %v252 = vadd.s32 %v249, 24
      %v253 = vadd.s32 %v249, 32
      %v254 = vadd.s32 %v249, 40
      %v255 = vadd.s32 %v249, 48
      %v256 = vadd.s32 %v249, 56
      %v257 = vlaneseq
      %v258 = vand.u32 %v257, 127
      %v259 = vmul.u32 %v258, 6
      %vm260 = vcmp.ge.s32.totalorder %v249, %v259
      %vm261 = vcmp.ge.s32.totalorder %v250, %v259
      %vm262 = vcmp.ge.s32.totalorder %v251, %v259
      %vm263 = vcmp.ge.s32.totalorder %v252, %v259
      %vm264 = vcmp.ge.s32.totalorder %v253, %v259
      %vm265 = vcmp.ge.s32.totalorder %v254, %v259
      %vm266 = vcmp.ge.s32.totalorder %v255, %v259
      %vm267 = vcmp.ge.s32.totalorder %v256, %v259
      %v268 = vadd.s32 %v259, 6
      %vm269 = vcmp.lt.s32.totalorder %v249, %v268
      %vm270 = vcmp.lt.s32.totalorder %v250, %v268
      %vm271 = vcmp.lt.s32.totalorder %v251, %v268
      %vm272 = vcmp.lt.s32.totalorder %v252, %v268
      %vm273 = vcmp.lt.s32.totalorder %v253, %v268
      %vm274 = vcmp.lt.s32.totalorder %v254, %v268
      %vm275 = vcmp.lt.s32.totalorder %v255, %v268
      %vm276 = vcmp.lt.s32.totalorder %v256, %v268
      %vm277 = vmand %vm260, %vm269
      %vm278 = vmand %vm261, %vm270
      %vm279 = vmand %vm262, %vm271
      %vm280 = vmand %vm263, %vm272
      %vm281 = vmand %vm264, %vm273
      %vm282 = vmand %vm265, %vm274
      %vm283 = vmand %vm266, %vm275
      %vm284 = vmand %vm267, %vm276
      %v285 = vsel %vm277, 1, 0
      %v286 = vsel %vm278, 1, 0
      %v287 = vsel %vm279, 1, 0
      %v288 = vsel %vm280, 1, 0
      %v289 = vsel %vm281, 1, 0
      %v290 = vsel %vm282, 1, 0
      %v291 = vsel %vm283, 1, 0
      %v292 = vsel %vm284, 1, 0
      %v293 = vcvt.s32.f32 %v285
      %v294 = vcvt.s32.f32 %v286
      %v295 = vcvt.s32.f32 %v287
      %v296 = vcvt.s32.f32 %v288
      %v297 = vcvt.s32.f32 %v289
      %v298 = vcvt.s32.f32 %v290
      %v299 = vcvt.s32.f32 %v291
      %v300 = vcvt.s32.f32 %v292
      %v301 = vmul.u32 %v249, 6
      %v302 = vmul.u32 %v250, 6
      %vm303 = vcmp.ge.s32.totalorder %v258, %v301
      %vm304 = vcmp.ge.s32.totalorder %v258, %v302
      %v305 = vadd.s32 %v301, 6
      %v306 = vadd.s32 %v302, 6
      %vm307 = vcmp.lt.s32.totalorder %v258, %v305
      %vm308 = vcmp.lt.s32.totalorder %v258, %v306
      %vm309 = vmand %vm303, %vm307
      %vm310 = vmand %vm304, %vm308
      %v311 = vsel %vm309, 1, 0
      %v312 = vsel %vm310, 1, 0
      %v313 = vcvt.s32.f32 %v311
      %v314 = vcvt.s32.f32 %v312
      %v315 = vld [vmem:[%s1] sm:$0xff]
      %v316 = vld [vmem:[%s1 + $0x8] sm:$0xff]
      %v317 = vld [vmem:[%s1 + $0x10] sm:$0xff]
      %v318 = vld [vmem:[%s1 + $0x18] sm:$0xff]
      %v319 = vld [vmem:[%s1 + $0x20] sm:$0xff]
      %v320 = vld [vmem:[%s1 + $0x28] sm:$0xff]
      %v321 = vld [vmem:[%s1 + $0x30] sm:$0xff]
      %v322 = vld [vmem:[%s1 + $0x38] sm:$0xff]
      %v323 = vld [vmem:[%s1 + $0x40] sm:$0xff]
      %v324 = vld [vmem:[%s1 + $0x48] sm:$0xff]
      %v325 = vld [vmem:[%s1 + $0x50] sm:$0xff]
      %v326 = vld [vmem:[%s1 + $0x58] sm:$0xff]
      %v327 = vld [vmem:[%s1 + $0x60] sm:$0xff]
      %v328 = vld [vmem:[%s1 + $0x68] sm:$0xff]
      %v329 = vld [vmem:[%s1 + $0x70] sm:$0xf]
      %v330 = vld [vmem:[%s1 + $0x78] sm:$0xf]
      %v331 = vld [vmem:[%s5] sm:$0xff]
      %v332 = vld [vmem:[%s5 + $0x8] sm:$0xff]
      %v333 = vperm.slane %v331, 0
      %v334 = vperm.slane %v332, 0
      %vm335 = vcmask 490496
      %v337 = vsel %vm335, %v247, 0
      %vm339 = vcmask 1043456
      %v341 = vsel %vm339, %v329, 0
      %v344 = vsel %vm339, %v330, 0
      %346 = vmatpush.msra.mxu0 0.0
      %347 = vmatpush.msra.mxu0 0.0
      %348 = vmatpush.msra.mxu0 0.0
      %349 = vmatpush.msra.mxu0 0.0
      %350 = vmatpush.msra.mxu0 0.0
      %351 = vmatpush.msra.mxu0 0.0
      %352 = vmatpush.msra.mxu0 0.0
      %353 = vmatpush.msra.mxu0 0.0
      %354 = vmatpush.msra.mxu0 %v341
      %355 = vmatpush.msra.mxu0 %v327
      %356 = vmatpush.msra.mxu0 %v325
      %357 = vmatpush.msra.mxu0 %v323
      %358 = vmatpush.msra.mxu0 %v321
      %359 = vmatpush.msra.mxu0 %v319
      %360 = vmatpush.msra.mxu0 %v317
      %361 = vmatpush.msra.mxu0 %v315
      %362 = vmatmul.f32.gmra.mxu0 %v337
      %v363 = vpop.f32.mrf.mxu0
      %v364 = vadd.f32 %v333, %v363
      %365 = vdwg.mxu0
      %366 = vmatpush.msra.mxu0 0.0
      %367 = vmatpush.msra.mxu0 0.0
      %368 = vmatpush.msra.mxu0 0.0
      %369 = vmatpush.msra.mxu0 0.0
      %370 = vmatpush.msra.mxu0 0.0
      %371 = vmatpush.msra.mxu0 0.0
      %372 = vmatpush.msra.mxu0 0.0
      %373 = vmatpush.msra.mxu0 0.0
      %374 = vmatpush.msra.mxu0 %v344
      %375 = vmatpush.msra.mxu0 %v328
      %376 = vmatpush.msra.mxu0 %v326
      %377 = vmatpush.msra.mxu0 %v324
      %378 = vmatpush.msra.mxu0 %v322
      %379 = vmatpush.msra.mxu0 %v320
      %380 = vmatpush.msra.mxu0 %v318
      %381 = vmatpush.msra.mxu0 %v316
      %382 = vmatmul.f32.gmra.mxu0 %v337
      %v383 = vpop.f32.mrf.mxu0
      %v384 = vadd.f32 %v334, %v383
      %385 = vdwg.mxu0
      %v387 = vrot.slane %v364, 1
      %v388 = vrot.slane %v364, 2
      %v389 = vrot.slane %v364, 3
      %v390 = vrot.slane %v364, 4
      %v391 = vrot.slane %v364, 5
      %v392 = vrot.slane %v364, 6
      %v393 = vrot.slane %v364, 7
      %v394 = vperm.slane %v364, 0
      %v395 = vperm.slane %v387, 0
      %v396 = vperm.slane %v388, 0
      %v397 = vperm.slane %v389, 0
      %v398 = vperm.slane %v390, 0
      %v399 = vperm.slane %v391, 0
      %v400 = vperm.slane %v392, 0
      %v401 = vperm.slane %v393, 0
      %410 = vrot.lane.b32.xlu0 %v364, 68
      %v411 = vpop.permute.xlu0 %410
      %v413 = vmul.f32 %v394, %v411
      %v414 = vmul.f32 %v395, %v411
      %v415 = vmul.f32 %v396, %v411
      %v416 = vmul.f32 %v397, %v411
      %v417 = vmul.f32 %v398, %v411
      %v418 = vmul.f32 %v399, %v411
      %v419 = vmul.f32 %v400, %v411
      %v420 = vmul.f32 %v401, %v411
      %v422 = vsel %vm335, %v413, 0
      %v425 = vsel %vm335, %v414, 0
      %v428 = vsel %vm335, %v415, 0
      %v431 = vsel %vm335, %v416, 0
      %v434 = vsel %vm335, %v417, 0
      %v437 = vsel %vm335, %v418, 0
      %v440 = vsel %vm335, %v419, 0
      %v443 = vsel %vm335, %v420, 0
      %v446 = vsel %vm339, %v300, 0
      %448 = vmatpush.msra.mxu0 0.0
      %449 = vmatpush.msra.mxu0 0.0
      %450 = vmatpush.msra.mxu0 0.0
      %451 = vmatpush.msra.mxu0 0.0
      %452 = vmatpush.msra.mxu0 0.0
      %453 = vmatpush.msra.mxu0 0.0
      %454 = vmatpush.msra.mxu0 0.0
      %455 = vmatpush.msra.mxu0 0.0
      %456 = vmatpush.msra.mxu0 %v446
      %457 = vmatpush.msra.mxu0 %v299
      %458 = vmatpush.msra.mxu0 %v298
      %459 = vmatpush.msra.mxu0 %v297
      %460 = vmatpush.msra.mxu0 %v296
      %461 = vmatpush.msra.mxu0 %v295
      %462 = vmatpush.msra.mxu0 %v294
      %463 = vmatpush.msra.mxu0 %v293
      %464 = vmatmul.f32.gmra.mxu0 %v422
      %v465 = vpop.f32.mrf.mxu0
      %v466 = vadd.f32 0.0, %v465
      %467 = vmatmul.f32.gmra.mxu0 %v425
      %v468 = vpop.f32.mrf.mxu0
      %v469 = vadd.f32 0.0, %v468
      %470 = vmatmul.f32.gmra.mxu0 %v428
      %v471 = vpop.f32.mrf.mxu0
      %v472 = vadd.f32 0.0, %v471
      %473 = vmatmul.f32.gmra.mxu0 %v431
      %v474 = vpop.f32.mrf.mxu0
      %v475 = vadd.f32 0.0, %v474
      %476 = vmatmul.f32.gmra.mxu0 %v434
      %v477 = vpop.f32.mrf.mxu0
      %v478 = vadd.f32 0.0, %v477
      %479 = vmatmul.f32.gmra.mxu0 %v437
      %v480 = vpop.f32.mrf.mxu0
      %v481 = vadd.f32 0.0, %v480
      %482 = vmatmul.f32.gmra.mxu0 %v440
      %v483 = vpop.f32.mrf.mxu0
      %v484 = vadd.f32 0.0, %v483
      %485 = vmatmul.f32.gmra.mxu0 %v443
      %v486 = vpop.f32.mrf.mxu0
      %v487 = vadd.f32 0.0, %v486
      %488 = vdwg.mxu0
      %vm489 = vcmask 80896
      %v490 = vsel %vm489, %v466, -inf
      %v491 = vrot.slane %v490, 4
      %v492 = vmax.f32 %v490, %v491
      %v493 = vrot.slane %v492, 2
      %v494 = vmax.f32 %v492, %v493
      %v495 = vrot.slane %v494, 1
      %v496 = vmax.f32 %v494, %v495
      %v497 = vsel %vm489, %v469, -inf
      %v498 = vrot.slane %v497, 4
      %v499 = vmax.f32 %v497, %v498
      %v500 = vrot.slane %v499, 2
      %v501 = vmax.f32 %v499, %v500
      %v502 = vrot.slane %v501, 1
      %v503 = vmax.f32 %v501, %v502
      %v504 = vsel %vm489, %v472, -inf
      %v505 = vrot.slane %v504, 4
      %v506 = vmax.f32 %v504, %v505
      %v507 = vrot.slane %v506, 2
      %v508 = vmax.f32 %v506, %v507
      %v509 = vrot.slane %v508, 1
      %v510 = vmax.f32 %v508, %v509
      %v511 = vsel %vm489, %v475, -inf
      %v512 = vrot.slane %v511, 4
      %v513 = vmax.f32 %v511, %v512
      %v514 = vrot.slane %v513, 2
      %v515 = vmax.f32 %v513, %v514
      %v516 = vrot.slane %v515, 1
      %v517 = vmax.f32 %v515, %v516
      %v518 = vsel %vm489, %v478, -inf
      %v519 = vrot.slane %v518, 4
      %v520 = vmax.f32 %v518, %v519
      %v521 = vrot.slane %v520, 2
      %v522 = vmax.f32 %v520, %v521
      %v523 = vrot.slane %v522, 1
      %v524 = vmax.f32 %v522, %v523
      %v525 = vsel %vm489, %v481, -inf
      %v526 = vrot.slane %v525, 4
      %v527 = vmax.f32 %v525, %v526
      %v528 = vrot.slane %v527, 2
      %v529 = vmax.f32 %v527, %v528
      %v530 = vrot.slane %v529, 1
      %v531 = vmax.f32 %v529, %v530
      %v532 = vsel %vm489, %v484, -inf
      %v533 = vrot.slane %v532, 4
      %v534 = vmax.f32 %v532, %v533
      %v535 = vrot.slane %v534, 2
      %v536 = vmax.f32 %v534, %v535
      %v537 = vrot.slane %v536, 1
      %v538 = vmax.f32 %v536, %v537
      %v539 = vsel %vm489, %v487, -inf
      %v540 = vrot.slane %v539, 4
      %v541 = vmax.f32 %v539, %v540
      %v542 = vrot.slane %v541, 2
      %v543 = vmax.f32 %v541, %v542
      %v544 = vrot.slane %v543, 1
      %v545 = vmax.f32 %v543, %v544
      %v546 = vsub.f32 %v466, %v496
      %v547 = vsub.f32 %v469, %v503
      %v548 = vsub.f32 %v472, %v510
      %v549 = vsub.f32 %v475, %v517
      %v550 = vsub.f32 %v478, %v524
      %v551 = vsub.f32 %v481, %v531
      %v552 = vsub.f32 %v484, %v538
      %v553 = vsub.f32 %v487, %v545
      %v554 = vmul.f32 %v546, 1.442695
      %v555 = vpow.pop %v554
      %v556 = vmul.f32 %v547, 1.442695
      %v557 = vpow.pop %v556
      %v558 = vmul.f32 %v548, 1.442695
      %v559 = vpow.pop %v558
      %v560 = vmul.f32 %v549, 1.442695
      %v561 = vpow.pop %v560
      %v562 = vmul.f32 %v550, 1.442695
      %v563 = vpow.pop %v562
      %v564 = vmul.f32 %v551, 1.442695
      %v565 = vpow.pop %v564
      %v566 = vmul.f32 %v552, 1.442695
      %v567 = vpow.pop %v566
      %v568 = vmul.f32 %v553, 1.442695
      %v569 = vpow.pop %v568
      %v570 = vsel %vm489, %v555, 0.0
      %v571 = vrot.slane %v570, 4
      %v572 = vadd.f32 %v570, %v571
      %v573 = vrot.slane %v572, 2
      %v574 = vadd.f32 %v572, %v573
      %v575 = vrot.slane %v574, 1
      %v576 = vadd.f32 %v574, %v575
      %v577 = vsel %vm489, %v557, 0.0
      %v578 = vrot.slane %v577, 4
      %v579 = vadd.f32 %v577, %v578
      %v580 = vrot.slane %v579, 2
      %v581 = vadd.f32 %v579, %v580
      %v582 = vrot.slane %v581, 1
      %v583 = vadd.f32 %v581, %v582
      %v584 = vsel %vm489, %v559, 0.0
      %v585 = vrot.slane %v584, 4
      %v586 = vadd.f32 %v584, %v585
      %v587 = vrot.slane %v586, 2
      %v588 = vadd.f32 %v586, %v587
      %v589 = vrot.slane %v588, 1
      %v590 = vadd.f32 %v588, %v589
      %v591 = vsel %vm489, %v561, 0.0
      %v592 = vrot.slane %v591, 4
      %v593 = vadd.f32 %v591, %v592
      %v594 = vrot.slane %v593, 2
      %v595 = vadd.f32 %v593, %v594
      %v596 = vrot.slane %v595, 1
      %v597 = vadd.f32 %v595, %v596
      %v598 = vsel %vm489, %v563, 0.0
      %v599 = vrot.slane %v598, 4
      %v600 = vadd.f32 %v598, %v599
      %v601 = vrot.slane %v600, 2
      %v602 = vadd.f32 %v600, %v601
      %v603 = vrot.slane %v602, 1
      %v604 = vadd.f32 %v602, %v603
      %v605 = vsel %vm489, %v565, 0.0
      %v606 = vrot.slane %v605, 4
      %v607 = vadd.f32 %v605, %v606
      %v608 = vrot.slane %v607, 2
      %v609 = vadd.f32 %v607, %v608
      %v610 = vrot.slane %v609, 1
      %v611 = vadd.f32 %v609, %v610
      %v612 = vsel %vm489, %v567, 0.0
      %v613 = vrot.slane %v612, 4
      %v614 = vadd.f32 %v612, %v613
      %v615 = vrot.slane %v614, 2
      %v616 = vadd.f32 %v614, %v615
      %v617 = vrot.slane %v616, 1
      %v618 = vadd.f32 %v616, %v617
      %v619 = vsel %vm489, %v569, 0.0
      %v620 = vrot.slane %v619, 4
      %v621 = vadd.f32 %v619, %v620
      %v622 = vrot.slane %v621, 2
      %v623 = vadd.f32 %v621, %v622
      %v624 = vrot.slane %v623, 1
      %v625 = vadd.f32 %v623, %v624
      %v626 = vrcp.pop %v576
      %v627 = vrcp.pop %v583
      %v628 = vrcp.pop %v590
      %v629 = vrcp.pop %v597
      %v630 = vrcp.pop %v604
      %v631 = vrcp.pop %v611
      %v632 = vrcp.pop %v618
      %v633 = vrcp.pop %v625
      %v634 = vmul.f32 %v555, %v626
      %v635 = vmul.f32 %v557, %v627
      %v636 = vmul.f32 %v559, %v628
      %v637 = vmul.f32 %v561, %v629
      %v638 = vmul.f32 %v563, %v630
      %v639 = vmul.f32 %v565, %v631
      %v640 = vmul.f32 %v567, %v632
      %v641 = vmul.f32 %v569, %v633
      %v643 = vsel %vm489, %v634, 0
      %v646 = vsel %vm489, %v635, 0
      %v649 = vsel %vm489, %v636, 0
      %v652 = vsel %vm489, %v637, 0
      %v655 = vsel %vm489, %v638, 0
      %v658 = vsel %vm489, %v639, 0
      %v661 = vsel %vm489, %v640, 0
      %v664 = vsel %vm489, %v641, 0
      %vm666 = vcmask 1041408
      %v668 = vsel %vm666, %v314, 0
      %670 = vmatpush.msra.mxu0 0.0
      %671 = vmatpush.msra.mxu0 0.0
      %672 = vmatpush.msra.mxu0 0.0
      %673 = vmatpush.msra.mxu0 0.0
      %674 = vmatpush.msra.mxu0 0.0
      %675 = vmatpush.msra.mxu0 0.0
      %676 = vmatpush.msra.mxu0 0.0
      %677 = vmatpush.msra.mxu0 0.0
      %678 = vmatpush.msra.mxu0 0.0
      %679 = vmatpush.msra.mxu0 0.0
      %680 = vmatpush.msra.mxu0 0.0
      %681 = vmatpush.msra.mxu0 0.0
      %682 = vmatpush.msra.mxu0 0.0
      %683 = vmatpush.msra.mxu0 0.0
      %684 = vmatpush.msra.mxu0 %v668
      %685 = vmatpush.msra.mxu0 %v313
      %686 = vmatmul.f32.gmra.mxu0 %v643
      %v687 = vpop.f32.mrf.mxu0
      %v688 = vadd.f32 0.0, %v687
      %689 = vmatmul.f32.gmra.mxu0 %v646
      %v690 = vpop.f32.mrf.mxu0
      %v691 = vadd.f32 0.0, %v690
      %692 = vmatmul.f32.gmra.mxu0 %v649
      %v693 = vpop.f32.mrf.mxu0
      %v694 = vadd.f32 0.0, %v693
      %695 = vmatmul.f32.gmra.mxu0 %v652
      %v696 = vpop.f32.mrf.mxu0
      %v697 = vadd.f32 0.0, %v696
      %698 = vmatmul.f32.gmra.mxu0 %v655
      %v699 = vpop.f32.mrf.mxu0
      %v700 = vadd.f32 0.0, %v699
      %701 = vmatmul.f32.gmra.mxu0 %v658
      %v702 = vpop.f32.mrf.mxu0
      %v703 = vadd.f32 0.0, %v702
      %704 = vmatmul.f32.gmra.mxu0 %v661
      %v705 = vpop.f32.mrf.mxu0
      %v706 = vadd.f32 0.0, %v705
      %707 = vmatmul.f32.gmra.mxu0 %v664
      %v708 = vpop.f32.mrf.mxu0
      %v709 = vadd.f32 0.0, %v708
      %710 = vdwg.mxu0
      %712 = vrot.lane.b32.xlu0 %v364, 8
      %v713 = vpop.permute.xlu0 %712
      %714 = vrot.lane.b32.xlu0 %v384, 8
      %v715 = vpop.permute.xlu0 %714
      %vm716 = vcmask 64512
      %v717 = vsel %vm716, %v713, %v715
      %v719 = vmul.f32 %v688, %v717
      %v720 = vmul.f32 %v691, %v717
      %v721 = vmul.f32 %v694, %v717
      %v722 = vmul.f32 %v697, %v717
      %v723 = vmul.f32 %v700, %v717
      %v724 = vmul.f32 %v703, %v717
      %v725 = vmul.f32 %v706, %v717
      %v726 = vmul.f32 %v709, %v717
      %v727 = vsel %vm335, %v719, 0.0
      %v728 = vrot.slane %v727, 4
      %v729 = vadd.f32 %v727, %v728
      %v730 = vrot.slane %v729, 2
      %v731 = vadd.f32 %v729, %v730
      %v732 = vrot.slane %v731, 1
      %v733 = vadd.f32 %v731, %v732
      %v734 = vsel %vm335, %v720, 0.0
      %v735 = vrot.slane %v734, 4
      %v736 = vadd.f32 %v734, %v735
      %v737 = vrot.slane %v736, 2
      %v738 = vadd.f32 %v736, %v737
      %v739 = vrot.slane %v738, 1
      %v740 = vadd.f32 %v738, %v739
      %v741 = vsel %vm335, %v721, 0.0
      %v742 = vrot.slane %v741, 4
      %v743 = vadd.f32 %v741, %v742
      %v744 = vrot.slane %v743, 2
      %v745 = vadd.f32 %v743, %v744
      %v746 = vrot.slane %v745, 1
      %v747 = vadd.f32 %v745, %v746
      %v748 = vsel %vm335, %v722, 0.0
      %v749 = vrot.slane %v748, 4
      %v750 = vadd.f32 %v748, %v749
      %v751 = vrot.slane %v750, 2
      %v752 = vadd.f32 %v750, %v751
      %v753 = vrot.slane %v752, 1
      %v754 = vadd.f32 %v752, %v753
      %v755 = vsel %vm335, %v723, 0.0
      %v756 = vrot.slane %v755, 4
      %v757 = vadd.f32 %v755, %v756
      %v758 = vrot.slane %v757, 2
      %v759 = vadd.f32 %v757, %v758
      %v760 = vrot.slane %v759, 1
      %v761 = vadd.f32 %v759, %v760
      %v762 = vsel %vm335, %v724, 0.0
      %v763 = vrot.slane %v762, 4
      %v764 = vadd.f32 %v762, %v763
      %v765 = vrot.slane %v764, 2
      %v766 = vadd.f32 %v764, %v765
      %v767 = vrot.slane %v766, 1
      %v768 = vadd.f32 %v766, %v767
      %v769 = vsel %vm335, %v725, 0.0
      %v770 = vrot.slane %v769, 4
      %v771 = vadd.f32 %v769, %v770
      %v772 = vrot.slane %v771, 2
      %v773 = vadd.f32 %v771, %v772
      %v774 = vrot.slane %v773, 1
      %v775 = vadd.f32 %v773, %v774
      %v776 = vsel %vm335, %v726, 0.0
      %v777 = vrot.slane %v776, 4
      %v778 = vadd.f32 %v776, %v777
      %v779 = vrot.slane %v778, 2
      %v780 = vadd.f32 %v778, %v779
      %v781 = vrot.slane %v780, 1
      %v782 = vadd.f32 %v780, %v781
      %v783 = vperm.slane %v331, 1
      %vm792 = vcmask 1041409
      %v793 = vsel %vm792, %v740, %v733
      %vm794 = vcmask 1042434
      %v795 = vsel %vm794, %v747, %v793
      %vm796 = vcmask 1043459
      %v797 = vsel %vm796, %v754, %v795
      %vm798 = vcmask 1044484
      %v799 = vsel %vm798, %v761, %v797
      %vm800 = vcmask 1045509
      %v801 = vsel %vm800, %v768, %v799
      %vm802 = vcmask 1046534
      %v803 = vsel %vm802, %v775, %v801
      %vm804 = vcmask 1047559
      %v805 = vsel %vm804, %v782, %v803
      %813 = vrot.lane.b32.xlu0 %v316, 76
      %v814 = vpop.permute.xlu0 %813
      %815 = vrot.lane.b32.xlu0 %v318, 76
      %v816 = vpop.permute.xlu0 %815
      %817 = vrot.lane.b32.xlu0 %v320, 76
      %v818 = vpop.permute.xlu0 %817
      %819 = vrot.lane.b32.xlu0 %v322, 76
      %v820 = vpop.permute.xlu0 %819
      %821 = vrot.lane.b32.xlu0 %v324, 76
      %v822 = vpop.permute.xlu0 %821
      %823 = vrot.lane.b32.xlu0 %v326, 76
      %v824 = vpop.permute.xlu0 %823
      %825 = vrot.lane.b32.xlu0 %v328, 76
      %v826 = vpop.permute.xlu0 %825
      %827 = vrot.lane.b32.xlu0 %v330, 76
      %v828 = vpop.permute.xlu0 %827
      %v836 = vsel %vm335, %v805, 0
      %v838 = vsel %vm339, %v828, 0
      %840 = vmatpush.msra.mxu0 0.0
      %841 = vmatpush.msra.mxu0 0.0
      %842 = vmatpush.msra.mxu0 0.0
      %843 = vmatpush.msra.mxu0 0.0
      %844 = vmatpush.msra.mxu0 0.0
      %845 = vmatpush.msra.mxu0 0.0
      %846 = vmatpush.msra.mxu0 0.0
      %847 = vmatpush.msra.mxu0 0.0
      %848 = vmatpush.msra.mxu0 %v838
      %849 = vmatpush.msra.mxu0 %v826
      %850 = vmatpush.msra.mxu0 %v824
      %851 = vmatpush.msra.mxu0 %v822
      %852 = vmatpush.msra.mxu0 %v820
      %853 = vmatpush.msra.mxu0 %v818
      %854 = vmatpush.msra.mxu0 %v816
      %855 = vmatpush.msra.mxu0 %v814
      %856 = vmatmul.f32.gmra.mxu0 %v836
      %v857 = vpop.f32.mrf.mxu0
      %v858 = vadd.f32 %v783, %v857
      %859 = vdwg.mxu0
      %v860 = vadd.f32 %v247, %v858
      %v861 = vsel %vm335, %v860, 0.0
      %862 = vadd.xlane.f32.xlu0 %v861
      %v863 = vpop.xlane.xlu0 %862
      %v864 = vrcp.pop 60.0
      %v865 = vmul.f32 60.0, %v864
      %v866 = vsub.f32 1.0, %v865
      %v867 = vmul.f32 %v864, %v866
      %v868 = vadd.f32 %v864, %v867
      %vm869 = vweird.f32 %v864
      %v870 = vsel %vm869, %v864, %v868
      %v871 = vmul.f32 %v863, %v870
      %v872 = vsub.f32 %v860, %v871
      %v873 = vmul.f32 %v872, %v872
      %v874 = vsel %vm335, %v873, 0.0
      %875 = vadd.xlane.f32.xlu0 %v874
      %v876 = vpop.xlane.xlu0 %875
      %v877 = vmul.f32 %v876, %v870
      %v878 = vadd.f32 %v877, 1e-05
      %v879 = vrsqrt.pop %v878
      %v880 = vmul.f32 %v879, %v878
      %v881 = vmul.f32 %v880, %v879
      %v882 = vmul.f32 0.5, %v881
      %v883 = vsub.f32 1.5, %v882
      %v884 = vmul.f32 %v879, %v883
      %vm885 = vweird.f32 %v878
      %vm886 = vweird.f32 %v879
      %vm887 = vmor %vm885, %vm886
      %v888 = vsel %vm887, %v879, %v884
      %v889 = vmul.f32 %v872, %v888
      %v890 = vperm.slane %v331, 2
      %v891 = vmul.f32 %v889, %v890
      %v892 = vperm.slane %v331, 3
      %v893 = vadd.f32 %v891, %v892
      %v894 = vld [vmem:[%s2] sm:$0xff]
      %v895 = vld [vmem:[%s2 + $0x8] sm:$0xff]
      %v896 = vld [vmem:[%s2 + $0x10] sm:$0xff]
      %v897 = vld [vmem:[%s2 + $0x18] sm:$0xff]
      %v898 = vld [vmem:[%s2 + $0x20] sm:$0xff]
      %v899 = vld [vmem:[%s2 + $0x28] sm:$0xff]
      %v900 = vld [vmem:[%s2 + $0x30] sm:$0xff]
      %v901 = vld [vmem:[%s2 + $0x38] sm:$0xff]
      %v902 = vld [vmem:[%s2 + $0x40] sm:$0xff]
      %v903 = vld [vmem:[%s2 + $0x48] sm:$0xff]
      %v904 = vld [vmem:[%s2 + $0x50] sm:$0xff]
      %v905 = vld [vmem:[%s2 + $0x58] sm:$0xff]
      %v906 = vld [vmem:[%s2 + $0x60] sm:$0xff]
      %v907 = vld [vmem:[%s2 + $0x68] sm:$0xff]
      %v908 = vld [vmem:[%s2 + $0x70] sm:$0xff]
      %v909 = vld [vmem:[%s2 + $0x78] sm:$0xff]
      %v910 = vld [vmem:[%s2 + $0x80] sm:$0xff]
      %v911 = vld [vmem:[%s2 + $0x88] sm:$0xff]
      %v912 = vld [vmem:[%s2 + $0x90] sm:$0xff]
      %v913 = vld [vmem:[%s2 + $0x98] sm:$0xff]
      %v914 = vld [vmem:[%s2 + $0xa0] sm:$0xff]
      %v915 = vld [vmem:[%s2 + $0xa8] sm:$0xff]
      %v916 = vld [vmem:[%s2 + $0xb0] sm:$0xff]
      %v917 = vld [vmem:[%s2 + $0xb8] sm:$0xff]
      %v918 = vld [vmem:[%s2 + $0xc0] sm:$0xff]
      %v919 = vld [vmem:[%s2 + $0xc8] sm:$0xff]
      %v920 = vld [vmem:[%s2 + $0xd0] sm:$0xff]
      %v921 = vld [vmem:[%s2 + $0xd8] sm:$0xff]
      %v922 = vld [vmem:[%s2 + $0xe0] sm:$0xff]
      %v923 = vld [vmem:[%s2 + $0xe8] sm:$0xff]
      %v924 = vld [vmem:[%s2 + $0xf0] sm:$0xff]
      %v925 = vld [vmem:[%s2 + $0xf8] sm:$0xff]
      %v926 = vld [vmem:[%s2 + $0x100] sm:$0xff]
      %v927 = vld [vmem:[%s2 + $0x108] sm:$0xff]
      %v928 = vld [vmem:[%s2 + $0x110] sm:$0xff]
      %v929 = vld [vmem:[%s2 + $0x118] sm:$0xff]
      %v930 = vld [vmem:[%s2 + $0x120] sm:$0xff]
      %v931 = vld [vmem:[%s2 + $0x128] sm:$0xff]
      %v932 = vld [vmem:[%s2 + $0x130] sm:$0xff]
      %v933 = vld [vmem:[%s2 + $0x138] sm:$0xff]
      %v934 = vld [vmem:[%s2 + $0x140] sm:$0xff]
      %v935 = vld [vmem:[%s2 + $0x148] sm:$0xff]
      %v936 = vld [vmem:[%s2 + $0x150] sm:$0xff]
      %v937 = vld [vmem:[%s2 + $0x158] sm:$0xff]
      %v938 = vld [vmem:[%s2 + $0x160] sm:$0xff]
      %v939 = vld [vmem:[%s2 + $0x168] sm:$0xff]
      %v940 = vld [vmem:[%s2 + $0x170] sm:$0xff]
      %v941 = vld [vmem:[%s2 + $0x178] sm:$0xff]
      %v942 = vld [vmem:[%s2 + $0x180] sm:$0xff]
      %v943 = vld [vmem:[%s2 + $0x188] sm:$0xff]
      %v944 = vld [vmem:[%s2 + $0x190] sm:$0xff]
      %v945 = vld [vmem:[%s2 + $0x198] sm:$0xff]
      %v946 = vld [vmem:[%s2 + $0x1a0] sm:$0xff]
      %v947 = vld [vmem:[%s2 + $0x1a8] sm:$0xff]
      %v948 = vld [vmem:[%s2 + $0x1b0] sm:$0xff]
      %v949 = vld [vmem:[%s2 + $0x1b8] sm:$0xff]
      %v950 = vld [vmem:[%s2 + $0x1c0] sm:$0xff]
      %v951 = vld [vmem:[%s2 + $0x1c8] sm:$0xff]
      %v952 = vld [vmem:[%s2 + $0x1d0] sm:$0xff]
      %v953 = vld [vmem:[%s2 + $0x1d8] sm:$0xff]
      %v954 = vld [vmem:[%s2 + $0x1e0] sm:$0xff]
      %v955 = vld [vmem:[%s2 + $0x1e8] sm:$0xff]
      %v956 = vld [vmem:[%s2 + $0x1f0] sm:$0xff]
      %v957 = vld [vmem:[%s2 + $0x1f8] sm:$0xff]
      %v958 = vld [vmem:[%s2 + $0x200] sm:$0xff]
      %v959 = vld [vmem:[%s2 + $0x208] sm:$0xff]
      %v960 = vld [vmem:[%s2 + $0x210] sm:$0xff]
      %v961 = vld [vmem:[%s2 + $0x218] sm:$0xff]
      %v962 = vld [vmem:[%s2 + $0x220] sm:$0xff]
      %v963 = vld [vmem:[%s2 + $0x228] sm:$0xff]
      %v964 = vld [vmem:[%s2 + $0x230] sm:$0xff]
      %v965 = vld [vmem:[%s2 + $0x238] sm:$0xff]
      %v966 = vld [vmem:[%s2 + $0x240] sm:$0xff]
      %v967 = vld [vmem:[%s2 + $0x248] sm:$0xff]
      %v968 = vld [vmem:[%s2 + $0x250] sm:$0xff]
      %v969 = vld [vmem:[%s2 + $0x258] sm:$0xff]
      %v970 = vld [vmem:[%s2 + $0x260] sm:$0xff]
      %v971 = vld [vmem:[%s2 + $0x268] sm:$0xff]
      %v972 = vld [vmem:[%s2 + $0x270] sm:$0xff]
      %v973 = vld [vmem:[%s2 + $0x278] sm:$0xff]
      %v974 = vld [vmem:[%s2 + $0x280] sm:$0xff]
      %v975 = vld [vmem:[%s2 + $0x288] sm:$0xff]
      %v976 = vld [vmem:[%s2 + $0x290] sm:$0xff]
      %v977 = vld [vmem:[%s2 + $0x298] sm:$0xff]
      %v978 = vld [vmem:[%s2 + $0x2a0] sm:$0xff]
      %v979 = vld [vmem:[%s2 + $0x2a8] sm:$0xff]
      %v980 = vld [vmem:[%s2 + $0x2b0] sm:$0xff]
      %v981 = vld [vmem:[%s2 + $0x2b8] sm:$0xff]
      %v982 = vld [vmem:[%s2 + $0x2c0] sm:$0xff]
      %v983 = vld [vmem:[%s2 + $0x2c8] sm:$0xff]
      %v984 = vld [vmem:[%s2 + $0x2d0] sm:$0xff]
      %v985 = vld [vmem:[%s2 + $0x2d8] sm:$0xff]
      %v986 = vld [vmem:[%s2 + $0x2e0] sm:$0xff]
      %v987 = vld [vmem:[%s2 + $0x2e8] sm:$0xff]
      %v988 = vld [vmem:[%s2 + $0x2f0] sm:$0xff]
      %v989 = vld [vmem:[%s2 + $0x2f8] sm:$0xff]
      %v990 = vld [vmem:[%s2 + $0x300] sm:$0xff]
      %v991 = vld [vmem:[%s2 + $0x308] sm:$0xff]
      %v992 = vld [vmem:[%s2 + $0x310] sm:$0xff]
      %v993 = vld [vmem:[%s2 + $0x318] sm:$0xff]
      %v994 = vld [vmem:[%s2 + $0x320] sm:$0xff]
      %v995 = vld [vmem:[%s2 + $0x328] sm:$0xff]
      %v996 = vld [vmem:[%s2 + $0x330] sm:$0xff]
      %v997 = vld [vmem:[%s2 + $0x338] sm:$0xff]
      %v998 = vld [vmem:[%s2 + $0x340] sm:$0xff]
      %v999 = vld [vmem:[%s2 + $0x348] sm:$0xff]
      %v1000 = vld [vmem:[%s2 + $0x350] sm:$0xff]
      %v1001 = vld [vmem:[%s2 + $0x358] sm:$0xff]
      %v1002 = vld [vmem:[%s2 + $0x360] sm:$0xff]
      %v1003 = vld [vmem:[%s2 + $0x368] sm:$0xff]
      %v1004 = vld [vmem:[%s2 + $0x370] sm:$0xff]
      %v1005 = vld [vmem:[%s2 + $0x378] sm:$0xff]
      %v1006 = vld [vmem:[%s2 + $0x380] sm:$0xf]
      %v1007 = vld [vmem:[%s2 + $0x388] sm:$0xf]
      %v1008 = vld [vmem:[%s2 + $0x390] sm:$0xf]
      %v1009 = vld [vmem:[%s2 + $0x398] sm:$0xf]
      %v1010 = vld [vmem:[%s2 + $0x3a0] sm:$0xf]
      %v1011 = vld [vmem:[%s2 + $0x3a8] sm:$0xf]
      %v1012 = vld [vmem:[%s2 + $0x3b0] sm:$0xf]
      %v1013 = vld [vmem:[%s2 + $0x3b8] sm:$0xf]
      %v1014 = vld [vmem:[%s2 + $0x3c0] sm:$0xf]
      %v1015 = vld [vmem:[%s2 + $0x3c8] sm:$0xf]
      %v1016 = vld [vmem:[%s2 + $0x3d0] sm:$0xf]
      %v1017 = vld [vmem:[%s2 + $0x3d8] sm:$0xf]
      %v1018 = vld [vmem:[%s2 + $0x3e0] sm:$0xf]
      %v1019 = vld [vmem:[%s2 + $0x3e8] sm:$0xf]
      %v1020 = vld [vmem:[%s2 + $0x3f0] sm:$0xf]
      %v1021 = vld [vmem:[%s2 + $0x3f8] sm:$0xf]
      %v1022 = vld [vmem:[%s3] sm:$0xff]
      %v1023 = vld [vmem:[%s3 + $0x8] sm:$0xff]
      %v1026 = vperm.slane %v1022, 0
      %v1027 = vperm.slane %v1022, 1
      %v1028 = vperm.slane %v1022, 2
      %v1029 = vperm.slane %v1022, 3
      %v1030 = vperm.slane %v1022, 4
      %v1031 = vperm.slane %v1022, 5
      %v1032 = vperm.slane %v1022, 6
      %v1033 = vperm.slane %v1022, 7
      %v1034 = vperm.slane %v1023, 0
      %v1035 = vperm.slane %v1023, 1
      %v1036 = vperm.slane %v1023, 2
      %v1037 = vperm.slane %v1023, 3
      %v1038 = vperm.slane %v1023, 4
      %v1039 = vperm.slane %v1023, 5
      %v1040 = vperm.slane %v1023, 6
      %v1041 = vperm.slane %v1023, 7
      %v1059 = vsel %vm335, %v893, 0
      %v1062 = vsel %vm339, %v1006, 0
      %v1065 = vsel %vm339, %v1007, 0
      %v1068 = vsel %vm339, %v1008, 0
      %v1071 = vsel %vm339, %v1009, 0
      %v1074 = vsel %vm339, %v1010, 0
      %v1077 = vsel %vm339, %v1011, 0
      %v1080 = vsel %vm339, %v1012, 0
      %v1083 = vsel %vm339, %v1013, 0
      %v1086 = vsel %vm339, %v1014, 0
      %v1089 = vsel %vm339, %v1015, 0
      %v1092 = vsel %vm339, %v1016, 0
      %v1095 = vsel %vm339, %v1017, 0
      %v1098 = vsel %vm339, %v1018, 0
      %v1101 = vsel %vm339, %v1019, 0
      %v1104 = vsel %vm339, %v1020, 0
      %v1107 = vsel %vm339, %v1021, 0
      %1109 = vmatpush.msra.mxu0 0.0
      %1110 = vmatpush.msra.mxu0 0.0
      %1111 = vmatpush.msra.mxu0 0.0
      %1112 = vmatpush.msra.mxu0 0.0
      %1113 = vmatpush.msra.mxu0 0.0
      %1114 = vmatpush.msra.mxu0 0.0
      %1115 = vmatpush.msra.mxu0 0.0
      %1116 = vmatpush.msra.mxu0 0.0
      %1117 = vmatpush.msra.mxu0 %v1062
      %1118 = vmatpush.msra.mxu0 %v990
      %1119 = vmatpush.msra.mxu0 %v974
      %1120 = vmatpush.msra.mxu0 %v958
      %1121 = vmatpush.msra.mxu0 %v942
      %1122 = vmatpush.msra.mxu0 %v926
      %1123 = vmatpush.msra.mxu0 %v910
      %1124 = vmatpush.msra.mxu0 %v894
      %1125 = vmatmul.f32.gmra.mxu0 %v1059
      %v1126 = vpop.f32.mrf.mxu0
      %v1127 = vadd.f32 %v1026, %v1126
      %1128 = vdwg.mxu0
      %1129 = vmatpush.msra.mxu0 0.0
      %1130 = vmatpush.msra.mxu0 0.0
      %1131 = vmatpush.msra.mxu0 0.0
      %1132 = vmatpush.msra.mxu0 0.0
      %1133 = vmatpush.msra.mxu0 0.0
      %1134 = vmatpush.msra.mxu0 0.0
      %1135 = vmatpush.msra.mxu0 0.0
      %1136 = vmatpush.msra.mxu0 0.0
      %1137 = vmatpush.msra.mxu0 %v1065
      %1138 = vmatpush.msra.mxu0 %v991
      %1139 = vmatpush.msra.mxu0 %v975
      %1140 = vmatpush.msra.mxu0 %v959
      %1141 = vmatpush.msra.mxu0 %v943
      %1142 = vmatpush.msra.mxu0 %v927
      %1143 = vmatpush.msra.mxu0 %v911
      %1144 = vmatpush.msra.mxu0 %v895
      %1145 = vmatmul.f32.gmra.mxu0 %v1059
      %v1146 = vpop.f32.mrf.mxu0
      %v1147 = vadd.f32 %v1027, %v1146
      %1148 = vdwg.mxu0
      %1149 = vmatpush.msra.mxu0 0.0
      %1150 = vmatpush.msra.mxu0 0.0
      %1151 = vmatpush.msra.mxu0 0.0
      %1152 = vmatpush.msra.mxu0 0.0
      %1153 = vmatpush.msra.mxu0 0.0
      %1154 = vmatpush.msra.mxu0 0.0
      %1155 = vmatpush.msra.mxu0 0.0
      %1156 = vmatpush.msra.mxu0 0.0
      %1157 = vmatpush.msra.mxu0 %v1068
      %1158 = vmatpush.msra.mxu0 %v992
      %1159 = vmatpush.msra.mxu0 %v976
      %1160 = vmatpush.msra.mxu0 %v960
      %1161 = vmatpush.msra.mxu0 %v944
      %1162 = vmatpush.msra.mxu0 %v928
      %1163 = vmatpush.msra.mxu0 %v912
      %1164 = vmatpush.msra.mxu0 %v896
      %1165 = vmatmul.f32.gmra.mxu0 %v1059
      %v1166 = vpop.f32.mrf.mxu0
      %v1167 = vadd.f32 %v1028, %v1166
      %1168 = vdwg.mxu0
      %1169 = vmatpush.msra.mxu0 0.0
      %1170 = vmatpush.msra.mxu0 0.0
      %1171 = vmatpush.msra.mxu0 0.0
      %1172 = vmatpush.msra.mxu0 0.0
      %1173 = vmatpush.msra.mxu0 0.0
      %1174 = vmatpush.msra.mxu0 0.0
      %1175 = vmatpush.msra.mxu0 0.0
      %1176 = vmatpush.msra.mxu0 0.0
      %1177 = vmatpush.msra.mxu0 %v1071
      %1178 = vmatpush.msra.mxu0 %v993
      %1179 = vmatpush.msra.mxu0 %v977
      %1180 = vmatpush.msra.mxu0 %v961
      %1181 = vmatpush.msra.mxu0 %v945
      %1182 = vmatpush.msra.mxu0 %v929
      %1183 = vmatpush.msra.mxu0 %v913
      %1184 = vmatpush.msra.mxu0 %v897
      %1185 = vmatmul.f32.gmra.mxu0 %v1059
      %v1186 = vpop.f32.mrf.mxu0
      %v1187 = vadd.f32 %v1029, %v1186
      %1188 = vdwg.mxu0
      %1189 = vmatpush.msra.mxu0 0.0
      %1190 = vmatpush.msra.mxu0 0.0
      %1191 = vmatpush.msra.mxu0 0.0
      %1192 = vmatpush.msra.mxu0 0.0
      %1193 = vmatpush.msra.mxu0 0.0
      %1194 = vmatpush.msra.mxu0 0.0
      %1195 = vmatpush.msra.mxu0 0.0
      %1196 = vmatpush.msra.mxu0 0.0
      %1197 = vmatpush.msra.mxu0 %v1074
      %1198 = vmatpush.msra.mxu0 %v994
      %1199 = vmatpush.msra.mxu0 %v978
      %1200 = vmatpush.msra.mxu0 %v962
      %1201 = vmatpush.msra.mxu0 %v946
      %1202 = vmatpush.msra.mxu0 %v930
      %1203 = vmatpush.msra.mxu0 %v914
      %1204 = vmatpush.msra.mxu0 %v898
      %1205 = vmatmul.f32.gmra.mxu0 %v1059
      %v1206 = vpop.f32.mrf.mxu0
      %v1207 = vadd.f32 %v1030, %v1206
      %1208 = vdwg.mxu0
      %1209 = vmatpush.msra.mxu0 0.0
      %1210 = vmatpush.msra.mxu0 0.0
      %1211 = vmatpush.msra.mxu0 0.0
      %1212 = vmatpush.msra.mxu0 0.0
      %1213 = vmatpush.msra.mxu0 0.0
      %1214 = vmatpush.msra.mxu0 0.0
      %1215 = vmatpush.msra.mxu0 0.0
      %1216 = vmatpush.msra.mxu0 0.0
      %1217 = vmatpush.msra.mxu0 %v1077
      %1218 = vmatpush.msra.mxu0 %v995
      %1219 = vmatpush.msra.mxu0 %v979
      %1220 = vmatpush.msra.mxu0 %v963
      %1221 = vmatpush.msra.mxu0 %v947
      %1222 = vmatpush.msra.mxu0 %v931
      %1223 = vmatpush.msra.mxu0 %v915
      %1224 = vmatpush.msra.mxu0 %v899
      %1225 = vmatmul.f32.gmra.mxu0 %v1059
      %v1226 = vpop.f32.mrf.mxu0
      %v1227 = vadd.f32 %v1031, %v1226
      %1228 = vdwg.mxu0
      %1229 = vmatpush.msra.mxu0 0.0
      %1230 = vmatpush.msra.mxu0 0.0
      %1231 = vmatpush.msra.mxu0 0.0
      %1232 = vmatpush.msra.mxu0 0.0
      %1233 = vmatpush.msra.mxu0 0.0
      %1234 = vmatpush.msra.mxu0 0.0
      %1235 = vmatpush.msra.mxu0 0.0
      %1236 = vmatpush.msra.mxu0 0.0
      %1237 = vmatpush.msra.mxu0 %v1080
      %1238 = vmatpush.msra.mxu0 %v996
      %1239 = vmatpush.msra.mxu0 %v980
      %1240 = vmatpush.msra.mxu0 %v964
      %1241 = vmatpush.msra.mxu0 %v948
      %1242 = vmatpush.msra.mxu0 %v932
      %1243 = vmatpush.msra.mxu0 %v916
      %1244 = vmatpush.msra.mxu0 %v900
      %1245 = vmatmul.f32.gmra.mxu0 %v1059
      %v1246 = vpop.f32.mrf.mxu0
      %v1247 = vadd.f32 %v1032, %v1246
      %1248 = vdwg.mxu0
      %1249 = vmatpush.msra.mxu0 0.0
      %1250 = vmatpush.msra.mxu0 0.0
      %1251 = vmatpush.msra.mxu0 0.0
      %1252 = vmatpush.msra.mxu0 0.0
      %1253 = vmatpush.msra.mxu0 0.0
      %1254 = vmatpush.msra.mxu0 0.0
      %1255 = vmatpush.msra.mxu0 0.0
      %1256 = vmatpush.msra.mxu0 0.0
      %1257 = vmatpush.msra.mxu0 %v1083
      %1258 = vmatpush.msra.mxu0 %v997
      %1259 = vmatpush.msra.mxu0 %v981
      %1260 = vmatpush.msra.mxu0 %v965
      %1261 = vmatpush.msra.mxu0 %v949
      %1262 = vmatpush.msra.mxu0 %v933
      %1263 = vmatpush.msra.mxu0 %v917
      %1264 = vmatpush.msra.mxu0 %v901
      %1265 = vmatmul.f32.gmra.mxu0 %v1059
      %v1266 = vpop.f32.mrf.mxu0
      %v1267 = vadd.f32 %v1033, %v1266
      %1268 = vdwg.mxu0
      %1269 = vmatpush.msra.mxu0 0.0
      %1270 = vmatpush.msra.mxu0 0.0
      %1271 = vmatpush.msra.mxu0 0.0
      %1272 = vmatpush.msra.mxu0 0.0
      %1273 = vmatpush.msra.mxu0 0.0
      %1274 = vmatpush.msra.mxu0 0.0
      %1275 = vmatpush.msra.mxu0 0.0
      %1276 = vmatpush.msra.mxu0 0.0
      %1277 = vmatpush.msra.mxu0 %v1086
      %1278 = vmatpush.msra.mxu0 %v998
      %1279 = vmatpush.msra.mxu0 %v982
      %1280 = vmatpush.msra.mxu0 %v966
      %1281 = vmatpush.msra.mxu0 %v950
      %1282 = vmatpush.msra.mxu0 %v934
      %1283 = vmatpush.msra.mxu0 %v918
      %1284 = vmatpush.msra.mxu0 %v902
      %1285 = vmatmul.f32.gmra.mxu0 %v1059
      %v1286 = vpop.f32.mrf.mxu0
      %v1287 = vadd.f32 %v1034, %v1286
      %1288 = vdwg.mxu0
      %1289 = vmatpush.msra.mxu0 0.0
      %1290 = vmatpush.msra.mxu0 0.0
      %1291 = vmatpush.msra.mxu0 0.0
      %1292 = vmatpush.msra.mxu0 0.0
      %1293 = vmatpush.msra.mxu0 0.0
      %1294 = vmatpush.msra.mxu0 0.0
      %1295 = vmatpush.msra.mxu0 0.0
      %1296 = vmatpush.msra.mxu0 0.0
      %1297 = vmatpush.msra.mxu0 %v1089
      %1298 = vmatpush.msra.mxu0 %v999
      %1299 = vmatpush.msra.mxu0 %v983
      %1300 = vmatpush.msra.mxu0 %v967
      %1301 = vmatpush.msra.mxu0 %v951
      %1302 = vmatpush.msra.mxu0 %v935
      %1303 = vmatpush.msra.mxu0 %v919
      %1304 = vmatpush.msra.mxu0 %v903
      %1305 = vmatmul.f32.gmra.mxu0 %v1059
      %v1306 = vpop.f32.mrf.mxu0
      %v1307 = vadd.f32 %v1035, %v1306
      %1308 = vdwg.mxu0
      %1309 = vmatpush.msra.mxu0 0.0
      %1310 = vmatpush.msra.mxu0 0.0
      %1311 = vmatpush.msra.mxu0 0.0
      %1312 = vmatpush.msra.mxu0 0.0
      %1313 = vmatpush.msra.mxu0 0.0
      %1314 = vmatpush.msra.mxu0 0.0
      %1315 = vmatpush.msra.mxu0 0.0
      %1316 = vmatpush.msra.mxu0 0.0
      %1317 = vmatpush.msra.mxu0 %v1092
      %1318 = vmatpush.msra.mxu0 %v1000
      %1319 = vmatpush.msra.mxu0 %v984
      %1320 = vmatpush.msra.mxu0 %v968
      %1321 = vmatpush.msra.mxu0 %v952
      %1322 = vmatpush.msra.mxu0 %v936
      %1323 = vmatpush.msra.mxu0 %v920
      %1324 = vmatpush.msra.mxu0 %v904
      %1325 = vmatmul.f32.gmra.mxu0 %v1059
      %v1326 = vpop.f32.mrf.mxu0
      %v1327 = vadd.f32 %v1036, %v1326
      %1328 = vdwg.mxu0
      %1329 = vmatpush.msra.mxu0 0.0
      %1330 = vmatpush.msra.mxu0 0.0
      %1331 = vmatpush.msra.mxu0 0.0
      %1332 = vmatpush.msra.mxu0 0.0
      %1333 = vmatpush.msra.mxu0 0.0
      %1334 = vmatpush.msra.mxu0 0.0
      %1335 = vmatpush.msra.mxu0 0.0
      %1336 = vmatpush.msra.mxu0 0.0
      %1337 = vmatpush.msra.mxu0 %v1095
      %1338 = vmatpush.msra.mxu0 %v1001
      %1339 = vmatpush.msra.mxu0 %v985
      %1340 = vmatpush.msra.mxu0 %v969
      %1341 = vmatpush.msra.mxu0 %v953
      %1342 = vmatpush.msra.mxu0 %v937
      %1343 = vmatpush.msra.mxu0 %v921
      %1344 = vmatpush.msra.mxu0 %v905
      %1345 = vmatmul.f32.gmra.mxu0 %v1059
      %v1346 = vpop.f32.mrf.mxu0
      %v1347 = vadd.f32 %v1037, %v1346
      %1348 = vdwg.mxu0
      %1349 = vmatpush.msra.mxu0 0.0
      %1350 = vmatpush.msra.mxu0 0.0
      %1351 = vmatpush.msra.mxu0 0.0
      %1352 = vmatpush.msra.mxu0 0.0
      %1353 = vmatpush.msra.mxu0 0.0
      %1354 = vmatpush.msra.mxu0 0.0
      %1355 = vmatpush.msra.mxu0 0.0
      %1356 = vmatpush.msra.mxu0 0.0
      %1357 = vmatpush.msra.mxu0 %v1098
      %1358 = vmatpush.msra.mxu0 %v1002
      %1359 = vmatpush.msra.mxu0 %v986
      %1360 = vmatpush.msra.mxu0 %v970
      %1361 = vmatpush.msra.mxu0 %v954
      %1362 = vmatpush.msra.mxu0 %v938
      %1363 = vmatpush.msra.mxu0 %v922
      %1364 = vmatpush.msra.mxu0 %v906
      %1365 = vmatmul.f32.gmra.mxu0 %v1059
      %v1366 = vpop.f32.mrf.mxu0
      %v1367 = vadd.f32 %v1038, %v1366
      %1368 = vdwg.mxu0
      %1369 = vmatpush.msra.mxu0 0.0
      %1370 = vmatpush.msra.mxu0 0.0
      %1371 = vmatpush.msra.mxu0 0.0
      %1372 = vmatpush.msra.mxu0 0.0
      %1373 = vmatpush.msra.mxu0 0.0
      %1374 = vmatpush.msra.mxu0 0.0
      %1375 = vmatpush.msra.mxu0 0.0
      %1376 = vmatpush.msra.mxu0 0.0
      %1377 = vmatpush.msra.mxu0 %v1101
      %1378 = vmatpush.msra.mxu0 %v1003
      %1379 = vmatpush.msra.mxu0 %v987
      %1380 = vmatpush.msra.mxu0 %v971
      %1381 = vmatpush.msra.mxu0 %v955
      %1382 = vmatpush.msra.mxu0 %v939
      %1383 = vmatpush.msra.mxu0 %v923
      %1384 = vmatpush.msra.mxu0 %v907
      %1385 = vmatmul.f32.gmra.mxu0 %v1059
      %v1386 = vpop.f32.mrf.mxu0
      %v1387 = vadd.f32 %v1039, %v1386
      %1388 = vdwg.mxu0
      %1389 = vmatpush.msra.mxu0 0.0
      %1390 = vmatpush.msra.mxu0 0.0
      %1391 = vmatpush.msra.mxu0 0.0
      %1392 = vmatpush.msra.mxu0 0.0
      %1393 = vmatpush.msra.mxu0 0.0
      %1394 = vmatpush.msra.mxu0 0.0
      %1395 = vmatpush.msra.mxu0 0.0
      %1396 = vmatpush.msra.mxu0 0.0
      %1397 = vmatpush.msra.mxu0 %v1104
      %1398 = vmatpush.msra.mxu0 %v1004
      %1399 = vmatpush.msra.mxu0 %v988
      %1400 = vmatpush.msra.mxu0 %v972
      %1401 = vmatpush.msra.mxu0 %v956
      %1402 = vmatpush.msra.mxu0 %v940
      %1403 = vmatpush.msra.mxu0 %v924
      %1404 = vmatpush.msra.mxu0 %v908
      %1405 = vmatmul.f32.gmra.mxu0 %v1059
      %v1406 = vpop.f32.mrf.mxu0
      %v1407 = vadd.f32 %v1040, %v1406
      %1408 = vdwg.mxu0
      %1409 = vmatpush.msra.mxu0 0.0
      %1410 = vmatpush.msra.mxu0 0.0
      %1411 = vmatpush.msra.mxu0 0.0
      %1412 = vmatpush.msra.mxu0 0.0
      %1413 = vmatpush.msra.mxu0 0.0
      %1414 = vmatpush.msra.mxu0 0.0
      %1415 = vmatpush.msra.mxu0 0.0
      %1416 = vmatpush.msra.mxu0 0.0
      %1417 = vmatpush.msra.mxu0 %v1107
      %1418 = vmatpush.msra.mxu0 %v1005
      %1419 = vmatpush.msra.mxu0 %v989
      %1420 = vmatpush.msra.mxu0 %v973
      %1421 = vmatpush.msra.mxu0 %v957
      %1422 = vmatpush.msra.mxu0 %v941
      %1423 = vmatpush.msra.mxu0 %v925
      %1424 = vmatpush.msra.mxu0 %v909
      %1425 = vmatmul.f32.gmra.mxu0 %v1059
      %v1426 = vpop.f32.mrf.mxu0
      %v1427 = vadd.f32 %v1041, %v1426
      %1428 = vdwg.mxu0
      %v1429 = vmax.f32 %v1127, 0.0
      %v1430 = vmax.f32 %v1147, 0.0
      %v1431 = vmax.f32 %v1167, 0.0
      %v1432 = vmax.f32 %v1187, 0.0
      %v1433 = vmax.f32 %v1207, 0.0
      %v1434 = vmax.f32 %v1227, 0.0
      %v1435 = vmax.f32 %v1247, 0.0
      %v1436 = vmax.f32 %v1267, 0.0
      %v1437 = vmax.f32 %v1287, 0.0
      %v1438 = vmax.f32 %v1307, 0.0
      %v1439 = vmax.f32 %v1327, 0.0
      %v1440 = vmax.f32 %v1347, 0.0
      %v1441 = vmax.f32 %v1367, 0.0
      %v1442 = vmax.f32 %v1387, 0.0
      %v1443 = vmax.f32 %v1407, 0.0
      %v1444 = vmax.f32 %v1427, 0.0
      %v1445 = vld [vmem:[%s4] sm:$0xff]
      %v1446 = vld [vmem:[%s4 + $0x8] sm:$0xff]
      %v1447 = vld [vmem:[%s4 + $0x10] sm:$0xff]
      %v1448 = vld [vmem:[%s4 + $0x18] sm:$0xff]
      %v1449 = vld [vmem:[%s4 + $0x20] sm:$0xff]
      %v1450 = vld [vmem:[%s4 + $0x28] sm:$0xff]
      %v1451 = vld [vmem:[%s4 + $0x30] sm:$0xff]
      %v1452 = vld [vmem:[%s4 + $0x38] sm:$0xff]
      %v1453 = vld [vmem:[%s4 + $0x40] sm:$0xff]
      %v1454 = vld [vmem:[%s4 + $0x48] sm:$0xff]
      %v1455 = vld [vmem:[%s4 + $0x50] sm:$0xff]
      %v1456 = vld [vmem:[%s4 + $0x58] sm:$0xff]
      %v1457 = vld [vmem:[%s4 + $0x60] sm:$0xff]
      %v1458 = vld [vmem:[%s4 + $0x68] sm:$0xff]
      %v1459 = vld [vmem:[%s4 + $0x70] sm:$0xff]
      %v1460 = vld [vmem:[%s4 + $0x78] sm:$0xff]
      %v1461 = vld [vmem:[%s4 + $0x80] sm:$0xff]
      %v1462 = vld [vmem:[%s4 + $0x88] sm:$0xff]
      %v1463 = vld [vmem:[%s4 + $0x90] sm:$0xff]
      %v1464 = vld [vmem:[%s4 + $0x98] sm:$0xff]
      %v1465 = vld [vmem:[%s4 + $0xa0] sm:$0xff]
      %v1466 = vld [vmem:[%s4 + $0xa8] sm:$0xff]
      %v1467 = vld [vmem:[%s4 + $0xb0] sm:$0xff]
      %v1468 = vld [vmem:[%s4 + $0xb8] sm:$0xff]
      %v1469 = vld [vmem:[%s4 + $0xc0] sm:$0xff]
      %v1470 = vld [vmem:[%s4 + $0xc8] sm:$0xff]
      %v1471 = vld [vmem:[%s4 + $0xd0] sm:$0xff]
      %v1472 = vld [vmem:[%s4 + $0xd8] sm:$0xff]
      %v1473 = vld [vmem:[%s4 + $0xe0] sm:$0xff]
      %v1474 = vld [vmem:[%s4 + $0xe8] sm:$0xff]
      %v1475 = vld [vmem:[%s4 + $0xf0] sm:$0xff]
      %v1476 = vld [vmem:[%s4 + $0xf8] sm:$0xff]
      %v1477 = vld [vmem:[%s4 + $0x100] sm:$0xff]
      %v1478 = vld [vmem:[%s4 + $0x108] sm:$0xff]
      %v1479 = vld [vmem:[%s4 + $0x110] sm:$0xff]
      %v1480 = vld [vmem:[%s4 + $0x118] sm:$0xff]
      %v1481 = vld [vmem:[%s4 + $0x120] sm:$0xff]
      %v1482 = vld [vmem:[%s4 + $0x128] sm:$0xff]
      %v1483 = vld [vmem:[%s4 + $0x130] sm:$0xff]
      %v1484 = vld [vmem:[%s4 + $0x138] sm:$0xff]
      %v1485 = vld [vmem:[%s4 + $0x140] sm:$0xff]
      %v1486 = vld [vmem:[%s4 + $0x148] sm:$0xff]
      %v1487 = vld [vmem:[%s4 + $0x150] sm:$0xff]
      %v1488 = vld [vmem:[%s4 + $0x158] sm:$0xff]
      %v1489 = vld [vmem:[%s4 + $0x160] sm:$0xff]
      %v1490 = vld [vmem:[%s4 + $0x168] sm:$0xff]
      %v1491 = vld [vmem:[%s4 + $0x170] sm:$0xff]
      %v1492 = vld [vmem:[%s4 + $0x178] sm:$0xff]
      %v1493 = vld [vmem:[%s4 + $0x180] sm:$0xff]
      %v1494 = vld [vmem:[%s4 + $0x188] sm:$0xff]
      %v1495 = vld [vmem:[%s4 + $0x190] sm:$0xff]
      %v1496 = vld [vmem:[%s4 + $0x198] sm:$0xff]
      %v1497 = vld [vmem:[%s4 + $0x1a0] sm:$0xff]
      %v1498 = vld [vmem:[%s4 + $0x1a8] sm:$0xff]
      %v1499 = vld [vmem:[%s4 + $0x1b0] sm:$0xff]
      %v1500 = vld [vmem:[%s4 + $0x1b8] sm:$0xff]
      %v1501 = vld [vmem:[%s4 + $0x1c0] sm:$0xff]
      %v1502 = vld [vmem:[%s4 + $0x1c8] sm:$0xff]
      %v1503 = vld [vmem:[%s4 + $0x1d0] sm:$0xff]
      %v1504 = vld [vmem:[%s4 + $0x1d8] sm:$0xff]
      %v1505 = vld [vmem:[%s4 + $0x1e0] sm:$0xff]
      %v1506 = vld [vmem:[%s4 + $0x1e8] sm:$0xff]
      %v1507 = vld [vmem:[%s4 + $0x1f0] sm:$0xff]
      %v1508 = vld [vmem:[%s4 + $0x1f8] sm:$0xff]
      %v1509 = vld [vmem:[%s4 + $0x200] sm:$0xff]
      %v1510 = vld [vmem:[%s4 + $0x208] sm:$0xff]
      %v1511 = vld [vmem:[%s4 + $0x210] sm:$0xff]
      %v1512 = vld [vmem:[%s4 + $0x218] sm:$0xff]
      %v1513 = vld [vmem:[%s4 + $0x220] sm:$0xff]
      %v1514 = vld [vmem:[%s4 + $0x228] sm:$0xff]
      %v1515 = vld [vmem:[%s4 + $0x230] sm:$0xff]
      %v1516 = vld [vmem:[%s4 + $0x238] sm:$0xff]
      %v1517 = vld [vmem:[%s4 + $0x240] sm:$0xff]
      %v1518 = vld [vmem:[%s4 + $0x248] sm:$0xff]
      %v1519 = vld [vmem:[%s4 + $0x250] sm:$0xff]
      %v1520 = vld [vmem:[%s4 + $0x258] sm:$0xff]
      %v1521 = vld [vmem:[%s4 + $0x260] sm:$0xff]
      %v1522 = vld [vmem:[%s4 + $0x268] sm:$0xff]
      %v1523 = vld [vmem:[%s4 + $0x270] sm:$0xff]
      %v1524 = vld [vmem:[%s4 + $0x278] sm:$0xff]
      %v1525 = vld [vmem:[%s4 + $0x280] sm:$0xff]
      %v1526 = vld [vmem:[%s4 + $0x288] sm:$0xff]
      %v1527 = vld [vmem:[%s4 + $0x290] sm:$0xff]
      %v1528 = vld [vmem:[%s4 + $0x298] sm:$0xff]
      %v1529 = vld [vmem:[%s4 + $0x2a0] sm:$0xff]
      %v1530 = vld [vmem:[%s4 + $0x2a8] sm:$0xff]
      %v1531 = vld [vmem:[%s4 + $0x2b0] sm:$0xff]
      %v1532 = vld [vmem:[%s4 + $0x2b8] sm:$0xff]
      %v1533 = vld [vmem:[%s4 + $0x2c0] sm:$0xff]
      %v1534 = vld [vmem:[%s4 + $0x2c8] sm:$0xff]
      %v1535 = vld [vmem:[%s4 + $0x2d0] sm:$0xff]
      %v1536 = vld [vmem:[%s4 + $0x2d8] sm:$0xff]
      %v1537 = vld [vmem:[%s4 + $0x2e0] sm:$0xff]
      %v1538 = vld [vmem:[%s4 + $0x2e8] sm:$0xff]
      %v1539 = vld [vmem:[%s4 + $0x2f0] sm:$0xff]
      %v1540 = vld [vmem:[%s4 + $0x2f8] sm:$0xff]
      %v1541 = vld [vmem:[%s4 + $0x300] sm:$0xff]
      %v1542 = vld [vmem:[%s4 + $0x308] sm:$0xff]
      %v1543 = vld [vmem:[%s4 + $0x310] sm:$0xff]
      %v1544 = vld [vmem:[%s4 + $0x318] sm:$0xff]
      %v1545 = vld [vmem:[%s4 + $0x320] sm:$0xff]
      %v1546 = vld [vmem:[%s4 + $0x328] sm:$0xff]
      %v1547 = vld [vmem:[%s4 + $0x330] sm:$0xff]
      %v1548 = vld [vmem:[%s4 + $0x338] sm:$0xff]
      %v1549 = vld [vmem:[%s4 + $0x340] sm:$0xff]
      %v1550 = vld [vmem:[%s4 + $0x348] sm:$0xff]
      %v1551 = vld [vmem:[%s4 + $0x350] sm:$0xff]
      %v1552 = vld [vmem:[%s4 + $0x358] sm:$0xff]
      %v1553 = vld [vmem:[%s4 + $0x360] sm:$0xff]
      %v1554 = vld [vmem:[%s4 + $0x368] sm:$0xff]
      %v1555 = vld [vmem:[%s4 + $0x370] sm:$0xff]
      %v1556 = vld [vmem:[%s4 + $0x378] sm:$0xff]
      %v1557 = vld [vmem:[%s4 + $0x380] sm:$0xff]
      %v1558 = vld [vmem:[%s4 + $0x388] sm:$0xff]
      %v1559 = vld [vmem:[%s4 + $0x390] sm:$0xff]
      %v1560 = vld [vmem:[%s4 + $0x398] sm:$0xff]
      %v1561 = vld [vmem:[%s4 + $0x3a0] sm:$0xff]
      %v1562 = vld [vmem:[%s4 + $0x3a8] sm:$0xff]
      %v1563 = vld [vmem:[%s4 + $0x3b0] sm:$0xff]
      %v1564 = vld [vmem:[%s4 + $0x3b8] sm:$0xff]
      %v1565 = vld [vmem:[%s4 + $0x3c0] sm:$0xff]
      %v1566 = vld [vmem:[%s4 + $0x3c8] sm:$0xff]
      %v1567 = vld [vmem:[%s4 + $0x3d0] sm:$0xff]
      %v1568 = vld [vmem:[%s4 + $0x3d8] sm:$0xff]
      %v1569 = vld [vmem:[%s4 + $0x3e0] sm:$0xff]
      %v1570 = vld [vmem:[%s4 + $0x3e8] sm:$0xff]
      %v1571 = vld [vmem:[%s4 + $0x3f0] sm:$0xff]
      %v1572 = vld [vmem:[%s4 + $0x3f8] sm:$0xff]
      %v1573 = vld [vmem:[%s4 + $0x400] sm:$0xff]
      %v1574 = vld [vmem:[%s4 + $0x408] sm:$0xff]
      %v1575 = vld [vmem:[%s4 + $0x410] sm:$0xff]
      %v1576 = vld [vmem:[%s4 + $0x418] sm:$0xff]
      %v1577 = vld [vmem:[%s4 + $0x420] sm:$0xff]
      %v1578 = vld [vmem:[%s4 + $0x428] sm:$0xff]
      %v1579 = vld [vmem:[%s4 + $0x430] sm:$0xff]
      %v1580 = vld [vmem:[%s4 + $0x438] sm:$0xff]
      %v1581 = vld [vmem:[%s4 + $0x440] sm:$0xff]
      %v1582 = vld [vmem:[%s4 + $0x448] sm:$0xff]
      %v1583 = vld [vmem:[%s4 + $0x450] sm:$0xff]
      %v1584 = vld [vmem:[%s4 + $0x458] sm:$0xff]
      %v1585 = vld [vmem:[%s4 + $0x460] sm:$0xff]
      %v1586 = vld [vmem:[%s4 + $0x468] sm:$0xff]
      %v1587 = vld [vmem:[%s4 + $0x470] sm:$0xff]
      %v1588 = vld [vmem:[%s4 + $0x478] sm:$0xff]
      %v1589 = vld [vmem:[%s4 + $0x480] sm:$0xff]
      %v1590 = vld [vmem:[%s4 + $0x488] sm:$0xff]
      %v1591 = vld [vmem:[%s4 + $0x490] sm:$0xff]
      %v1592 = vld [vmem:[%s4 + $0x498] sm:$0xff]
      %v1593 = vld [vmem:[%s4 + $0x4a0] sm:$0xff]
      %v1594 = vld [vmem:[%s4 + $0x4a8] sm:$0xff]
      %v1595 = vld [vmem:[%s4 + $0x4b0] sm:$0xff]
      %v1596 = vld [vmem:[%s4 + $0x4b8] sm:$0xff]
      %v1597 = vld [vmem:[%s4 + $0x4c0] sm:$0xff]
      %v1598 = vld [vmem:[%s4 + $0x4c8] sm:$0xff]
      %v1599 = vld [vmem:[%s4 + $0x4d0] sm:$0xff]
      %v1600 = vld [vmem:[%s4 + $0x4d8] sm:$0xff]
      %v1601 = vld [vmem:[%s4 + $0x4e0] sm:$0xff]
      %v1602 = vld [vmem:[%s4 + $0x4e8] sm:$0xff]
      %v1603 = vld [vmem:[%s4 + $0x4f0] sm:$0xff]
      %v1604 = vld [vmem:[%s4 + $0x4f8] sm:$0xff]
      %v1605 = vld [vmem:[%s4 + $0x500] sm:$0xff]
      %v1606 = vld [vmem:[%s4 + $0x508] sm:$0xff]
      %v1607 = vld [vmem:[%s4 + $0x510] sm:$0xff]
      %v1608 = vld [vmem:[%s4 + $0x518] sm:$0xff]
      %v1609 = vld [vmem:[%s4 + $0x520] sm:$0xff]
      %v1610 = vld [vmem:[%s4 + $0x528] sm:$0xff]
      %v1611 = vld [vmem:[%s4 + $0x530] sm:$0xff]
      %v1612 = vld [vmem:[%s4 + $0x538] sm:$0xff]
      %v1613 = vld [vmem:[%s4 + $0x540] sm:$0xff]
      %v1614 = vld [vmem:[%s4 + $0x548] sm:$0xff]
      %v1615 = vld [vmem:[%s4 + $0x550] sm:$0xff]
      %v1616 = vld [vmem:[%s4 + $0x558] sm:$0xff]
      %v1617 = vld [vmem:[%s4 + $0x560] sm:$0xff]
      %v1618 = vld [vmem:[%s4 + $0x568] sm:$0xff]
      %v1619 = vld [vmem:[%s4 + $0x570] sm:$0xff]
      %v1620 = vld [vmem:[%s4 + $0x578] sm:$0xff]
      %v1621 = vld [vmem:[%s4 + $0x580] sm:$0xff]
      %v1622 = vld [vmem:[%s4 + $0x588] sm:$0xff]
      %v1623 = vld [vmem:[%s4 + $0x590] sm:$0xff]
      %v1624 = vld [vmem:[%s4 + $0x598] sm:$0xff]
      %v1625 = vld [vmem:[%s4 + $0x5a0] sm:$0xff]
      %v1626 = vld [vmem:[%s4 + $0x5a8] sm:$0xff]
      %v1627 = vld [vmem:[%s4 + $0x5b0] sm:$0xff]
      %v1628 = vld [vmem:[%s4 + $0x5b8] sm:$0xff]
      %v1629 = vld [vmem:[%s4 + $0x5c0] sm:$0xff]
      %v1630 = vld [vmem:[%s4 + $0x5c8] sm:$0xff]
      %v1631 = vld [vmem:[%s4 + $0x5d0] sm:$0xff]
      %v1632 = vld [vmem:[%s4 + $0x5d8] sm:$0xff]
      %v1633 = vld [vmem:[%s4 + $0x5e0] sm:$0xff]
      %v1634 = vld [vmem:[%s4 + $0x5e8] sm:$0xff]
      %v1635 = vld [vmem:[%s4 + $0x5f0] sm:$0xff]
      %v1636 = vld [vmem:[%s4 + $0x5f8] sm:$0xff]
      %v1637 = vld [vmem:[%s4 + $0x600] sm:$0xff]
      %v1638 = vld [vmem:[%s4 + $0x608] sm:$0xff]
      %v1639 = vld [vmem:[%s4 + $0x610] sm:$0xff]
      %v1640 = vld [vmem:[%s4 + $0x618] sm:$0xff]
      %v1641 = vld [vmem:[%s4 + $0x620] sm:$0xff]
      %v1642 = vld [vmem:[%s4 + $0x628] sm:$0xff]
      %v1643 = vld [vmem:[%s4 + $0x630] sm:$0xff]
      %v1644 = vld [vmem:[%s4 + $0x638] sm:$0xff]
      %v1645 = vld [vmem:[%s4 + $0x640] sm:$0xff]
      %v1646 = vld [vmem:[%s4 + $0x648] sm:$0xff]
      %v1647 = vld [vmem:[%s4 + $0x650] sm:$0xff]
      %v1648 = vld [vmem:[%s4 + $0x658] sm:$0xff]
      %v1649 = vld [vmem:[%s4 + $0x660] sm:$0xff]
      %v1650 = vld [vmem:[%s4 + $0x668] sm:$0xff]
      %v1651 = vld [vmem:[%s4 + $0x670] sm:$0xff]
      %v1652 = vld [vmem:[%s4 + $0x678] sm:$0xff]
      %v1653 = vld [vmem:[%s4 + $0x680] sm:$0xff]
      %v1654 = vld [vmem:[%s4 + $0x688] sm:$0xff]
      %v1655 = vld [vmem:[%s4 + $0x690] sm:$0xff]
      %v1656 = vld [vmem:[%s4 + $0x698] sm:$0xff]
      %v1657 = vld [vmem:[%s4 + $0x6a0] sm:$0xff]
      %v1658 = vld [vmem:[%s4 + $0x6a8] sm:$0xff]
      %v1659 = vld [vmem:[%s4 + $0x6b0] sm:$0xff]
      %v1660 = vld [vmem:[%s4 + $0x6b8] sm:$0xff]
      %v1661 = vld [vmem:[%s4 + $0x6c0] sm:$0xff]
      %v1662 = vld [vmem:[%s4 + $0x6c8] sm:$0xff]
      %v1663 = vld [vmem:[%s4 + $0x6d0] sm:$0xff]
      %v1664 = vld [vmem:[%s4 + $0x6d8] sm:$0xff]
      %v1665 = vld [vmem:[%s4 + $0x6e0] sm:$0xff]
      %v1666 = vld [vmem:[%s4 + $0x6e8] sm:$0xff]
      %v1667 = vld [vmem:[%s4 + $0x6f0] sm:$0xff]
      %v1668 = vld [vmem:[%s4 + $0x6f8] sm:$0xff]
      %v1669 = vld [vmem:[%s4 + $0x700] sm:$0xff]
      %v1670 = vld [vmem:[%s4 + $0x708] sm:$0xff]
      %v1671 = vld [vmem:[%s4 + $0x710] sm:$0xff]
      %v1672 = vld [vmem:[%s4 + $0x718] sm:$0xff]
      %v1673 = vld [vmem:[%s4 + $0x720] sm:$0xff]
      %v1674 = vld [vmem:[%s4 + $0x728] sm:$0xff]
      %v1675 = vld [vmem:[%s4 + $0x730] sm:$0xff]
      %v1676 = vld [vmem:[%s4 + $0x738] sm:$0xff]
      %v1677 = vld [vmem:[%s4 + $0x740] sm:$0xff]
      %v1678 = vld [vmem:[%s4 + $0x748] sm:$0xff]
      %v1679 = vld [vmem:[%s4 + $0x750] sm:$0xff]
      %v1680 = vld [vmem:[%s4 + $0x758] sm:$0xff]
      %v1681 = vld [vmem:[%s4 + $0x760] sm:$0xff]
      %v1682 = vld [vmem:[%s4 + $0x768] sm:$0xff]
      %v1683 = vld [vmem:[%s4 + $0x770] sm:$0xff]
      %v1684 = vld [vmem:[%s4 + $0x778] sm:$0xff]
      %v1685 = vld [vmem:[%s4 + $0x780] sm:$0xff]
      %v1686 = vld [vmem:[%s4 + $0x788] sm:$0xff]
      %v1687 = vld [vmem:[%s4 + $0x790] sm:$0xff]
      %v1688 = vld [vmem:[%s4 + $0x798] sm:$0xff]
      %v1689 = vld [vmem:[%s4 + $0x7a0] sm:$0xff]
      %v1690 = vld [vmem:[%s4 + $0x7a8] sm:$0xff]
      %v1691 = vld [vmem:[%s4 + $0x7b0] sm:$0xff]
      %v1692 = vld [vmem:[%s4 + $0x7b8] sm:$0xff]
      %v1693 = vld [vmem:[%s4 + $0x7c0] sm:$0xff]
      %v1694 = vld [vmem:[%s4 + $0x7c8] sm:$0xff]
      %v1695 = vld [vmem:[%s4 + $0x7d0] sm:$0xff]
      %v1696 = vld [vmem:[%s4 + $0x7d8] sm:$0xff]
      %v1697 = vld [vmem:[%s4 + $0x7e0] sm:$0xff]
      %v1698 = vld [vmem:[%s4 + $0x7e8] sm:$0xff]
      %v1699 = vld [vmem:[%s4 + $0x7f0] sm:$0xff]
      %v1700 = vld [vmem:[%s4 + $0x7f8] sm:$0xff]
      %v1701 = vperm.slane %v331, 4
      %1702 = vmatpush.msra.mxu0 %v1460
      %1703 = vmatpush.msra.mxu0 %v1459
      %1704 = vmatpush.msra.mxu0 %v1458
      %1705 = vmatpush.msra.mxu0 %v1457
      %1706 = vmatpush.msra.mxu0 %v1456
      %1707 = vmatpush.msra.mxu0 %v1455
      %1708 = vmatpush.msra.mxu0 %v1454
      %1709 = vmatpush.msra.mxu0 %v1453
      %1710 = vmatpush.msra.mxu0 %v1452
      %1711 = vmatpush.msra.mxu0 %v1451
      %1712 = vmatpush.msra.mxu0 %v1450
      %1713 = vmatpush.msra.mxu0 %v1449
      %1714 = vmatpush.msra.mxu0 %v1448
      %1715 = vmatpush.msra.mxu0 %v1447
      %1716 = vmatpush.msra.mxu0 %v1446
      %1717 = vmatpush.msra.mxu0 %v1445
      %1718 = vmatmul.f32.gmra.mxu0 %v1429
      %v1719 = vpop.f32.mrf.mxu0
      %v1720 = vadd.f32 %v1701, %v1719
      %1721 = vdwg.mxu0
      %1722 = vmatpush.msra.mxu0 %v1476
      %1723 = vmatpush.msra.mxu0 %v1475
      %1724 = vmatpush.msra.mxu0 %v1474
      %1725 = vmatpush.msra.mxu0 %v1473
      %1726 = vmatpush.msra.mxu0 %v1472
      %1727 = vmatpush.msra.mxu0 %v1471
      %1728 = vmatpush.msra.mxu0 %v1470
      %1729 = vmatpush.msra.mxu0 %v1469
      %1730 = vmatpush.msra.mxu0 %v1468
      %1731 = vmatpush.msra.mxu0 %v1467
      %1732 = vmatpush.msra.mxu0 %v1466
      %1733 = vmatpush.msra.mxu0 %v1465
      %1734 = vmatpush.msra.mxu0 %v1464
      %1735 = vmatpush.msra.mxu0 %v1463
      %1736 = vmatpush.msra.mxu0 %v1462
      %1737 = vmatpush.msra.mxu0 %v1461
      %1738 = vmatmul.f32.gmra.mxu0 %v1430
      %v1739 = vpop.f32.mrf.mxu0
      %v1740 = vadd.f32 %v1720, %v1739
      %1741 = vdwg.mxu0
      %1742 = vmatpush.msra.mxu0 %v1492
      %1743 = vmatpush.msra.mxu0 %v1491
      %1744 = vmatpush.msra.mxu0 %v1490
      %1745 = vmatpush.msra.mxu0 %v1489
      %1746 = vmatpush.msra.mxu0 %v1488
      %1747 = vmatpush.msra.mxu0 %v1487
      %1748 = vmatpush.msra.mxu0 %v1486
      %1749 = vmatpush.msra.mxu0 %v1485
      %1750 = vmatpush.msra.mxu0 %v1484
      %1751 = vmatpush.msra.mxu0 %v1483
      %1752 = vmatpush.msra.mxu0 %v1482
      %1753 = vmatpush.msra.mxu0 %v1481
      %1754 = vmatpush.msra.mxu0 %v1480
      %1755 = vmatpush.msra.mxu0 %v1479
      %1756 = vmatpush.msra.mxu0 %v1478
      %1757 = vmatpush.msra.mxu0 %v1477
      %1758 = vmatmul.f32.gmra.mxu0 %v1431
      %v1759 = vpop.f32.mrf.mxu0
      %v1760 = vadd.f32 %v1740, %v1759
      %1761 = vdwg.mxu0
      %1762 = vmatpush.msra.mxu0 %v1508
      %1763 = vmatpush.msra.mxu0 %v1507
      %1764 = vmatpush.msra.mxu0 %v1506
      %1765 = vmatpush.msra.mxu0 %v1505
      %1766 = vmatpush.msra.mxu0 %v1504
      %1767 = vmatpush.msra.mxu0 %v1503
      %1768 = vmatpush.msra.mxu0 %v1502
      %1769 = vmatpush.msra.mxu0 %v1501
      %1770 = vmatpush.msra.mxu0 %v1500
      %1771 = vmatpush.msra.mxu0 %v1499
      %1772 = vmatpush.msra.mxu0 %v1498
      %1773 = vmatpush.msra.mxu0 %v1497
      %1774 = vmatpush.msra.mxu0 %v1496
      %1775 = vmatpush.msra.mxu0 %v1495
      %1776 = vmatpush.msra.mxu0 %v1494
      %1777 = vmatpush.msra.mxu0 %v1493
      %1778 = vmatmul.f32.gmra.mxu0 %v1432
      %v1779 = vpop.f32.mrf.mxu0
      %v1780 = vadd.f32 %v1760, %v1779
      %1781 = vdwg.mxu0
      %1782 = vmatpush.msra.mxu0 %v1524
      %1783 = vmatpush.msra.mxu0 %v1523
      %1784 = vmatpush.msra.mxu0 %v1522
      %1785 = vmatpush.msra.mxu0 %v1521
      %1786 = vmatpush.msra.mxu0 %v1520
      %1787 = vmatpush.msra.mxu0 %v1519
      %1788 = vmatpush.msra.mxu0 %v1518
      %1789 = vmatpush.msra.mxu0 %v1517
      %1790 = vmatpush.msra.mxu0 %v1516
      %1791 = vmatpush.msra.mxu0 %v1515
      %1792 = vmatpush.msra.mxu0 %v1514
      %1793 = vmatpush.msra.mxu0 %v1513
      %1794 = vmatpush.msra.mxu0 %v1512
      %1795 = vmatpush.msra.mxu0 %v1511
      %1796 = vmatpush.msra.mxu0 %v1510
      %1797 = vmatpush.msra.mxu0 %v1509
      %1798 = vmatmul.f32.gmra.mxu0 %v1433
      %v1799 = vpop.f32.mrf.mxu0
      %v1800 = vadd.f32 %v1780, %v1799
      %1801 = vdwg.mxu0
      %1802 = vmatpush.msra.mxu0 %v1540
      %1803 = vmatpush.msra.mxu0 %v1539
      %1804 = vmatpush.msra.mxu0 %v1538
      %1805 = vmatpush.msra.mxu0 %v1537
      %1806 = vmatpush.msra.mxu0 %v1536
      %1807 = vmatpush.msra.mxu0 %v1535
      %1808 = vmatpush.msra.mxu0 %v1534
      %1809 = vmatpush.msra.mxu0 %v1533
      %1810 = vmatpush.msra.mxu0 %v1532
      %1811 = vmatpush.msra.mxu0 %v1531
      %1812 = vmatpush.msra.mxu0 %v1530
      %1813 = vmatpush.msra.mxu0 %v1529
      %1814 = vmatpush.msra.mxu0 %v1528
      %1815 = vmatpush.msra.mxu0 %v1527
      %1816 = vmatpush.msra.mxu0 %v1526
      %1817 = vmatpush.msra.mxu0 %v1525
      %1818 = vmatmul.f32.gmra.mxu0 %v1434
      %v1819 = vpop.f32.mrf.mxu0
      %v1820 = vadd.f32 %v1800, %v1819
      %1821 = vdwg.mxu0
      %1822 = vmatpush.msra.mxu0 %v1556
      %1823 = vmatpush.msra.mxu0 %v1555
      %1824 = vmatpush.msra.mxu0 %v1554
      %1825 = vmatpush.msra.mxu0 %v1553
      %1826 = vmatpush.msra.mxu0 %v1552
      %1827 = vmatpush.msra.mxu0 %v1551
      %1828 = vmatpush.msra.mxu0 %v1550
      %1829 = vmatpush.msra.mxu0 %v1549
      %1830 = vmatpush.msra.mxu0 %v1548
      %1831 = vmatpush.msra.mxu0 %v1547
      %1832 = vmatpush.msra.mxu0 %v1546
      %1833 = vmatpush.msra.mxu0 %v1545
      %1834 = vmatpush.msra.mxu0 %v1544
      %1835 = vmatpush.msra.mxu0 %v1543
      %1836 = vmatpush.msra.mxu0 %v1542
      %1837 = vmatpush.msra.mxu0 %v1541
      %1838 = vmatmul.f32.gmra.mxu0 %v1435
      %v1839 = vpop.f32.mrf.mxu0
      %v1840 = vadd.f32 %v1820, %v1839
      %1841 = vdwg.mxu0
      %1842 = vmatpush.msra.mxu0 %v1572
      %1843 = vmatpush.msra.mxu0 %v1571
      %1844 = vmatpush.msra.mxu0 %v1570
      %1845 = vmatpush.msra.mxu0 %v1569
      %1846 = vmatpush.msra.mxu0 %v1568
      %1847 = vmatpush.msra.mxu0 %v1567
      %1848 = vmatpush.msra.mxu0 %v1566
      %1849 = vmatpush.msra.mxu0 %v1565
      %1850 = vmatpush.msra.mxu0 %v1564
      %1851 = vmatpush.msra.mxu0 %v1563
      %1852 = vmatpush.msra.mxu0 %v1562
      %1853 = vmatpush.msra.mxu0 %v1561
      %1854 = vmatpush.msra.mxu0 %v1560
      %1855 = vmatpush.msra.mxu0 %v1559
      %1856 = vmatpush.msra.mxu0 %v1558
      %1857 = vmatpush.msra.mxu0 %v1557
      %1858 = vmatmul.f32.gmra.mxu0 %v1436
      %v1859 = vpop.f32.mrf.mxu0
      %v1860 = vadd.f32 %v1840, %v1859
      %1861 = vdwg.mxu0
      %1862 = vmatpush.msra.mxu0 %v1588
      %1863 = vmatpush.msra.mxu0 %v1587
      %1864 = vmatpush.msra.mxu0 %v1586
      %1865 = vmatpush.msra.mxu0 %v1585
      %1866 = vmatpush.msra.mxu0 %v1584
      %1867 = vmatpush.msra.mxu0 %v1583
      %1868 = vmatpush.msra.mxu0 %v1582
      %1869 = vmatpush.msra.mxu0 %v1581
      %1870 = vmatpush.msra.mxu0 %v1580
      %1871 = vmatpush.msra.mxu0 %v1579
      %1872 = vmatpush.msra.mxu0 %v1578
      %1873 = vmatpush.msra.mxu0 %v1577
      %1874 = vmatpush.msra.mxu0 %v1576
      %1875 = vmatpush.msra.mxu0 %v1575
      %1876 = vmatpush.msra.mxu0 %v1574
      %1877 = vmatpush.msra.mxu0 %v1573
      %1878 = vmatmul.f32.gmra.mxu0 %v1437
      %v1879 = vpop.f32.mrf.mxu0
      %v1880 = vadd.f32 %v1860, %v1879
      %1881 = vdwg.mxu0
      %1882 = vmatpush.msra.mxu0 %v1604
      %1883 = vmatpush.msra.mxu0 %v1603
      %1884 = vmatpush.msra.mxu0 %v1602
      %1885 = vmatpush.msra.mxu0 %v1601
      %1886 = vmatpush.msra.mxu0 %v1600
      %1887 = vmatpush.msra.mxu0 %v1599
      %1888 = vmatpush.msra.mxu0 %v1598
      %1889 = vmatpush.msra.mxu0 %v1597
      %1890 = vmatpush.msra.mxu0 %v1596
      %1891 = vmatpush.msra.mxu0 %v1595
      %1892 = vmatpush.msra.mxu0 %v1594
      %1893 = vmatpush.msra.mxu0 %v1593
      %1894 = vmatpush.msra.mxu0 %v1592
      %1895 = vmatpush.msra.mxu0 %v1591
      %1896 = vmatpush.msra.mxu0 %v1590
      %1897 = vmatpush.msra.mxu0 %v1589
      %1898 = vmatmul.f32.gmra.mxu0 %v1438
      %v1899 = vpop.f32.mrf.mxu0
      %v1900 = vadd.f32 %v1880, %v1899
      %1901 = vdwg.mxu0
      %1902 = vmatpush.msra.mxu0 %v1620
      %1903 = vmatpush.msra.mxu0 %v1619
      %1904 = vmatpush.msra.mxu0 %v1618
      %1905 = vmatpush.msra.mxu0 %v1617
      %1906 = vmatpush.msra.mxu0 %v1616
      %1907 = vmatpush.msra.mxu0 %v1615
      %1908 = vmatpush.msra.mxu0 %v1614
      %1909 = vmatpush.msra.mxu0 %v1613
      %1910 = vmatpush.msra.mxu0 %v1612
      %1911 = vmatpush.msra.mxu0 %v1611
      %1912 = vmatpush.msra.mxu0 %v1610
      %1913 = vmatpush.msra.mxu0 %v1609
      %1914 = vmatpush.msra.mxu0 %v1608
      %1915 = vmatpush.msra.mxu0 %v1607
      %1916 = vmatpush.msra.mxu0 %v1606
      %1917 = vmatpush.msra.mxu0 %v1605
      %1918 = vmatmul.f32.gmra.mxu0 %v1439
      %v1919 = vpop.f32.mrf.mxu0
      %v1920 = vadd.f32 %v1900, %v1919
      %1921 = vdwg.mxu0
      %1922 = vmatpush.msra.mxu0 %v1636
      %1923 = vmatpush.msra.mxu0 %v1635
      %1924 = vmatpush.msra.mxu0 %v1634
      %1925 = vmatpush.msra.mxu0 %v1633
      %1926 = vmatpush.msra.mxu0 %v1632
      %1927 = vmatpush.msra.mxu0 %v1631
      %1928 = vmatpush.msra.mxu0 %v1630
      %1929 = vmatpush.msra.mxu0 %v1629
      %1930 = vmatpush.msra.mxu0 %v1628
      %1931 = vmatpush.msra.mxu0 %v1627
      %1932 = vmatpush.msra.mxu0 %v1626
      %1933 = vmatpush.msra.mxu0 %v1625
      %1934 = vmatpush.msra.mxu0 %v1624
      %1935 = vmatpush.msra.mxu0 %v1623
      %1936 = vmatpush.msra.mxu0 %v1622
      %1937 = vmatpush.msra.mxu0 %v1621
      %1938 = vmatmul.f32.gmra.mxu0 %v1440
      %v1939 = vpop.f32.mrf.mxu0
      %v1940 = vadd.f32 %v1920, %v1939
      %1941 = vdwg.mxu0
      %1942 = vmatpush.msra.mxu0 %v1652
      %1943 = vmatpush.msra.mxu0 %v1651
      %1944 = vmatpush.msra.mxu0 %v1650
      %1945 = vmatpush.msra.mxu0 %v1649
      %1946 = vmatpush.msra.mxu0 %v1648
      %1947 = vmatpush.msra.mxu0 %v1647
      %1948 = vmatpush.msra.mxu0 %v1646
      %1949 = vmatpush.msra.mxu0 %v1645
      %1950 = vmatpush.msra.mxu0 %v1644
      %1951 = vmatpush.msra.mxu0 %v1643
      %1952 = vmatpush.msra.mxu0 %v1642
      %1953 = vmatpush.msra.mxu0 %v1641
      %1954 = vmatpush.msra.mxu0 %v1640
      %1955 = vmatpush.msra.mxu0 %v1639
      %1956 = vmatpush.msra.mxu0 %v1638
      %1957 = vmatpush.msra.mxu0 %v1637
      %1958 = vmatmul.f32.gmra.mxu0 %v1441
      %v1959 = vpop.f32.mrf.mxu0
      %v1960 = vadd.f32 %v1940, %v1959
      %1961 = vdwg.mxu0
      %1962 = vmatpush.msra.mxu0 %v1668
      %1963 = vmatpush.msra.mxu0 %v1667
      %1964 = vmatpush.msra.mxu0 %v1666
      %1965 = vmatpush.msra.mxu0 %v1665
      %1966 = vmatpush.msra.mxu0 %v1664
      %1967 = vmatpush.msra.mxu0 %v1663
      %1968 = vmatpush.msra.mxu0 %v1662
      %1969 = vmatpush.msra.mxu0 %v1661
      %1970 = vmatpush.msra.mxu0 %v1660
      %1971 = vmatpush.msra.mxu0 %v1659
      %1972 = vmatpush.msra.mxu0 %v1658
      %1973 = vmatpush.msra.mxu0 %v1657
      %1974 = vmatpush.msra.mxu0 %v1656
      %1975 = vmatpush.msra.mxu0 %v1655
      %1976 = vmatpush.msra.mxu0 %v1654
      %1977 = vmatpush.msra.mxu0 %v1653
      %1978 = vmatmul.f32.gmra.mxu0 %v1442
      %v1979 = vpop.f32.mrf.mxu0
      %v1980 = vadd.f32 %v1960, %v1979
      %1981 = vdwg.mxu0
      %1982 = vmatpush.msra.mxu0 %v1684
      %1983 = vmatpush.msra.mxu0 %v1683
      %1984 = vmatpush.msra.mxu0 %v1682
      %1985 = vmatpush.msra.mxu0 %v1681
      %1986 = vmatpush.msra.mxu0 %v1680
      %1987 = vmatpush.msra.mxu0 %v1679
      %1988 = vmatpush.msra.mxu0 %v1678
      %1989 = vmatpush.msra.mxu0 %v1677
      %1990 = vmatpush.msra.mxu0 %v1676
      %1991 = vmatpush.msra.mxu0 %v1675
      %1992 = vmatpush.msra.mxu0 %v1674
      %1993 = vmatpush.msra.mxu0 %v1673
      %1994 = vmatpush.msra.mxu0 %v1672
      %1995 = vmatpush.msra.mxu0 %v1671
      %1996 = vmatpush.msra.mxu0 %v1670
      %1997 = vmatpush.msra.mxu0 %v1669
      %1998 = vmatmul.f32.gmra.mxu0 %v1443
      %v1999 = vpop.f32.mrf.mxu0
      %v2000 = vadd.f32 %v1980, %v1999
      %2001 = vdwg.mxu0
      %2002 = vmatpush.msra.mxu0 %v1700
      %2003 = vmatpush.msra.mxu0 %v1699
      %2004 = vmatpush.msra.mxu0 %v1698
      %2005 = vmatpush.msra.mxu0 %v1697
      %2006 = vmatpush.msra.mxu0 %v1696
      %2007 = vmatpush.msra.mxu0 %v1695
      %2008 = vmatpush.msra.mxu0 %v1694
      %2009 = vmatpush.msra.mxu0 %v1693
      %2010 = vmatpush.msra.mxu0 %v1692
      %2011 = vmatpush.msra.mxu0 %v1691
      %2012 = vmatpush.msra.mxu0 %v1690
      %2013 = vmatpush.msra.mxu0 %v1689
      %2014 = vmatpush.msra.mxu0 %v1688
      %2015 = vmatpush.msra.mxu0 %v1687
      %2016 = vmatpush.msra.mxu0 %v1686
      %2017 = vmatpush.msra.mxu0 %v1685
      %2018 = vmatmul.f32.gmra.mxu0 %v1444
      %v2019 = vpop.f32.mrf.mxu0
      %v2020 = vadd.f32 %v2000, %v2019
      %2021 = vdwg.mxu0
      %v2022 = vadd.f32 %v893, %v2020
      %v2023 = vsel %vm335, %v2022, 0.0
      %2024 = vadd.xlane.f32.xlu0 %v2023
      %v2025 = vpop.xlane.xlu0 %2024
      %v2026 = vmul.f32 %v2025, %v870
      %v2027 = vsub.f32 %v2022, %v2026
      %v2028 = vmul.f32 %v2027, %v2027
      %v2029 = vsel %vm335, %v2028, 0.0
      %2030 = vadd.xlane.f32.xlu0 %v2029
      %v2031 = vpop.xlane.xlu0 %2030
      %v2032 = vmul.f32 %v2031, %v870
      %v2033 = vadd.f32 %v2032, 1e-05
      %v2034 = vrsqrt.pop %v2033
      %v2035 = vmul.f32 %v2034, %v2033
      %v2036 = vmul.f32 %v2035, %v2034
      %v2037 = vmul.f32 0.5, %v2036
      %v2038 = vsub.f32 1.5, %v2037
      %v2039 = vmul.f32 %v2034, %v2038
      %vm2040 = vweird.f32 %v2033
      %vm2041 = vweird.f32 %v2034
      %vm2042 = vmor %vm2040, %vm2041
      %v2043 = vsel %vm2042, %v2034, %v2039
      %v2044 = vmul.f32 %v2027, %v2043
      %v2045 = vperm.slane %v331, 5
      %v2046 = vmul.f32 %v2044, %v2045
      %v2047 = vperm.slane %v331, 6
      %v2048 = vadd.f32 %v2046, %v2047
      %s2049 = scalar_lea.vmem %s1, 128
      %v2050 = vld [vmem:[%s2049] sm:$0xff]
      %v2051 = vld [vmem:[%s2049 + $0x8] sm:$0xff]
      %v2052 = vld [vmem:[%s2049 + $0x10] sm:$0xff]
      %v2053 = vld [vmem:[%s2049 + $0x18] sm:$0xff]
      %v2054 = vld [vmem:[%s2049 + $0x20] sm:$0xff]
      %v2055 = vld [vmem:[%s2049 + $0x28] sm:$0xff]
      %v2056 = vld [vmem:[%s2049 + $0x30] sm:$0xff]
      %v2057 = vld [vmem:[%s2049 + $0x38] sm:$0xff]
      %v2058 = vld [vmem:[%s2049 + $0x40] sm:$0xff]
      %v2059 = vld [vmem:[%s2049 + $0x48] sm:$0xff]
      %v2060 = vld [vmem:[%s2049 + $0x50] sm:$0xff]
      %v2061 = vld [vmem:[%s2049 + $0x58] sm:$0xff]
      %v2062 = vld [vmem:[%s2049 + $0x60] sm:$0xff]
      %v2063 = vld [vmem:[%s2049 + $0x68] sm:$0xff]
      %v2064 = vld [vmem:[%s2049 + $0x70] sm:$0xf]
      %v2065 = vld [vmem:[%s2049 + $0x78] sm:$0xf]
      %s2066 = scalar_lea.vmem %s5, 16
      %v2067 = vld [vmem:[%s2066] sm:$0xff]
      %v2068 = vld [vmem:[%s2066 + $0x8] sm:$0xff]
      %v2069 = vperm.slane %v2067, 0
      %v2070 = vperm.slane %v2068, 0
      %v2072 = vsel %vm335, %v2048, 0
      %v2075 = vsel %vm339, %v2064, 0
      %v2078 = vsel %vm339, %v2065, 0
      %2080 = vmatpush.msra.mxu0 0.0
      %2081 = vmatpush.msra.mxu0 0.0
      %2082 = vmatpush.msra.mxu0 0.0
      %2083 = vmatpush.msra.mxu0 0.0
      %2084 = vmatpush.msra.mxu0 0.0
      %2085 = vmatpush.msra.mxu0 0.0
      %2086 = vmatpush.msra.mxu0 0.0
      %2087 = vmatpush.msra.mxu0 0.0
      %2088 = vmatpush.msra.mxu0 %v2075
      %2089 = vmatpush.msra.mxu0 %v2062
      %2090 = vmatpush.msra.mxu0 %v2060
      %2091 = vmatpush.msra.mxu0 %v2058
      %2092 = vmatpush.msra.mxu0 %v2056
      %2093 = vmatpush.msra.mxu0 %v2054
      %2094 = vmatpush.msra.mxu0 %v2052
      %2095 = vmatpush.msra.mxu0 %v2050
      %2096 = vmatmul.f32.gmra.mxu0 %v2072
      %v2097 = vpop.f32.mrf.mxu0
      %v2098 = vadd.f32 %v2069, %v2097
      %2099 = vdwg.mxu0
      %2100 = vmatpush.msra.mxu0 0.0
      %2101 = vmatpush.msra.mxu0 0.0
      %2102 = vmatpush.msra.mxu0 0.0
      %2103 = vmatpush.msra.mxu0 0.0
      %2104 = vmatpush.msra.mxu0 0.0
      %2105 = vmatpush.msra.mxu0 0.0
      %2106 = vmatpush.msra.mxu0 0.0
      %2107 = vmatpush.msra.mxu0 0.0
      %2108 = vmatpush.msra.mxu0 %v2078
      %2109 = vmatpush.msra.mxu0 %v2063
      %2110 = vmatpush.msra.mxu0 %v2061
      %2111 = vmatpush.msra.mxu0 %v2059
      %2112 = vmatpush.msra.mxu0 %v2057
      %2113 = vmatpush.msra.mxu0 %v2055
      %2114 = vmatpush.msra.mxu0 %v2053
      %2115 = vmatpush.msra.mxu0 %v2051
      %2116 = vmatmul.f32.gmra.mxu0 %v2072
      %v2117 = vpop.f32.mrf.mxu0
      %v2118 = vadd.f32 %v2070, %v2117
      %2119 = vdwg.mxu0
      %v2121 = vrot.slane %v2098, 1
      %v2122 = vrot.slane %v2098, 2
      %v2123 = vrot.slane %v2098, 3
      %v2124 = vrot.slane %v2098, 4
      %v2125 = vrot.slane %v2098, 5
      %v2126 = vrot.slane %v2098, 6
      %v2127 = vrot.slane %v2098, 7
      %v2128 = vperm.slane %v2098, 0
      %v2129 = vperm.slane %v2121, 0
      %v2130 = vperm.slane %v2122, 0
      %v2131 = vperm.slane %v2123, 0
      %v2132 = vperm.slane %v2124, 0
      %v2133 = vperm.slane %v2125, 0
      %v2134 = vperm.slane %v2126, 0
      %v2135 = vperm.slane %v2127, 0
      %2144 = vrot.lane.b32.xlu0 %v2098, 68
      %v2145 = vpop.permute.xlu0 %2144
      %v2147 = vmul.f32 %v2128, %v2145
      %v2148 = vmul.f32 %v2129, %v2145
      %v2149 = vmul.f32 %v2130, %v2145
      %v2150 = vmul.f32 %v2131, %v2145
      %v2151 = vmul.f32 %v2132, %v2145
      %v2152 = vmul.f32 %v2133, %v2145
      %v2153 = vmul.f32 %v2134, %v2145
      %v2154 = vmul.f32 %v2135, %v2145
      %v2156 = vsel %vm335, %v2147, 0
      %v2159 = vsel %vm335, %v2148, 0
      %v2162 = vsel %vm335, %v2149, 0
      %v2165 = vsel %vm335, %v2150, 0
      %v2168 = vsel %vm335, %v2151, 0
      %v2171 = vsel %vm335, %v2152, 0
      %v2174 = vsel %vm335, %v2153, 0
      %v2177 = vsel %vm335, %v2154, 0
      %2179 = vmatpush.msra.mxu0 0.0
      %2180 = vmatpush.msra.mxu0 0.0
      %2181 = vmatpush.msra.mxu0 0.0
      %2182 = vmatpush.msra.mxu0 0.0
      %2183 = vmatpush.msra.mxu0 0.0
      %2184 = vmatpush.msra.mxu0 0.0
      %2185 = vmatpush.msra.mxu0 0.0
      %2186 = vmatpush.msra.mxu0 0.0
      %2187 = vmatpush.msra.mxu0 %v446
      %2188 = vmatpush.msra.mxu0 %v299
      %2189 = vmatpush.msra.mxu0 %v298
      %2190 = vmatpush.msra.mxu0 %v297
      %2191 = vmatpush.msra.mxu0 %v296
      %2192 = vmatpush.msra.mxu0 %v295
      %2193 = vmatpush.msra.mxu0 %v294
      %2194 = vmatpush.msra.mxu0 %v293
      %2195 = vmatmul.f32.gmra.mxu0 %v2156
      %v2196 = vpop.f32.mrf.mxu0
      %v2197 = vadd.f32 0.0, %v2196
      %2198 = vmatmul.f32.gmra.mxu0 %v2159
      %v2199 = vpop.f32.mrf.mxu0
      %v2200 = vadd.f32 0.0, %v2199
      %2201 = vmatmul.f32.gmra.mxu0 %v2162
      %v2202 = vpop.f32.mrf.mxu0
      %v2203 = vadd.f32 0.0, %v2202
      %2204 = vmatmul.f32.gmra.mxu0 %v2165
      %v2205 = vpop.f32.mrf.mxu0
      %v2206 = vadd.f32 0.0, %v2205
      %2207 = vmatmul.f32.gmra.mxu0 %v2168
      %v2208 = vpop.f32.mrf.mxu0
      %v2209 = vadd.f32 0.0, %v2208
      %2210 = vmatmul.f32.gmra.mxu0 %v2171
      %v2211 = vpop.f32.mrf.mxu0
      %v2212 = vadd.f32 0.0, %v2211
      %2213 = vmatmul.f32.gmra.mxu0 %v2174
      %v2214 = vpop.f32.mrf.mxu0
      %v2215 = vadd.f32 0.0, %v2214
      %2216 = vmatmul.f32.gmra.mxu0 %v2177
      %v2217 = vpop.f32.mrf.mxu0
      %v2218 = vadd.f32 0.0, %v2217
      %2219 = vdwg.mxu0
      %v2220 = vsel %vm489, %v2197, -inf
      %v2221 = vrot.slane %v2220, 4
      %v2222 = vmax.f32 %v2220, %v2221
      %v2223 = vrot.slane %v2222, 2
      %v2224 = vmax.f32 %v2222, %v2223
      %v2225 = vrot.slane %v2224, 1
      %v2226 = vmax.f32 %v2224, %v2225
      %v2227 = vsel %vm489, %v2200, -inf
      %v2228 = vrot.slane %v2227, 4
      %v2229 = vmax.f32 %v2227, %v2228
      %v2230 = vrot.slane %v2229, 2
      %v2231 = vmax.f32 %v2229, %v2230
      %v2232 = vrot.slane %v2231, 1
      %v2233 = vmax.f32 %v2231, %v2232
      %v2234 = vsel %vm489, %v2203, -inf
      %v2235 = vrot.slane %v2234, 4
      %v2236 = vmax.f32 %v2234, %v2235
      %v2237 = vrot.slane %v2236, 2
      %v2238 = vmax.f32 %v2236, %v2237
      %v2239 = vrot.slane %v2238, 1
      %v2240 = vmax.f32 %v2238, %v2239
      %v2241 = vsel %vm489, %v2206, -inf
      %v2242 = vrot.slane %v2241, 4
      %v2243 = vmax.f32 %v2241, %v2242
      %v2244 = vrot.slane %v2243, 2
      %v2245 = vmax.f32 %v2243, %v2244
      %v2246 = vrot.slane %v2245, 1
      %v2247 = vmax.f32 %v2245, %v2246
      %v2248 = vsel %vm489, %v2209, -inf
      %v2249 = vrot.slane %v2248, 4
      %v2250 = vmax.f32 %v2248, %v2249
      %v2251 = vrot.slane %v2250, 2
      %v2252 = vmax.f32 %v2250, %v2251
      %v2253 = vrot.slane %v2252, 1
      %v2254 = vmax.f32 %v2252, %v2253
      %v2255 = vsel %vm489, %v2212, -inf
      %v2256 = vrot.slane %v2255, 4
      %v2257 = vmax.f32 %v2255, %v2256
      %v2258 = vrot.slane %v2257, 2
      %v2259 = vmax.f32 %v2257, %v2258
      %v2260 = vrot.slane %v2259, 1
      %v2261 = vmax.f32 %v2259, %v2260
      %v2262 = vsel %vm489, %v2215, -inf
      %v2263 = vrot.slane %v2262, 4
      %v2264 = vmax.f32 %v2262, %v2263
      %v2265 = vrot.slane %v2264, 2
      %v2266 = vmax.f32 %v2264, %v2265
      %v2267 = vrot.slane %v2266, 1
      %v2268 = vmax.f32 %v2266, %v2267
      %v2269 = vsel %vm489, %v2218, -inf
      %v2270 = vrot.slane %v2269, 4
      %v2271 = vmax.f32 %v2269, %v2270
      %v2272 = vrot.slane %v2271, 2
      %v2273 = vmax.f32 %v2271, %v2272
      %v2274 = vrot.slane %v2273, 1
      %v2275 = vmax.f32 %v2273, %v2274
      %v2276 = vsub.f32 %v2197, %v2226
      %v2277 = vsub.f32 %v2200, %v2233
      %v2278 = vsub.f32 %v2203, %v2240
      %v2279 = vsub.f32 %v2206, %v2247
      %v2280 = vsub.f32 %v2209, %v2254
      %v2281 = vsub.f32 %v2212, %v2261
      %v2282 = vsub.f32 %v2215, %v2268
      %v2283 = vsub.f32 %v2218, %v2275
      %v2284 = vmul.f32 %v2276, 1.442695
      %v2285 = vpow.pop %v2284
      %v2286 = vmul.f32 %v2277, 1.442695
      %v2287 = vpow.pop %v2286
      %v2288 = vmul.f32 %v2278, 1.442695
      %v2289 = vpow.pop %v2288
      %v2290 = vmul.f32 %v2279, 1.442695
      %v2291 = vpow.pop %v2290
      %v2292 = vmul.f32 %v2280, 1.442695
      %v2293 = vpow.pop %v2292
      %v2294 = vmul.f32 %v2281, 1.442695
      %v2295 = vpow.pop %v2294
      %v2296 = vmul.f32 %v2282, 1.442695
      %v2297 = vpow.pop %v2296
      %v2298 = vmul.f32 %v2283, 1.442695
      %v2299 = vpow.pop %v2298
      %v2300 = vsel %vm489, %v2285, 0.0
      %v2301 = vrot.slane %v2300, 4
      %v2302 = vadd.f32 %v2300, %v2301
      %v2303 = vrot.slane %v2302, 2
      %v2304 = vadd.f32 %v2302, %v2303
      %v2305 = vrot.slane %v2304, 1
      %v2306 = vadd.f32 %v2304, %v2305
      %v2307 = vsel %vm489, %v2287, 0.0
      %v2308 = vrot.slane %v2307, 4
      %v2309 = vadd.f32 %v2307, %v2308
      %v2310 = vrot.slane %v2309, 2
      %v2311 = vadd.f32 %v2309, %v2310
      %v2312 = vrot.slane %v2311, 1
      %v2313 = vadd.f32 %v2311, %v2312
      %v2314 = vsel %vm489, %v2289, 0.0
      %v2315 = vrot.slane %v2314, 4
      %v2316 = vadd.f32 %v2314, %v2315
      %v2317 = vrot.slane %v2316, 2
      %v2318 = vadd.f32 %v2316, %v2317
      %v2319 = vrot.slane %v2318, 1
      %v2320 = vadd.f32 %v2318, %v2319
      %v2321 = vsel %vm489, %v2291, 0.0
      %v2322 = vrot.slane %v2321, 4
      %v2323 = vadd.f32 %v2321, %v2322
      %v2324 = vrot.slane %v2323, 2
      %v2325 = vadd.f32 %v2323, %v2324
      %v2326 = vrot.slane %v2325, 1
      %v2327 = vadd.f32 %v2325, %v2326
      %v2328 = vsel %vm489, %v2293, 0.0
      %v2329 = vrot.slane %v2328, 4
      %v2330 = vadd.f32 %v2328, %v2329
      %v2331 = vrot.slane %v2330, 2
      %v2332 = vadd.f32 %v2330, %v2331
      %v2333 = vrot.slane %v2332, 1
      %v2334 = vadd.f32 %v2332, %v2333
      %v2335 = vsel %vm489, %v2295, 0.0
      %v2336 = vrot.slane %v2335, 4
      %v2337 = vadd.f32 %v2335, %v2336
      %v2338 = vrot.slane %v2337, 2
      %v2339 = vadd.f32 %v2337, %v2338
      %v2340 = vrot.slane %v2339, 1
      %v2341 = vadd.f32 %v2339, %v2340
      %v2342 = vsel %vm489, %v2297, 0.0
      %v2343 = vrot.slane %v2342, 4
      %v2344 = vadd.f32 %v2342, %v2343
      %v2345 = vrot.slane %v2344, 2
      %v2346 = vadd.f32 %v2344, %v2345
      %v2347 = vrot.slane %v2346, 1
      %v2348 = vadd.f32 %v2346, %v2347
      %v2349 = vsel %vm489, %v2299, 0.0
      %v2350 = vrot.slane %v2349, 4
      %v2351 = vadd.f32 %v2349, %v2350
      %v2352 = vrot.slane %v2351, 2
      %v2353 = vadd.f32 %v2351, %v2352
      %v2354 = vrot.slane %v2353, 1
      %v2355 = vadd.f32 %v2353, %v2354
      %v2356 = vrcp.pop %v2306
      %v2357 = vrcp.pop %v2313
      %v2358 = vrcp.pop %v2320
      %v2359 = vrcp.pop %v2327
      %v2360 = vrcp.pop %v2334
      %v2361 = vrcp.pop %v2341
      %v2362 = vrcp.pop %v2348
      %v2363 = vrcp.pop %v2355
      %v2364 = vmul.f32 %v2285, %v2356
      %v2365 = vmul.f32 %v2287, %v2357
      %v2366 = vmul.f32 %v2289, %v2358
      %v2367 = vmul.f32 %v2291, %v2359
      %v2368 = vmul.f32 %v2293, %v2360
      %v2369 = vmul.f32 %v2295, %v2361
      %v2370 = vmul.f32 %v2297, %v2362
      %v2371 = vmul.f32 %v2299, %v2363
      %v2373 = vsel %vm489, %v2364, 0
      %v2376 = vsel %vm489, %v2365, 0
      %v2379 = vsel %vm489, %v2366, 0
      %v2382 = vsel %vm489, %v2367, 0
      %v2385 = vsel %vm489, %v2368, 0
      %v2388 = vsel %vm489, %v2369, 0
      %v2391 = vsel %vm489, %v2370, 0
      %v2394 = vsel %vm489, %v2371, 0
      %2396 = vmatpush.msra.mxu0 0.0
      %2397 = vmatpush.msra.mxu0 0.0
      %2398 = vmatpush.msra.mxu0 0.0
      %2399 = vmatpush.msra.mxu0 0.0
      %2400 = vmatpush.msra.mxu0 0.0
      %2401 = vmatpush.msra.mxu0 0.0
      %2402 = vmatpush.msra.mxu0 0.0
      %2403 = vmatpush.msra.mxu0 0.0
      %2404 = vmatpush.msra.mxu0 0.0
      %2405 = vmatpush.msra.mxu0 0.0
      %2406 = vmatpush.msra.mxu0 0.0
      %2407 = vmatpush.msra.mxu0 0.0
      %2408 = vmatpush.msra.mxu0 0.0
      %2409 = vmatpush.msra.mxu0 0.0
      %2410 = vmatpush.msra.mxu0 %v668
      %2411 = vmatpush.msra.mxu0 %v313
      %2412 = vmatmul.f32.gmra.mxu0 %v2373
      %v2413 = vpop.f32.mrf.mxu0
      %v2414 = vadd.f32 0.0, %v2413
      %2415 = vmatmul.f32.gmra.mxu0 %v2376
      %v2416 = vpop.f32.mrf.mxu0
      %v2417 = vadd.f32 0.0, %v2416
      %2418 = vmatmul.f32.gmra.mxu0 %v2379
      %v2419 = vpop.f32.mrf.mxu0
      %v2420 = vadd.f32 0.0, %v2419
      %2421 = vmatmul.f32.gmra.mxu0 %v2382
      %v2422 = vpop.f32.mrf.mxu0
      %v2423 = vadd.f32 0.0, %v2422
      %2424 = vmatmul.f32.gmra.mxu0 %v2385
      %v2425 = vpop.f32.mrf.mxu0
      %v2426 = vadd.f32 0.0, %v2425
      %2427 = vmatmul.f32.gmra.mxu0 %v2388
      %v2428 = vpop.f32.mrf.mxu0
      %v2429 = vadd.f32 0.0, %v2428
      %2430 = vmatmul.f32.gmra.mxu0 %v2391
      %v2431 = vpop.f32.mrf.mxu0
      %v2432 = vadd.f32 0.0, %v2431
      %2433 = vmatmul.f32.gmra.mxu0 %v2394
      %v2434 = vpop.f32.mrf.mxu0
      %v2435 = vadd.f32 0.0, %v2434
      %2436 = vdwg.mxu0
      %2438 = vrot.lane.b32.xlu0 %v2098, 8
      %v2439 = vpop.permute.xlu0 %2438
      %2440 = vrot.lane.b32.xlu0 %v2118, 8
      %v2441 = vpop.permute.xlu0 %2440
      %v2442 = vsel %vm716, %v2439, %v2441
      %v2444 = vmul.f32 %v2414, %v2442
      %v2445 = vmul.f32 %v2417, %v2442
      %v2446 = vmul.f32 %v2420, %v2442
      %v2447 = vmul.f32 %v2423, %v2442
      %v2448 = vmul.f32 %v2426, %v2442
      %v2449 = vmul.f32 %v2429, %v2442
      %v2450 = vmul.f32 %v2432, %v2442
      %v2451 = vmul.f32 %v2435, %v2442
      %v2452 = vsel %vm335, %v2444, 0.0
      %v2453 = vrot.slane %v2452, 4
      %v2454 = vadd.f32 %v2452, %v2453
      %v2455 = vrot.slane %v2454, 2
      %v2456 = vadd.f32 %v2454, %v2455
      %v2457 = vrot.slane %v2456, 1
      %v2458 = vadd.f32 %v2456, %v2457
      %v2459 = vsel %vm335, %v2445, 0.0
      %v2460 = vrot.slane %v2459, 4
      %v2461 = vadd.f32 %v2459, %v2460
      %v2462 = vrot.slane %v2461, 2
      %v2463 = vadd.f32 %v2461, %v2462
      %v2464 = vrot.slane %v2463, 1
      %v2465 = vadd.f32 %v2463, %v2464
      %v2466 = vsel %vm335, %v2446, 0.0
      %v2467 = vrot.slane %v2466, 4
      %v2468 = vadd.f32 %v2466, %v2467
      %v2469 = vrot.slane %v2468, 2
      %v2470 = vadd.f32 %v2468, %v2469
      %v2471 = vrot.slane %v2470, 1
      %v2472 = vadd.f32 %v2470, %v2471
      %v2473 = vsel %vm335, %v2447, 0.0
      %v2474 = vrot.slane %v2473, 4
      %v2475 = vadd.f32 %v2473, %v2474
      %v2476 = vrot.slane %v2475, 2
      %v2477 = vadd.f32 %v2475, %v2476
      %v2478 = vrot.slane %v2477, 1
      %v2479 = vadd.f32 %v2477, %v2478
      %v2480 = vsel %vm335, %v2448, 0.0
      %v2481 = vrot.slane %v2480, 4
      %v2482 = vadd.f32 %v2480, %v2481
      %v2483 = vrot.slane %v2482, 2
      %v2484 = vadd.f32 %v2482, %v2483
      %v2485 = vrot.slane %v2484, 1
      %v2486 = vadd.f32 %v2484, %v2485
      %v2487 = vsel %vm335, %v2449, 0.0
      %v2488 = vrot.slane %v2487, 4
      %v2489 = vadd.f32 %v2487, %v2488
      %v2490 = vrot.slane %v2489, 2
      %v2491 = vadd.f32 %v2489, %v2490
      %v2492 = vrot.slane %v2491, 1
      %v2493 = vadd.f32 %v2491, %v2492
      %v2494 = vsel %vm335, %v2450, 0.0
      %v2495 = vrot.slane %v2494, 4
      %v2496 = vadd.f32 %v2494, %v2495
      %v2497 = vrot.slane %v2496, 2
      %v2498 = vadd.f32 %v2496, %v2497
      %v2499 = vrot.slane %v2498, 1
      %v2500 = vadd.f32 %v2498, %v2499
      %v2501 = vsel %vm335, %v2451, 0.0
      %v2502 = vrot.slane %v2501, 4
      %v2503 = vadd.f32 %v2501, %v2502
      %v2504 = vrot.slane %v2503, 2
      %v2505 = vadd.f32 %v2503, %v2504
      %v2506 = vrot.slane %v2505, 1
      %v2507 = vadd.f32 %v2505, %v2506
      %v2508 = vperm.slane %v2067, 1
      %v2517 = vsel %vm792, %v2465, %v2458
      %v2518 = vsel %vm794, %v2472, %v2517
      %v2519 = vsel %vm796, %v2479, %v2518
      %v2520 = vsel %vm798, %v2486, %v2519
      %v2521 = vsel %vm800, %v2493, %v2520
      %v2522 = vsel %vm802, %v2500, %v2521
      %v2523 = vsel %vm804, %v2507, %v2522
      %2531 = vrot.lane.b32.xlu0 %v2051, 76
      %v2532 = vpop.permute.xlu0 %2531
      %2533 = vrot.lane.b32.xlu0 %v2053, 76
      %v2534 = vpop.permute.xlu0 %2533
      %2535 = vrot.lane.b32.xlu0 %v2055, 76
      %v2536 = vpop.permute.xlu0 %2535
      %2537 = vrot.lane.b32.xlu0 %v2057, 76
      %v2538 = vpop.permute.xlu0 %2537
      %2539 = vrot.lane.b32.xlu0 %v2059, 76
      %v2540 = vpop.permute.xlu0 %2539
      %2541 = vrot.lane.b32.xlu0 %v2061, 76
      %v2542 = vpop.permute.xlu0 %2541
      %2543 = vrot.lane.b32.xlu0 %v2063, 76
      %v2544 = vpop.permute.xlu0 %2543
      %2545 = vrot.lane.b32.xlu0 %v2065, 76
      %v2546 = vpop.permute.xlu0 %2545
      %v2554 = vsel %vm335, %v2523, 0
      %v2556 = vsel %vm339, %v2546, 0
      %2558 = vmatpush.msra.mxu0 0.0
      %2559 = vmatpush.msra.mxu0 0.0
      %2560 = vmatpush.msra.mxu0 0.0
      %2561 = vmatpush.msra.mxu0 0.0
      %2562 = vmatpush.msra.mxu0 0.0
      %2563 = vmatpush.msra.mxu0 0.0
      %2564 = vmatpush.msra.mxu0 0.0
      %2565 = vmatpush.msra.mxu0 0.0
      %2566 = vmatpush.msra.mxu0 %v2556
      %2567 = vmatpush.msra.mxu0 %v2544
      %2568 = vmatpush.msra.mxu0 %v2542
      %2569 = vmatpush.msra.mxu0 %v2540
      %2570 = vmatpush.msra.mxu0 %v2538
      %2571 = vmatpush.msra.mxu0 %v2536
      %2572 = vmatpush.msra.mxu0 %v2534
      %2573 = vmatpush.msra.mxu0 %v2532
      %2574 = vmatmul.f32.gmra.mxu0 %v2554
      %v2575 = vpop.f32.mrf.mxu0
      %v2576 = vadd.f32 %v2508, %v2575
      %2577 = vdwg.mxu0
      %v2578 = vadd.f32 %v2048, %v2576
      %v2579 = vsel %vm335, %v2578, 0.0
      %2580 = vadd.xlane.f32.xlu0 %v2579
      %v2581 = vpop.xlane.xlu0 %2580
      %v2582 = vmul.f32 %v2581, %v870
      %v2583 = vsub.f32 %v2578, %v2582
      %v2584 = vmul.f32 %v2583, %v2583
      %v2585 = vsel %vm335, %v2584, 0.0
      %2586 = vadd.xlane.f32.xlu0 %v2585
      %v2587 = vpop.xlane.xlu0 %2586
      %v2588 = vmul.f32 %v2587, %v870
      %v2589 = vadd.f32 %v2588, 1e-05
      %v2590 = vrsqrt.pop %v2589
      %v2591 = vmul.f32 %v2590, %v2589
      %v2592 = vmul.f32 %v2591, %v2590
      %v2593 = vmul.f32 0.5, %v2592
      %v2594 = vsub.f32 1.5, %v2593
      %v2595 = vmul.f32 %v2590, %v2594
      %vm2596 = vweird.f32 %v2589
      %vm2597 = vweird.f32 %v2590
      %vm2598 = vmor %vm2596, %vm2597
      %v2599 = vsel %vm2598, %v2590, %v2595
      %v2600 = vmul.f32 %v2583, %v2599
      %v2601 = vperm.slane %v2067, 2
      %v2602 = vmul.f32 %v2600, %v2601
      %v2603 = vperm.slane %v2067, 3
      %v2604 = vadd.f32 %v2602, %v2603
      %s2605 = scalar_lea.vmem %s2, 1024
      %v2606 = vld [vmem:[%s2605] sm:$0xff]
      %v2607 = vld [vmem:[%s2605 + $0x8] sm:$0xff]
      %v2608 = vld [vmem:[%s2605 + $0x10] sm:$0xff]
      %v2609 = vld [vmem:[%s2605 + $0x18] sm:$0xff]
      %v2610 = vld [vmem:[%s2605 + $0x20] sm:$0xff]
      %v2611 = vld [vmem:[%s2605 + $0x28] sm:$0xff]
      %v2612 = vld [vmem:[%s2605 + $0x30] sm:$0xff]
      %v2613 = vld [vmem:[%s2605 + $0x38] sm:$0xff]
      %v2614 = vld [vmem:[%s2605 + $0x40] sm:$0xff]
      %v2615 = vld [vmem:[%s2605 + $0x48] sm:$0xff]
      %v2616 = vld [vmem:[%s2605 + $0x50] sm:$0xff]
      %v2617 = vld [vmem:[%s2605 + $0x58] sm:$0xff]
      %v2618 = vld [vmem:[%s2605 + $0x60] sm:$0xff]
      %v2619 = vld [vmem:[%s2605 + $0x68] sm:$0xff]
      %v2620 = vld [vmem:[%s2605 + $0x70] sm:$0xff]
      %v2621 = vld [vmem:[%s2605 + $0x78] sm:$0xff]
      %v2622 = vld [vmem:[%s2605 + $0x80] sm:$0xff]
      %v2623 = vld [vmem:[%s2605 + $0x88] sm:$0xff]
      %v2624 = vld [vmem:[%s2605 + $0x90] sm:$0xff]
      %v2625 = vld [vmem:[%s2605 + $0x98] sm:$0xff]
      %v2626 = vld [vmem:[%s2605 + $0xa0] sm:$0xff]
      %v2627 = vld [vmem:[%s2605 + $0xa8] sm:$0xff]
      %v2628 = vld [vmem:[%s2605 + $0xb0] sm:$0xff]
      %v2629 = vld [vmem:[%s2605 + $0xb8] sm:$0xff]
      %v2630 = vld [vmem:[%s2605 + $0xc0] sm:$0xff]
      %v2631 = vld [vmem:[%s2605 + $0xc8] sm:$0xff]
      %v2632 = vld [vmem:[%s2605 + $0xd0] sm:$0xff]
      %v2633 = vld [vmem:[%s2605 + $0xd8] sm:$0xff]
      %v2634 = vld [vmem:[%s2605 + $0xe0] sm:$0xff]
      %v2635 = vld [vmem:[%s2605 + $0xe8] sm:$0xff]
      %v2636 = vld [vmem:[%s2605 + $0xf0] sm:$0xff]
      %v2637 = vld [vmem:[%s2605 + $0xf8] sm:$0xff]
      %v2638 = vld [vmem:[%s2605 + $0x100] sm:$0xff]
      %v2639 = vld [vmem:[%s2605 + $0x108] sm:$0xff]
      %v2640 = vld [vmem:[%s2605 + $0x110] sm:$0xff]
      %v2641 = vld [vmem:[%s2605 + $0x118] sm:$0xff]
      %v2642 = vld [vmem:[%s2605 + $0x120] sm:$0xff]
      %v2643 = vld [vmem:[%s2605 + $0x128] sm:$0xff]
      %v2644 = vld [vmem:[%s2605 + $0x130] sm:$0xff]
      %v2645 = vld [vmem:[%s2605 + $0x138] sm:$0xff]
      %v2646 = vld [vmem:[%s2605 + $0x140] sm:$0xff]
      %v2647 = vld [vmem:[%s2605 + $0x148] sm:$0xff]
      %v2648 = vld [vmem:[%s2605 + $0x150] sm:$0xff]
      %v2649 = vld [vmem:[%s2605 + $0x158] sm:$0xff]
      %v2650 = vld [vmem:[%s2605 + $0x160] sm:$0xff]
      %v2651 = vld [vmem:[%s2605 + $0x168] sm:$0xff]
      %v2652 = vld [vmem:[%s2605 + $0x170] sm:$0xff]
      %v2653 = vld [vmem:[%s2605 + $0x178] sm:$0xff]
      %v2654 = vld [vmem:[%s2605 + $0x180] sm:$0xff]
      %v2655 = vld [vmem:[%s2605 + $0x188] sm:$0xff]
      %v2656 = vld [vmem:[%s2605 + $0x190] sm:$0xff]
      %v2657 = vld [vmem:[%s2605 + $0x198] sm:$0xff]
      %v2658 = vld [vmem:[%s2605 + $0x1a0] sm:$0xff]
      %v2659 = vld [vmem:[%s2605 + $0x1a8] sm:$0xff]
      %v2660 = vld [vmem:[%s2605 + $0x1b0] sm:$0xff]
      %v2661 = vld [vmem:[%s2605 + $0x1b8] sm:$0xff]
      %v2662 = vld [vmem:[%s2605 + $0x1c0] sm:$0xff]
      %v2663 = vld [vmem:[%s2605 + $0x1c8] sm:$0xff]
      %v2664 = vld [vmem:[%s2605 + $0x1d0] sm:$0xff]
      %v2665 = vld [vmem:[%s2605 + $0x1d8] sm:$0xff]
      %v2666 = vld [vmem:[%s2605 + $0x1e0] sm:$0xff]
      %v2667 = vld [vmem:[%s2605 + $0x1e8] sm:$0xff]
      %v2668 = vld [vmem:[%s2605 + $0x1f0] sm:$0xff]
      %v2669 = vld [vmem:[%s2605 + $0x1f8] sm:$0xff]
      %v2670 = vld [vmem:[%s2605 + $0x200] sm:$0xff]
      %v2671 = vld [vmem:[%s2605 + $0x208] sm:$0xff]
      %v2672 = vld [vmem:[%s2605 + $0x210] sm:$0xff]
      %v2673 = vld [vmem:[%s2605 + $0x218] sm:$0xff]
      %v2674 = vld [vmem:[%s2605 + $0x220] sm:$0xff]
      %v2675 = vld [vmem:[%s2605 + $0x228] sm:$0xff]
      %v2676 = vld [vmem:[%s2605 + $0x230] sm:$0xff]
      %v2677 = vld [vmem:[%s2605 + $0x238] sm:$0xff]
      %v2678 = vld [vmem:[%s2605 + $0x240] sm:$0xff]
      %v2679 = vld [vmem:[%s2605 + $0x248] sm:$0xff]
      %v2680 = vld [vmem:[%s2605 + $0x250] sm:$0xff]
      %v2681 = vld [vmem:[%s2605 + $0x258] sm:$0xff]
      %v2682 = vld [vmem:[%s2605 + $0x260] sm:$0xff]
      %v2683 = vld [vmem:[%s2605 + $0x268] sm:$0xff]
      %v2684 = vld [vmem:[%s2605 + $0x270] sm:$0xff]
      %v2685 = vld [vmem:[%s2605 + $0x278] sm:$0xff]
      %v2686 = vld [vmem:[%s2605 + $0x280] sm:$0xff]
      %v2687 = vld [vmem:[%s2605 + $0x288] sm:$0xff]
      %v2688 = vld [vmem:[%s2605 + $0x290] sm:$0xff]
      %v2689 = vld [vmem:[%s2605 + $0x298] sm:$0xff]
      %v2690 = vld [vmem:[%s2605 + $0x2a0] sm:$0xff]
      %v2691 = vld [vmem:[%s2605 + $0x2a8] sm:$0xff]
      %v2692 = vld [vmem:[%s2605 + $0x2b0] sm:$0xff]
      %v2693 = vld [vmem:[%s2605 + $0x2b8] sm:$0xff]
      %v2694 = vld [vmem:[%s2605 + $0x2c0] sm:$0xff]
      %v2695 = vld [vmem:[%s2605 + $0x2c8] sm:$0xff]
      %v2696 = vld [vmem:[%s2605 + $0x2d0] sm:$0xff]
      %v2697 = vld [vmem:[%s2605 + $0x2d8] sm:$0xff]
      %v2698 = vld [vmem:[%s2605 + $0x2e0] sm:$0xff]
      %v2699 = vld [vmem:[%s2605 + $0x2e8] sm:$0xff]
      %v2700 = vld [vmem:[%s2605 + $0x2f0] sm:$0xff]
      %v2701 = vld [vmem:[%s2605 + $0x2f8] sm:$0xff]
      %v2702 = vld [vmem:[%s2605 + $0x300] sm:$0xff]
      %v2703 = vld [vmem:[%s2605 + $0x308] sm:$0xff]
      %v2704 = vld [vmem:[%s2605 + $0x310] sm:$0xff]
      %v2705 = vld [vmem:[%s2605 + $0x318] sm:$0xff]
      %v2706 = vld [vmem:[%s2605 + $0x320] sm:$0xff]
      %v2707 = vld [vmem:[%s2605 + $0x328] sm:$0xff]
      %v2708 = vld [vmem:[%s2605 + $0x330] sm:$0xff]
      %v2709 = vld [vmem:[%s2605 + $0x338] sm:$0xff]
      %v2710 = vld [vmem:[%s2605 + $0x340] sm:$0xff]
      %v2711 = vld [vmem:[%s2605 + $0x348] sm:$0xff]
      %v2712 = vld [vmem:[%s2605 + $0x350] sm:$0xff]
      %v2713 = vld [vmem:[%s2605 + $0x358] sm:$0xff]
      %v2714 = vld [vmem:[%s2605 + $0x360] sm:$0xff]
      %v2715 = vld [vmem:[%s2605 + $0x368] sm:$0xff]
      %v2716 = vld [vmem:[%s2605 + $0x370] sm:$0xff]
      %v2717 = vld [vmem:[%s2605 + $0x378] sm:$0xff]
      %v2718 = vld [vmem:[%s2605 + $0x380] sm:$0xf]
      %v2719 = vld [vmem:[%s2605 + $0x388] sm:$0xf]
      %v2720 = vld [vmem:[%s2605 + $0x390] sm:$0xf]
      %v2721 = vld [vmem:[%s2605 + $0x398] sm:$0xf]
      %v2722 = vld [vmem:[%s2605 + $0x3a0] sm:$0xf]
      %v2723 = vld [vmem:[%s2605 + $0x3a8] sm:$0xf]
      %v2724 = vld [vmem:[%s2605 + $0x3b0] sm:$0xf]
      %v2725 = vld [vmem:[%s2605 + $0x3b8] sm:$0xf]
      %v2726 = vld [vmem:[%s2605 + $0x3c0] sm:$0xf]
      %v2727 = vld [vmem:[%s2605 + $0x3c8] sm:$0xf]
      %v2728 = vld [vmem:[%s2605 + $0x3d0] sm:$0xf]
      %v2729 = vld [vmem:[%s2605 + $0x3d8] sm:$0xf]
      %v2730 = vld [vmem:[%s2605 + $0x3e0] sm:$0xf]
      %v2731 = vld [vmem:[%s2605 + $0x3e8] sm:$0xf]
      %v2732 = vld [vmem:[%s2605 + $0x3f0] sm:$0xf]
      %v2733 = vld [vmem:[%s2605 + $0x3f8] sm:$0xf]
      %s2734 = scalar_lea.vmem %s3, 16
      %v2735 = vld [vmem:[%s2734] sm:$0xff]
      %v2736 = vld [vmem:[%s2734 + $0x8] sm:$0xff]
      %v2739 = vperm.slane %v2735, 0
      %v2740 = vperm.slane %v2735, 1
      %v2741 = vperm.slane %v2735, 2
      %v2742 = vperm.slane %v2735, 3
      %v2743 = vperm.slane %v2735, 4
      %v2744 = vperm.slane %v2735, 5
      %v2745 = vperm.slane %v2735, 6
      %v2746 = vperm.slane %v2735, 7
      %v2747 = vperm.slane %v2736, 0
      %v2748 = vperm.slane %v2736, 1
      %v2749 = vperm.slane %v2736, 2
      %v2750 = vperm.slane %v2736, 3
      %v2751 = vperm.slane %v2736, 4
      %v2752 = vperm.slane %v2736, 5
      %v2753 = vperm.slane %v2736, 6
      %v2754 = vperm.slane %v2736, 7
      %v2772 = vsel %vm335, %v2604, 0
      %v2775 = vsel %vm339, %v2718, 0
      %v2778 = vsel %vm339, %v2719, 0
      %v2781 = vsel %vm339, %v2720, 0
      %v2784 = vsel %vm339, %v2721, 0
      %v2787 = vsel %vm339, %v2722, 0
      %v2790 = vsel %vm339, %v2723, 0
      %v2793 = vsel %vm339, %v2724, 0
      %v2796 = vsel %vm339, %v2725, 0
      %v2799 = vsel %vm339, %v2726, 0
      %v2802 = vsel %vm339, %v2727, 0
      %v2805 = vsel %vm339, %v2728, 0
      %v2808 = vsel %vm339, %v2729, 0
      %v2811 = vsel %vm339, %v2730, 0
      %v2814 = vsel %vm339, %v2731, 0
      %v2817 = vsel %vm339, %v2732, 0
      %v2820 = vsel %vm339, %v2733, 0
      %2822 = vmatpush.msra.mxu0 0.0
      %2823 = vmatpush.msra.mxu0 0.0
      %2824 = vmatpush.msra.mxu0 0.0
      %2825 = vmatpush.msra.mxu0 0.0
      %2826 = vmatpush.msra.mxu0 0.0
      %2827 = vmatpush.msra.mxu0 0.0
      %2828 = vmatpush.msra.mxu0 0.0
      %2829 = vmatpush.msra.mxu0 0.0
      %2830 = vmatpush.msra.mxu0 %v2775
      %2831 = vmatpush.msra.mxu0 %v2702
      %2832 = vmatpush.msra.mxu0 %v2686
      %2833 = vmatpush.msra.mxu0 %v2670
      %2834 = vmatpush.msra.mxu0 %v2654
      %2835 = vmatpush.msra.mxu0 %v2638
      %2836 = vmatpush.msra.mxu0 %v2622
      %2837 = vmatpush.msra.mxu0 %v2606
      %2838 = vmatmul.f32.gmra.mxu0 %v2772
      %v2839 = vpop.f32.mrf.mxu0
      %v2840 = vadd.f32 %v2739, %v2839
      %2841 = vdwg.mxu0
      %2842 = vmatpush.msra.mxu0 0.0
      %2843 = vmatpush.msra.mxu0 0.0
      %2844 = vmatpush.msra.mxu0 0.0
      %2845 = vmatpush.msra.mxu0 0.0
      %2846 = vmatpush.msra.mxu0 0.0
      %2847 = vmatpush.msra.mxu0 0.0
      %2848 = vmatpush.msra.mxu0 0.0
      %2849 = vmatpush.msra.mxu0 0.0
      %2850 = vmatpush.msra.mxu0 %v2778
      %2851 = vmatpush.msra.mxu0 %v2703
      %2852 = vmatpush.msra.mxu0 %v2687
      %2853 = vmatpush.msra.mxu0 %v2671
      %2854 = vmatpush.msra.mxu0 %v2655
      %2855 = vmatpush.msra.mxu0 %v2639
      %2856 = vmatpush.msra.mxu0 %v2623
      %2857 = vmatpush.msra.mxu0 %v2607
      %2858 = vmatmul.f32.gmra.mxu0 %v2772
      %v2859 = vpop.f32.mrf.mxu0
      %v2860 = vadd.f32 %v2740, %v2859
      %2861 = vdwg.mxu0
      %2862 = vmatpush.msra.mxu0 0.0
      %2863 = vmatpush.msra.mxu0 0.0
      %2864 = vmatpush.msra.mxu0 0.0
      %2865 = vmatpush.msra.mxu0 0.0
      %2866 = vmatpush.msra.mxu0 0.0
      %2867 = vmatpush.msra.mxu0 0.0
      %2868 = vmatpush.msra.mxu0 0.0
      %2869 = vmatpush.msra.mxu0 0.0
      %2870 = vmatpush.msra.mxu0 %v2781
      %2871 = vmatpush.msra.mxu0 %v2704
      %2872 = vmatpush.msra.mxu0 %v2688
      %2873 = vmatpush.msra.mxu0 %v2672
      %2874 = vmatpush.msra.mxu0 %v2656
      %2875 = vmatpush.msra.mxu0 %v2640
      %2876 = vmatpush.msra.mxu0 %v2624
      %2877 = vmatpush.msra.mxu0 %v2608
      %2878 = vmatmul.f32.gmra.mxu0 %v2772
      %v2879 = vpop.f32.mrf.mxu0
      %v2880 = vadd.f32 %v2741, %v2879
      %2881 = vdwg.mxu0
      %2882 = vmatpush.msra.mxu0 0.0
      %2883 = vmatpush.msra.mxu0 0.0
      %2884 = vmatpush.msra.mxu0 0.0
      %2885 = vmatpush.msra.mxu0 0.0
      %2886 = vmatpush.msra.mxu0 0.0
      %2887 = vmatpush.msra.mxu0 0.0
      %2888 = vmatpush.msra.mxu0 0.0
      %2889 = vmatpush.msra.mxu0 0.0
      %2890 = vmatpush.msra.mxu0 %v2784
      %2891 = vmatpush.msra.mxu0 %v2705
      %2892 = vmatpush.msra.mxu0 %v2689
      %2893 = vmatpush.msra.mxu0 %v2673
      %2894 = vmatpush.msra.mxu0 %v2657
      %2895 = vmatpush.msra.mxu0 %v2641
      %2896 = vmatpush.msra.mxu0 %v2625
      %2897 = vmatpush.msra.mxu0 %v2609
      %2898 = vmatmul.f32.gmra.mxu0 %v2772
      %v2899 = vpop.f32.mrf.mxu0
      %v2900 = vadd.f32 %v2742, %v2899
      %2901 = vdwg.mxu0
      %2902 = vmatpush.msra.mxu0 0.0
      %2903 = vmatpush.msra.mxu0 0.0
      %2904 = vmatpush.msra.mxu0 0.0
      %2905 = vmatpush.msra.mxu0 0.0
      %2906 = vmatpush.msra.mxu0 0.0
      %2907 = vmatpush.msra.mxu0 0.0
      %2908 = vmatpush.msra.mxu0 0.0
      %2909 = vmatpush.msra.mxu0 0.0
      %2910 = vmatpush.msra.mxu0 %v2787
      %2911 = vmatpush.msra.mxu0 %v2706
      %2912 = vmatpush.msra.mxu0 %v2690
      %2913 = vmatpush.msra.mxu0 %v2674
      %2914 = vmatpush.msra.mxu0 %v2658
      %2915 = vmatpush.msra.mxu0 %v2642
      %2916 = vmatpush.msra.mxu0 %v2626
      %2917 = vmatpush.msra.mxu0 %v2610
      %2918 = vmatmul.f32.gmra.mxu0 %v2772
      %v2919 = vpop.f32.mrf.mxu0
      %v2920 = vadd.f32 %v2743, %v2919
      %2921 = vdwg.mxu0
      %2922 = vmatpush.msra.mxu0 0.0
      %2923 = vmatpush.msra.mxu0 0.0
      %2924 = vmatpush.msra.mxu0 0.0
      %2925 = vmatpush.msra.mxu0 0.0
      %2926 = vmatpush.msra.mxu0 0.0
      %2927 = vmatpush.msra.mxu0 0.0
      %2928 = vmatpush.msra.mxu0 0.0
      %2929 = vmatpush.msra.mxu0 0.0
      %2930 = vmatpush.msra.mxu0 %v2790
      %2931 = vmatpush.msra.mxu0 %v2707
      %2932 = vmatpush.msra.mxu0 %v2691
      %2933 = vmatpush.msra.mxu0 %v2675
      %2934 = vmatpush.msra.mxu0 %v2659
      %2935 = vmatpush.msra.mxu0 %v2643
      %2936 = vmatpush.msra.mxu0 %v2627
      %2937 = vmatpush.msra.mxu0 %v2611
      %2938 = vmatmul.f32.gmra.mxu0 %v2772
      %v2939 = vpop.f32.mrf.mxu0
      %v2940 = vadd.f32 %v2744, %v2939
      %2941 = vdwg.mxu0
      %2942 = vmatpush.msra.mxu0 0.0
      %2943 = vmatpush.msra.mxu0 0.0
      %2944 = vmatpush.msra.mxu0 0.0
      %2945 = vmatpush.msra.mxu0 0.0
      %2946 = vmatpush.msra.mxu0 0.0
      %2947 = vmatpush.msra.mxu0 0.0
      %2948 = vmatpush.msra.mxu0 0.0
      %2949 = vmatpush.msra.mxu0 0.0
      %2950 = vmatpush.msra.mxu0 %v2793
      %2951 = vmatpush.msra.mxu0 %v2708
      %2952 = vmatpush.msra.mxu0 %v2692
      %2953 = vmatpush.msra.mxu0 %v2676
      %2954 = vmatpush.msra.mxu0 %v2660
      %2955 = vmatpush.msra.mxu0 %v2644
      %2956 = vmatpush.msra.mxu0 %v2628
      %2957 = vmatpush.msra.mxu0 %v2612
      %2958 = vmatmul.f32.gmra.mxu0 %v2772
      %v2959 = vpop.f32.mrf.mxu0
      %v2960 = vadd.f32 %v2745, %v2959
      %2961 = vdwg.mxu0
      %2962 = vmatpush.msra.mxu0 0.0
      %2963 = vmatpush.msra.mxu0 0.0
      %2964 = vmatpush.msra.mxu0 0.0
      %2965 = vmatpush.msra.mxu0 0.0
      %2966 = vmatpush.msra.mxu0 0.0
      %2967 = vmatpush.msra.mxu0 0.0
      %2968 = vmatpush.msra.mxu0 0.0
      %2969 = vmatpush.msra.mxu0 0.0
      %2970 = vmatpush.msra.mxu0 %v2796
      %2971 = vmatpush.msra.mxu0 %v2709
      %2972 = vmatpush.msra.mxu0 %v2693
      %2973 = vmatpush.msra.mxu0 %v2677
      %2974 = vmatpush.msra.mxu0 %v2661
      %2975 = vmatpush.msra.mxu0 %v2645
      %2976 = vmatpush.msra.mxu0 %v2629
      %2977 = vmatpush.msra.mxu0 %v2613
      %2978 = vmatmul.f32.gmra.mxu0 %v2772
      %v2979 = vpop.f32.mrf.mxu0
      %v2980 = vadd.f32 %v2746, %v2979
      %2981 = vdwg.mxu0
      %2982 = vmatpush.msra.mxu0 0.0
      %2983 = vmatpush.msra.mxu0 0.0
      %2984 = vmatpush.msra.mxu0 0.0
      %2985 = vmatpush.msra.mxu0 0.0
      %2986 = vmatpush.msra.mxu0 0.0
      %2987 = vmatpush.msra.mxu0 0.0
      %2988 = vmatpush.msra.mxu0 0.0
      %2989 = vmatpush.msra.mxu0 0.0
      %2990 = vmatpush.msra.mxu0 %v2799
      %2991 = vmatpush.msra.mxu0 %v2710
      %2992 = vmatpush.msra.mxu0 %v2694
      %2993 = vmatpush.msra.mxu0 %v2678
      %2994 = vmatpush.msra.mxu0 %v2662
      %2995 = vmatpush.msra.mxu0 %v2646
      %2996 = vmatpush.msra.mxu0 %v2630
      %2997 = vmatpush.msra.mxu0 %v2614
      %2998 = vmatmul.f32.gmra.mxu0 %v2772
      %v2999 = vpop.f32.mrf.mxu0
      %v3000 = vadd.f32 %v2747, %v2999
      %3001 = vdwg.mxu0
      %3002 = vmatpush.msra.mxu0 0.0
      %3003 = vmatpush.msra.mxu0 0.0
      %3004 = vmatpush.msra.mxu0 0.0
      %3005 = vmatpush.msra.mxu0 0.0
      %3006 = vmatpush.msra.mxu0 0.0
      %3007 = vmatpush.msra.mxu0 0.0
      %3008 = vmatpush.msra.mxu0 0.0
      %3009 = vmatpush.msra.mxu0 0.0
      %3010 = vmatpush.msra.mxu0 %v2802
      %3011 = vmatpush.msra.mxu0 %v2711
      %3012 = vmatpush.msra.mxu0 %v2695
      %3013 = vmatpush.msra.mxu0 %v2679
      %3014 = vmatpush.msra.mxu0 %v2663
      %3015 = vmatpush.msra.mxu0 %v2647
      %3016 = vmatpush.msra.mxu0 %v2631
      %3017 = vmatpush.msra.mxu0 %v2615
      %3018 = vmatmul.f32.gmra.mxu0 %v2772
      %v3019 = vpop.f32.mrf.mxu0
      %v3020 = vadd.f32 %v2748, %v3019
      %3021 = vdwg.mxu0
      %3022 = vmatpush.msra.mxu0 0.0
      %3023 = vmatpush.msra.mxu0 0.0
      %3024 = vmatpush.msra.mxu0 0.0
      %3025 = vmatpush.msra.mxu0 0.0
      %3026 = vmatpush.msra.mxu0 0.0
      %3027 = vmatpush.msra.mxu0 0.0
      %3028 = vmatpush.msra.mxu0 0.0
      %3029 = vmatpush.msra.mxu0 0.0
      %3030 = vmatpush.msra.mxu0 %v2805
      %3031 = vmatpush.msra.mxu0 %v2712
      %3032 = vmatpush.msra.mxu0 %v2696
      %3033 = vmatpush.msra.mxu0 %v2680
      %3034 = vmatpush.msra.mxu0 %v2664
      %3035 = vmatpush.msra.mxu0 %v2648
      %3036 = vmatpush.msra.mxu0 %v2632
      %3037 = vmatpush.msra.mxu0 %v2616
      %3038 = vmatmul.f32.gmra.mxu0 %v2772
      %v3039 = vpop.f32.mrf.mxu0
      %v3040 = vadd.f32 %v2749, %v3039
      %3041 = vdwg.mxu0
      %3042 = vmatpush.msra.mxu0 0.0
      %3043 = vmatpush.msra.mxu0 0.0
      %3044 = vmatpush.msra.mxu0 0.0
      %3045 = vmatpush.msra.mxu0 0.0
      %3046 = vmatpush.msra.mxu0 0.0
      %3047 = vmatpush.msra.mxu0 0.0
      %3048 = vmatpush.msra.mxu0 0.0
      %3049 = vmatpush.msra.mxu0 0.0
      %3050 = vmatpush.msra.mxu0 %v2808
      %3051 = vmatpush.msra.mxu0 %v2713
      %3052 = vmatpush.msra.mxu0 %v2697
      %3053 = vmatpush.msra.mxu0 %v2681
      %3054 = vmatpush.msra.mxu0 %v2665
      %3055 = vmatpush.msra.mxu0 %v2649
      %3056 = vmatpush.msra.mxu0 %v2633
      %3057 = vmatpush.msra.mxu0 %v2617
      %3058 = vmatmul.f32.gmra.mxu0 %v2772
      %v3059 = vpop.f32.mrf.mxu0
      %v3060 = vadd.f32 %v2750, %v3059
      %3061 = vdwg.mxu0
      %3062 = vmatpush.msra.mxu0 0.0
      %3063 = vmatpush.msra.mxu0 0.0
      %3064 = vmatpush.msra.mxu0 0.0
      %3065 = vmatpush.msra.mxu0 0.0
      %3066 = vmatpush.msra.mxu0 0.0
      %3067 = vmatpush.msra.mxu0 0.0
      %3068 = vmatpush.msra.mxu0 0.0
      %3069 = vmatpush.msra.mxu0 0.0
      %3070 = vmatpush.msra.mxu0 %v2811
      %3071 = vmatpush.msra.mxu0 %v2714
      %3072 = vmatpush.msra.mxu0 %v2698
      %3073 = vmatpush.msra.mxu0 %v2682
      %3074 = vmatpush.msra.mxu0 %v2666
      %3075 = vmatpush.msra.mxu0 %v2650
      %3076 = vmatpush.msra.mxu0 %v2634
      %3077 = vmatpush.msra.mxu0 %v2618
      %3078 = vmatmul.f32.gmra.mxu0 %v2772
      %v3079 = vpop.f32.mrf.mxu0
      %v3080 = vadd.f32 %v2751, %v3079
      %3081 = vdwg.mxu0
      %3082 = vmatpush.msra.mxu0 0.0
      %3083 = vmatpush.msra.mxu0 0.0
      %3084 = vmatpush.msra.mxu0 0.0
      %3085 = vmatpush.msra.mxu0 0.0
      %3086 = vmatpush.msra.mxu0 0.0
      %3087 = vmatpush.msra.mxu0 0.0
      %3088 = vmatpush.msra.mxu0 0.0
      %3089 = vmatpush.msra.mxu0 0.0
      %3090 = vmatpush.msra.mxu0 %v2814
      %3091 = vmatpush.msra.mxu0 %v2715
      %3092 = vmatpush.msra.mxu0 %v2699
      %3093 = vmatpush.msra.mxu0 %v2683
      %3094 = vmatpush.msra.mxu0 %v2667
      %3095 = vmatpush.msra.mxu0 %v2651
      %3096 = vmatpush.msra.mxu0 %v2635
      %3097 = vmatpush.msra.mxu0 %v2619
      %3098 = vmatmul.f32.gmra.mxu0 %v2772
      %v3099 = vpop.f32.mrf.mxu0
      %v3100 = vadd.f32 %v2752, %v3099
      %3101 = vdwg.mxu0
      %3102 = vmatpush.msra.mxu0 0.0
      %3103 = vmatpush.msra.mxu0 0.0
      %3104 = vmatpush.msra.mxu0 0.0
      %3105 = vmatpush.msra.mxu0 0.0
      %3106 = vmatpush.msra.mxu0 0.0
      %3107 = vmatpush.msra.mxu0 0.0
      %3108 = vmatpush.msra.mxu0 0.0
      %3109 = vmatpush.msra.mxu0 0.0
      %3110 = vmatpush.msra.mxu0 %v2817
      %3111 = vmatpush.msra.mxu0 %v2716
      %3112 = vmatpush.msra.mxu0 %v2700
      %3113 = vmatpush.msra.mxu0 %v2684
      %3114 = vmatpush.msra.mxu0 %v2668
      %3115 = vmatpush.msra.mxu0 %v2652
      %3116 = vmatpush.msra.mxu0 %v2636
      %3117 = vmatpush.msra.mxu0 %v2620
      %3118 = vmatmul.f32.gmra.mxu0 %v2772
      %v3119 = vpop.f32.mrf.mxu0
      %v3120 = vadd.f32 %v2753, %v3119
      %3121 = vdwg.mxu0
      %3122 = vmatpush.msra.mxu0 0.0
      %3123 = vmatpush.msra.mxu0 0.0
      %3124 = vmatpush.msra.mxu0 0.0
      %3125 = vmatpush.msra.mxu0 0.0
      %3126 = vmatpush.msra.mxu0 0.0
      %3127 = vmatpush.msra.mxu0 0.0
      %3128 = vmatpush.msra.mxu0 0.0
      %3129 = vmatpush.msra.mxu0 0.0
      %3130 = vmatpush.msra.mxu0 %v2820
      %3131 = vmatpush.msra.mxu0 %v2717
      %3132 = vmatpush.msra.mxu0 %v2701
      %3133 = vmatpush.msra.mxu0 %v2685
      %3134 = vmatpush.msra.mxu0 %v2669
      %3135 = vmatpush.msra.mxu0 %v2653
      %3136 = vmatpush.msra.mxu0 %v2637
      %3137 = vmatpush.msra.mxu0 %v2621
      %3138 = vmatmul.f32.gmra.mxu0 %v2772
      %v3139 = vpop.f32.mrf.mxu0
      %v3140 = vadd.f32 %v2754, %v3139
      %3141 = vdwg.mxu0
      %v3142 = vmax.f32 %v2840, 0.0
      %v3143 = vmax.f32 %v2860, 0.0
      %v3144 = vmax.f32 %v2880, 0.0
      %v3145 = vmax.f32 %v2900, 0.0
      %v3146 = vmax.f32 %v2920, 0.0
      %v3147 = vmax.f32 %v2940, 0.0
      %v3148 = vmax.f32 %v2960, 0.0
      %v3149 = vmax.f32 %v2980, 0.0
      %v3150 = vmax.f32 %v3000, 0.0
      %v3151 = vmax.f32 %v3020, 0.0
      %v3152 = vmax.f32 %v3040, 0.0
      %v3153 = vmax.f32 %v3060, 0.0
      %v3154 = vmax.f32 %v3080, 0.0
      %v3155 = vmax.f32 %v3100, 0.0
      %v3156 = vmax.f32 %v3120, 0.0
      %v3157 = vmax.f32 %v3140, 0.0
      %s3158 = scalar_lea.vmem %s4, 2048
      %v3159 = vld [vmem:[%s3158] sm:$0xff]
      %v3160 = vld [vmem:[%s3158 + $0x8] sm:$0xff]
      %v3161 = vld [vmem:[%s3158 + $0x10] sm:$0xff]
      %v3162 = vld [vmem:[%s3158 + $0x18] sm:$0xff]
      %v3163 = vld [vmem:[%s3158 + $0x20] sm:$0xff]
      %v3164 = vld [vmem:[%s3158 + $0x28] sm:$0xff]
      %v3165 = vld [vmem:[%s3158 + $0x30] sm:$0xff]
      %v3166 = vld [vmem:[%s3158 + $0x38] sm:$0xff]
      %v3167 = vld [vmem:[%s3158 + $0x40] sm:$0xff]
      %v3168 = vld [vmem:[%s3158 + $0x48] sm:$0xff]
      %v3169 = vld [vmem:[%s3158 + $0x50] sm:$0xff]
      %v3170 = vld [vmem:[%s3158 + $0x58] sm:$0xff]
      %v3171 = vld [vmem:[%s3158 + $0x60] sm:$0xff]
      %v3172 = vld [vmem:[%s3158 + $0x68] sm:$0xff]
      %v3173 = vld [vmem:[%s3158 + $0x70] sm:$0xff]
      %v3174 = vld [vmem:[%s3158 + $0x78] sm:$0xff]
      %v3175 = vld [vmem:[%s3158 + $0x80] sm:$0xff]
      %v3176 = vld [vmem:[%s3158 + $0x88] sm:$0xff]
      %v3177 = vld [vmem:[%s3158 + $0x90] sm:$0xff]
      %v3178 = vld [vmem:[%s3158 + $0x98] sm:$0xff]
      %v3179 = vld [vmem:[%s3158 + $0xa0] sm:$0xff]
      %v3180 = vld [vmem:[%s3158 + $0xa8] sm:$0xff]
      %v3181 = vld [vmem:[%s3158 + $0xb0] sm:$0xff]
      %v3182 = vld [vmem:[%s3158 + $0xb8] sm:$0xff]
      %v3183 = vld [vmem:[%s3158 + $0xc0] sm:$0xff]
      %v3184 = vld [vmem:[%s3158 + $0xc8] sm:$0xff]
      %v3185 = vld [vmem:[%s3158 + $0xd0] sm:$0xff]
      %v3186 = vld [vmem:[%s3158 + $0xd8] sm:$0xff]
      %v3187 = vld [vmem:[%s3158 + $0xe0] sm:$0xff]
      %v3188 = vld [vmem:[%s3158 + $0xe8] sm:$0xff]
      %v3189 = vld [vmem:[%s3158 + $0xf0] sm:$0xff]
      %v3190 = vld [vmem:[%s3158 + $0xf8] sm:$0xff]
      %v3191 = vld [vmem:[%s3158 + $0x100] sm:$0xff]
      %v3192 = vld [vmem:[%s3158 + $0x108] sm:$0xff]
      %v3193 = vld [vmem:[%s3158 + $0x110] sm:$0xff]
      %v3194 = vld [vmem:[%s3158 + $0x118] sm:$0xff]
      %v3195 = vld [vmem:[%s3158 + $0x120] sm:$0xff]
      %v3196 = vld [vmem:[%s3158 + $0x128] sm:$0xff]
      %v3197 = vld [vmem:[%s3158 + $0x130] sm:$0xff]
      %v3198 = vld [vmem:[%s3158 + $0x138] sm:$0xff]
      %v3199 = vld [vmem:[%s3158 + $0x140] sm:$0xff]
      %v3200 = vld [vmem:[%s3158 + $0x148] sm:$0xff]
      %v3201 = vld [vmem:[%s3158 + $0x150] sm:$0xff]
      %v3202 = vld [vmem:[%s3158 + $0x158] sm:$0xff]
      %v3203 = vld [vmem:[%s3158 + $0x160] sm:$0xff]
      %v3204 = vld [vmem:[%s3158 + $0x168] sm:$0xff]
      %v3205 = vld [vmem:[%s3158 + $0x170] sm:$0xff]
      %v3206 = vld [vmem:[%s3158 + $0x178] sm:$0xff]
      %v3207 = vld [vmem:[%s3158 + $0x180] sm:$0xff]
      %v3208 = vld [vmem:[%s3158 + $0x188] sm:$0xff]
      %v3209 = vld [vmem:[%s3158 + $0x190] sm:$0xff]
      %v3210 = vld [vmem:[%s3158 + $0x198] sm:$0xff]
      %v3211 = vld [vmem:[%s3158 + $0x1a0] sm:$0xff]
      %v3212 = vld [vmem:[%s3158 + $0x1a8] sm:$0xff]
      %v3213 = vld [vmem:[%s3158 + $0x1b0] sm:$0xff]
      %v3214 = vld [vmem:[%s3158 + $0x1b8] sm:$0xff]
      %v3215 = vld [vmem:[%s3158 + $0x1c0] sm:$0xff]
      %v3216 = vld [vmem:[%s3158 + $0x1c8] sm:$0xff]
      %v3217 = vld [vmem:[%s3158 + $0x1d0] sm:$0xff]
      %v3218 = vld [vmem:[%s3158 + $0x1d8] sm:$0xff]
      %v3219 = vld [vmem:[%s3158 + $0x1e0] sm:$0xff]
      %v3220 = vld [vmem:[%s3158 + $0x1e8] sm:$0xff]
      %v3221 = vld [vmem:[%s3158 + $0x1f0] sm:$0xff]
      %v3222 = vld [vmem:[%s3158 + $0x1f8] sm:$0xff]
      %v3223 = vld [vmem:[%s3158 + $0x200] sm:$0xff]
      %v3224 = vld [vmem:[%s3158 + $0x208] sm:$0xff]
      %v3225 = vld [vmem:[%s3158 + $0x210] sm:$0xff]
      %v3226 = vld [vmem:[%s3158 + $0x218] sm:$0xff]
      %v3227 = vld [vmem:[%s3158 + $0x220] sm:$0xff]
      %v3228 = vld [vmem:[%s3158 + $0x228] sm:$0xff]
      %v3229 = vld [vmem:[%s3158 + $0x230] sm:$0xff]
      %v3230 = vld [vmem:[%s3158 + $0x238] sm:$0xff]
      %v3231 = vld [vmem:[%s3158 + $0x240] sm:$0xff]
      %v3232 = vld [vmem:[%s3158 + $0x248] sm:$0xff]
      %v3233 = vld [vmem:[%s3158 + $0x250] sm:$0xff]
      %v3234 = vld [vmem:[%s3158 + $0x258] sm:$0xff]
      %v3235 = vld [vmem:[%s3158 + $0x260] sm:$0xff]
      %v3236 = vld [vmem:[%s3158 + $0x268] sm:$0xff]
      %v3237 = vld [vmem:[%s3158 + $0x270] sm:$0xff]
      %v3238 = vld [vmem:[%s3158 + $0x278] sm:$0xff]
      %v3239 = vld [vmem:[%s3158 + $0x280] sm:$0xff]
      %v3240 = vld [vmem:[%s3158 + $0x288] sm:$0xff]
      %v3241 = vld [vmem:[%s3158 + $0x290] sm:$0xff]
      %v3242 = vld [vmem:[%s3158 + $0x298] sm:$0xff]
      %v3243 = vld [vmem:[%s3158 + $0x2a0] sm:$0xff]
      %v3244 = vld [vmem:[%s3158 + $0x2a8] sm:$0xff]
      %v3245 = vld [vmem:[%s3158 + $0x2b0] sm:$0xff]
      %v3246 = vld [vmem:[%s3158 + $0x2b8] sm:$0xff]
      %v3247 = vld [vmem:[%s3158 + $0x2c0] sm:$0xff]
      %v3248 = vld [vmem:[%s3158 + $0x2c8] sm:$0xff]
      %v3249 = vld [vmem:[%s3158 + $0x2d0] sm:$0xff]
      %v3250 = vld [vmem:[%s3158 + $0x2d8] sm:$0xff]
      %v3251 = vld [vmem:[%s3158 + $0x2e0] sm:$0xff]
      %v3252 = vld [vmem:[%s3158 + $0x2e8] sm:$0xff]
      %v3253 = vld [vmem:[%s3158 + $0x2f0] sm:$0xff]
      %v3254 = vld [vmem:[%s3158 + $0x2f8] sm:$0xff]
      %v3255 = vld [vmem:[%s3158 + $0x300] sm:$0xff]
      %v3256 = vld [vmem:[%s3158 + $0x308] sm:$0xff]
      %v3257 = vld [vmem:[%s3158 + $0x310] sm:$0xff]
      %v3258 = vld [vmem:[%s3158 + $0x318] sm:$0xff]
      %v3259 = vld [vmem:[%s3158 + $0x320] sm:$0xff]
      %v3260 = vld [vmem:[%s3158 + $0x328] sm:$0xff]
      %v3261 = vld [vmem:[%s3158 + $0x330] sm:$0xff]
      %v3262 = vld [vmem:[%s3158 + $0x338] sm:$0xff]
      %v3263 = vld [vmem:[%s3158 + $0x340] sm:$0xff]
      %v3264 = vld [vmem:[%s3158 + $0x348] sm:$0xff]
      %v3265 = vld [vmem:[%s3158 + $0x350] sm:$0xff]
      %v3266 = vld [vmem:[%s3158 + $0x358] sm:$0xff]
      %v3267 = vld [vmem:[%s3158 + $0x360] sm:$0xff]
      %v3268 = vld [vmem:[%s3158 + $0x368] sm:$0xff]
      %v3269 = vld [vmem:[%s3158 + $0x370] sm:$0xff]
      %v3270 = vld [vmem:[%s3158 + $0x378] sm:$0xff]
      %v3271 = vld [vmem:[%s3158 + $0x380] sm:$0xff]
      %v3272 = vld [vmem:[%s3158 + $0x388] sm:$0xff]
      %v3273 = vld [vmem:[%s3158 + $0x390] sm:$0xff]
      %v3274 = vld [vmem:[%s3158 + $0x398] sm:$0xff]
      %v3275 = vld [vmem:[%s3158 + $0x3a0] sm:$0xff]
      %v3276 = vld [vmem:[%s3158 + $0x3a8] sm:$0xff]
      %v3277 = vld [vmem:[%s3158 + $0x3b0] sm:$0xff]
      %v3278 = vld [vmem:[%s3158 + $0x3b8] sm:$0xff]
      %v3279 = vld [vmem:[%s3158 + $0x3c0] sm:$0xff]
      %v3280 = vld [vmem:[%s3158 + $0x3c8] sm:$0xff]
      %v3281 = vld [vmem:[%s3158 + $0x3d0] sm:$0xff]
      %v3282 = vld [vmem:[%s3158 + $0x3d8] sm:$0xff]
      %v3283 = vld [vmem:[%s3158 + $0x3e0] sm:$0xff]
      %v3284 = vld [vmem:[%s3158 + $0x3e8] sm:$0xff]
      %v3285 = vld [vmem:[%s3158 + $0x3f0] sm:$0xff]
      %v3286 = vld [vmem:[%s3158 + $0x3f8] sm:$0xff]
      %v3287 = vld [vmem:[%s3158 + $0x400] sm:$0xff]
      %v3288 = vld [vmem:[%s3158 + $0x408] sm:$0xff]
      %v3289 = vld [vmem:[%s3158 + $0x410] sm:$0xff]
      %v3290 = vld [vmem:[%s3158 + $0x418] sm:$0xff]
      %v3291 = vld [vmem:[%s3158 + $0x420] sm:$0xff]
      %v3292 = vld [vmem:[%s3158 + $0x428] sm:$0xff]
      %v3293 = vld [vmem:[%s3158 + $0x430] sm:$0xff]
      %v3294 = vld [vmem:[%s3158 + $0x438] sm:$0xff]
      %v3295 = vld [vmem:[%s3158 + $0x440] sm:$0xff]
      %v3296 = vld [vmem:[%s3158 + $0x448] sm:$0xff]
      %v3297 = vld [vmem:[%s3158 + $0x450] sm:$0xff]
      %v3298 = vld [vmem:[%s3158 + $0x458] sm:$0xff]
      %v3299 = vld [vmem:[%s3158 + $0x460] sm:$0xff]
      %v3300 = vld [vmem:[%s3158 + $0x468] sm:$0xff]
      %v3301 = vld [vmem:[%s3158 + $0x470] sm:$0xff]
      %v3302 = vld [vmem:[%s3158 + $0x478] sm:$0xff]
      %v3303 = vld [vmem:[%s3158 + $0x480] sm:$0xff]
      %v3304 = vld [vmem:[%s3158 + $0x488] sm:$0xff]
      %v3305 = vld [vmem:[%s3158 + $0x490] sm:$0xff]
      %v3306 = vld [vmem:[%s3158 + $0x498] sm:$0xff]
      %v3307 = vld [vmem:[%s3158 + $0x4a0] sm:$0xff]
      %v3308 = vld [vmem:[%s3158 + $0x4a8] sm:$0xff]
      %v3309 = vld [vmem:[%s3158 + $0x4b0] sm:$0xff]
      %v3310 = vld [vmem:[%s3158 + $0x4b8] sm:$0xff]
      %v3311 = vld [vmem:[%s3158 + $0x4c0] sm:$0xff]
      %v3312 = vld [vmem:[%s3158 + $0x4c8] sm:$0xff]
      %v3313 = vld [vmem:[%s3158 + $0x4d0] sm:$0xff]
      %v3314 = vld [vmem:[%s3158 + $0x4d8] sm:$0xff]
      %v3315 = vld [vmem:[%s3158 + $0x4e0] sm:$0xff]
      %v3316 = vld [vmem:[%s3158 + $0x4e8] sm:$0xff]
      %v3317 = vld [vmem:[%s3158 + $0x4f0] sm:$0xff]
      %v3318 = vld [vmem:[%s3158 + $0x4f8] sm:$0xff]
      %v3319 = vld [vmem:[%s3158 + $0x500] sm:$0xff]
      %v3320 = vld [vmem:[%s3158 + $0x508] sm:$0xff]
      %v3321 = vld [vmem:[%s3158 + $0x510] sm:$0xff]
      %v3322 = vld [vmem:[%s3158 + $0x518] sm:$0xff]
      %v3323 = vld [vmem:[%s3158 + $0x520] sm:$0xff]
      %v3324 = vld [vmem:[%s3158 + $0x528] sm:$0xff]
      %v3325 = vld [vmem:[%s3158 + $0x530] sm:$0xff]
      %v3326 = vld [vmem:[%s3158 + $0x538] sm:$0xff]
      %v3327 = vld [vmem:[%s3158 + $0x540] sm:$0xff]
      %v3328 = vld [vmem:[%s3158 + $0x548] sm:$0xff]
      %v3329 = vld [vmem:[%s3158 + $0x550] sm:$0xff]
      %v3330 = vld [vmem:[%s3158 + $0x558] sm:$0xff]
      %v3331 = vld [vmem:[%s3158 + $0x560] sm:$0xff]
      %v3332 = vld [vmem:[%s3158 + $0x568] sm:$0xff]
      %v3333 = vld [vmem:[%s3158 + $0x570] sm:$0xff]
      %v3334 = vld [vmem:[%s3158 + $0x578] sm:$0xff]
      %v3335 = vld [vmem:[%s3158 + $0x580] sm:$0xff]
      %v3336 = vld [vmem:[%s3158 + $0x588] sm:$0xff]
      %v3337 = vld [vmem:[%s3158 + $0x590] sm:$0xff]
      %v3338 = vld [vmem:[%s3158 + $0x598] sm:$0xff]
      %v3339 = vld [vmem:[%s3158 + $0x5a0] sm:$0xff]
      %v3340 = vld [vmem:[%s3158 + $0x5a8] sm:$0xff]
      %v3341 = vld [vmem:[%s3158 + $0x5b0] sm:$0xff]
      %v3342 = vld [vmem:[%s3158 + $0x5b8] sm:$0xff]
      %v3343 = vld [vmem:[%s3158 + $0x5c0] sm:$0xff]
      %v3344 = vld [vmem:[%s3158 + $0x5c8] sm:$0xff]
      %v3345 = vld [vmem:[%s3158 + $0x5d0] sm:$0xff]
      %v3346 = vld [vmem:[%s3158 + $0x5d8] sm:$0xff]
      %v3347 = vld [vmem:[%s3158 + $0x5e0] sm:$0xff]
      %v3348 = vld [vmem:[%s3158 + $0x5e8] sm:$0xff]
      %v3349 = vld [vmem:[%s3158 + $0x5f0] sm:$0xff]
      %v3350 = vld [vmem:[%s3158 + $0x5f8] sm:$0xff]
      %v3351 = vld [vmem:[%s3158 + $0x600] sm:$0xff]
      %v3352 = vld [vmem:[%s3158 + $0x608] sm:$0xff]
      %v3353 = vld [vmem:[%s3158 + $0x610] sm:$0xff]
      %v3354 = vld [vmem:[%s3158 + $0x618] sm:$0xff]
      %v3355 = vld [vmem:[%s3158 + $0x620] sm:$0xff]
      %v3356 = vld [vmem:[%s3158 + $0x628] sm:$0xff]
      %v3357 = vld [vmem:[%s3158 + $0x630] sm:$0xff]
      %v3358 = vld [vmem:[%s3158 + $0x638] sm:$0xff]
      %v3359 = vld [vmem:[%s3158 + $0x640] sm:$0xff]
      %v3360 = vld [vmem:[%s3158 + $0x648] sm:$0xff]
      %v3361 = vld [vmem:[%s3158 + $0x650] sm:$0xff]
      %v3362 = vld [vmem:[%s3158 + $0x658] sm:$0xff]
      %v3363 = vld [vmem:[%s3158 + $0x660] sm:$0xff]
      %v3364 = vld [vmem:[%s3158 + $0x668] sm:$0xff]
      %v3365 = vld [vmem:[%s3158 + $0x670] sm:$0xff]
      %v3366 = vld [vmem:[%s3158 + $0x678] sm:$0xff]
      %v3367 = vld [vmem:[%s3158 + $0x680] sm:$0xff]
      %v3368 = vld [vmem:[%s3158 + $0x688] sm:$0xff]
      %v3369 = vld [vmem:[%s3158 + $0x690] sm:$0xff]
      %v3370 = vld [vmem:[%s3158 + $0x698] sm:$0xff]
      %v3371 = vld [vmem:[%s3158 + $0x6a0] sm:$0xff]
      %v3372 = vld [vmem:[%s3158 + $0x6a8] sm:$0xff]
      %v3373 = vld [vmem:[%s3158 + $0x6b0] sm:$0xff]
      %v3374 = vld [vmem:[%s3158 + $0x6b8] sm:$0xff]
      %v3375 = vld [vmem:[%s3158 + $0x6c0] sm:$0xff]
      %v3376 = vld [vmem:[%s3158 + $0x6c8] sm:$0xff]
      %v3377 = vld [vmem:[%s3158 + $0x6d0] sm:$0xff]
      %v3378 = vld [vmem:[%s3158 + $0x6d8] sm:$0xff]
      %v3379 = vld [vmem:[%s3158 + $0x6e0] sm:$0xff]
      %v3380 = vld [vmem:[%s3158 + $0x6e8] sm:$0xff]
      %v3381 = vld [vmem:[%s3158 + $0x6f0] sm:$0xff]
      %v3382 = vld [vmem:[%s3158 + $0x6f8] sm:$0xff]
      %v3383 = vld [vmem:[%s3158 + $0x700] sm:$0xff]
      %v3384 = vld [vmem:[%s3158 + $0x708] sm:$0xff]
      %v3385 = vld [vmem:[%s3158 + $0x710] sm:$0xff]
      %v3386 = vld [vmem:[%s3158 + $0x718] sm:$0xff]
      %v3387 = vld [vmem:[%s3158 + $0x720] sm:$0xff]
      %v3388 = vld [vmem:[%s3158 + $0x728] sm:$0xff]
      %v3389 = vld [vmem:[%s3158 + $0x730] sm:$0xff]
      %v3390 = vld [vmem:[%s3158 + $0x738] sm:$0xff]
      %v3391 = vld [vmem:[%s3158 + $0x740] sm:$0xff]
      %v3392 = vld [vmem:[%s3158 + $0x748] sm:$0xff]
      %v3393 = vld [vmem:[%s3158 + $0x750] sm:$0xff]
      %v3394 = vld [vmem:[%s3158 + $0x758] sm:$0xff]
      %v3395 = vld [vmem:[%s3158 + $0x760] sm:$0xff]
      %v3396 = vld [vmem:[%s3158 + $0x768] sm:$0xff]
      %v3397 = vld [vmem:[%s3158 + $0x770] sm:$0xff]
      %v3398 = vld [vmem:[%s3158 + $0x778] sm:$0xff]
      %v3399 = vld [vmem:[%s3158 + $0x780] sm:$0xff]
      %v3400 = vld [vmem:[%s3158 + $0x788] sm:$0xff]
      %v3401 = vld [vmem:[%s3158 + $0x790] sm:$0xff]
      %v3402 = vld [vmem:[%s3158 + $0x798] sm:$0xff]
      %v3403 = vld [vmem:[%s3158 + $0x7a0] sm:$0xff]
      %v3404 = vld [vmem:[%s3158 + $0x7a8] sm:$0xff]
      %v3405 = vld [vmem:[%s3158 + $0x7b0] sm:$0xff]
      %v3406 = vld [vmem:[%s3158 + $0x7b8] sm:$0xff]
      %v3407 = vld [vmem:[%s3158 + $0x7c0] sm:$0xff]
      %v3408 = vld [vmem:[%s3158 + $0x7c8] sm:$0xff]
      %v3409 = vld [vmem:[%s3158 + $0x7d0] sm:$0xff]
      %v3410 = vld [vmem:[%s3158 + $0x7d8] sm:$0xff]
      %v3411 = vld [vmem:[%s3158 + $0x7e0] sm:$0xff]
      %v3412 = vld [vmem:[%s3158 + $0x7e8] sm:$0xff]
      %v3413 = vld [vmem:[%s3158 + $0x7f0] sm:$0xff]
      %v3414 = vld [vmem:[%s3158 + $0x7f8] sm:$0xff]
      %v3415 = vperm.slane %v2067, 4
      %3416 = vmatpush.msra.mxu0 %v3174
      %3417 = vmatpush.msra.mxu0 %v3173
      %3418 = vmatpush.msra.mxu0 %v3172
      %3419 = vmatpush.msra.mxu0 %v3171
      %3420 = vmatpush.msra.mxu0 %v3170
      %3421 = vmatpush.msra.mxu0 %v3169
      %3422 = vmatpush.msra.mxu0 %v3168
      %3423 = vmatpush.msra.mxu0 %v3167
      %3424 = vmatpush.msra.mxu0 %v3166
      %3425 = vmatpush.msra.mxu0 %v3165
      %3426 = vmatpush.msra.mxu0 %v3164
      %3427 = vmatpush.msra.mxu0 %v3163
      %3428 = vmatpush.msra.mxu0 %v3162
      %3429 = vmatpush.msra.mxu0 %v3161
      %3430 = vmatpush.msra.mxu0 %v3160
      %3431 = vmatpush.msra.mxu0 %v3159
      %3432 = vmatmul.f32.gmra.mxu0 %v3142
      %v3433 = vpop.f32.mrf.mxu0
      %v3434 = vadd.f32 %v3415, %v3433
      %3435 = vdwg.mxu0
      %3436 = vmatpush.msra.mxu0 %v3190
      %3437 = vmatpush.msra.mxu0 %v3189
      %3438 = vmatpush.msra.mxu0 %v3188
      %3439 = vmatpush.msra.mxu0 %v3187
      %3440 = vmatpush.msra.mxu0 %v3186
      %3441 = vmatpush.msra.mxu0 %v3185
      %3442 = vmatpush.msra.mxu0 %v3184
      %3443 = vmatpush.msra.mxu0 %v3183
      %3444 = vmatpush.msra.mxu0 %v3182
      %3445 = vmatpush.msra.mxu0 %v3181
      %3446 = vmatpush.msra.mxu0 %v3180
      %3447 = vmatpush.msra.mxu0 %v3179
      %3448 = vmatpush.msra.mxu0 %v3178
      %3449 = vmatpush.msra.mxu0 %v3177
      %3450 = vmatpush.msra.mxu0 %v3176
      %3451 = vmatpush.msra.mxu0 %v3175
      %3452 = vmatmul.f32.gmra.mxu0 %v3143
      %v3453 = vpop.f32.mrf.mxu0
      %v3454 = vadd.f32 %v3434, %v3453
      %3455 = vdwg.mxu0
      %3456 = vmatpush.msra.mxu0 %v3206
      %3457 = vmatpush.msra.mxu0 %v3205
      %3458 = vmatpush.msra.mxu0 %v3204
      %3459 = vmatpush.msra.mxu0 %v3203
      %3460 = vmatpush.msra.mxu0 %v3202
      %3461 = vmatpush.msra.mxu0 %v3201
      %3462 = vmatpush.msra.mxu0 %v3200
      %3463 = vmatpush.msra.mxu0 %v3199
      %3464 = vmatpush.msra.mxu0 %v3198
      %3465 = vmatpush.msra.mxu0 %v3197
      %3466 = vmatpush.msra.mxu0 %v3196
      %3467 = vmatpush.msra.mxu0 %v3195
      %3468 = vmatpush.msra.mxu0 %v3194
      %3469 = vmatpush.msra.mxu0 %v3193
      %3470 = vmatpush.msra.mxu0 %v3192
      %3471 = vmatpush.msra.mxu0 %v3191
      %3472 = vmatmul.f32.gmra.mxu0 %v3144
      %v3473 = vpop.f32.mrf.mxu0
      %v3474 = vadd.f32 %v3454, %v3473
      %3475 = vdwg.mxu0
      %3476 = vmatpush.msra.mxu0 %v3222
      %3477 = vmatpush.msra.mxu0 %v3221
      %3478 = vmatpush.msra.mxu0 %v3220
      %3479 = vmatpush.msra.mxu0 %v3219
      %3480 = vmatpush.msra.mxu0 %v3218
      %3481 = vmatpush.msra.mxu0 %v3217
      %3482 = vmatpush.msra.mxu0 %v3216
      %3483 = vmatpush.msra.mxu0 %v3215
      %3484 = vmatpush.msra.mxu0 %v3214
      %3485 = vmatpush.msra.mxu0 %v3213
      %3486 = vmatpush.msra.mxu0 %v3212
      %3487 = vmatpush.msra.mxu0 %v3211
      %3488 = vmatpush.msra.mxu0 %v3210
      %3489 = vmatpush.msra.mxu0 %v3209
      %3490 = vmatpush.msra.mxu0 %v3208
      %3491 = vmatpush.msra.mxu0 %v3207
      %3492 = vmatmul.f32.gmra.mxu0 %v3145
      %v3493 = vpop.f32.mrf.mxu0
      %v3494 = vadd.f32 %v3474, %v3493
      %3495 = vdwg.mxu0
      %3496 = vmatpush.msra.mxu0 %v3238
      %3497 = vmatpush.msra.mxu0 %v3237
      %3498 = vmatpush.msra.mxu0 %v3236
      %3499 = vmatpush.msra.mxu0 %v3235
      %3500 = vmatpush.msra.mxu0 %v3234
      %3501 = vmatpush.msra.mxu0 %v3233
      %3502 = vmatpush.msra.mxu0 %v3232
      %3503 = vmatpush.msra.mxu0 %v3231
      %3504 = vmatpush.msra.mxu0 %v3230
      %3505 = vmatpush.msra.mxu0 %v3229
      %3506 = vmatpush.msra.mxu0 %v3228
      %3507 = vmatpush.msra.mxu0 %v3227
      %3508 = vmatpush.msra.mxu0 %v3226
      %3509 = vmatpush.msra.mxu0 %v3225
      %3510 = vmatpush.msra.mxu0 %v3224
      %3511 = vmatpush.msra.mxu0 %v3223
      %3512 = vmatmul.f32.gmra.mxu0 %v3146
      %v3513 = vpop.f32.mrf.mxu0
      %v3514 = vadd.f32 %v3494, %v3513
      %3515 = vdwg.mxu0
      %3516 = vmatpush.msra.mxu0 %v3254
      %3517 = vmatpush.msra.mxu0 %v3253
      %3518 = vmatpush.msra.mxu0 %v3252
      %3519 = vmatpush.msra.mxu0 %v3251
      %3520 = vmatpush.msra.mxu0 %v3250
      %3521 = vmatpush.msra.mxu0 %v3249
      %3522 = vmatpush.msra.mxu0 %v3248
      %3523 = vmatpush.msra.mxu0 %v3247
      %3524 = vmatpush.msra.mxu0 %v3246
      %3525 = vmatpush.msra.mxu0 %v3245
      %3526 = vmatpush.msra.mxu0 %v3244
      %3527 = vmatpush.msra.mxu0 %v3243
      %3528 = vmatpush.msra.mxu0 %v3242
      %3529 = vmatpush.msra.mxu0 %v3241
      %3530 = vmatpush.msra.mxu0 %v3240
      %3531 = vmatpush.msra.mxu0 %v3239
      %3532 = vmatmul.f32.gmra.mxu0 %v3147
      %v3533 = vpop.f32.mrf.mxu0
      %v3534 = vadd.f32 %v3514, %v3533
      %3535 = vdwg.mxu0
      %3536 = vmatpush.msra.mxu0 %v3270
      %3537 = vmatpush.msra.mxu0 %v3269
      %3538 = vmatpush.msra.mxu0 %v3268
      %3539 = vmatpush.msra.mxu0 %v3267
      %3540 = vmatpush.msra.mxu0 %v3266
      %3541 = vmatpush.msra.mxu0 %v3265
      %3542 = vmatpush.msra.mxu0 %v3264
      %3543 = vmatpush.msra.mxu0 %v3263
      %3544 = vmatpush.msra.mxu0 %v3262
      %3545 = vmatpush.msra.mxu0 %v3261
      %3546 = vmatpush.msra.mxu0 %v3260
      %3547 = vmatpush.msra.mxu0 %v3259
      %3548 = vmatpush.msra.mxu0 %v3258
      %3549 = vmatpush.msra.mxu0 %v3257
      %3550 = vmatpush.msra.mxu0 %v3256
      %3551 = vmatpush.msra.mxu0 %v3255
      %3552 = vmatmul.f32.gmra.mxu0 %v3148
      %v3553 = vpop.f32.mrf.mxu0
      %v3554 = vadd.f32 %v3534, %v3553
      %3555 = vdwg.mxu0
      %3556 = vmatpush.msra.mxu0 %v3286
      %3557 = vmatpush.msra.mxu0 %v3285
      %3558 = vmatpush.msra.mxu0 %v3284
      %3559 = vmatpush.msra.mxu0 %v3283
      %3560 = vmatpush.msra.mxu0 %v3282
      %3561 = vmatpush.msra.mxu0 %v3281
      %3562 = vmatpush.msra.mxu0 %v3280
      %3563 = vmatpush.msra.mxu0 %v3279
      %3564 = vmatpush.msra.mxu0 %v3278
      %3565 = vmatpush.msra.mxu0 %v3277
      %3566 = vmatpush.msra.mxu0 %v3276
      %3567 = vmatpush.msra.mxu0 %v3275
      %3568 = vmatpush.msra.mxu0 %v3274
      %3569 = vmatpush.msra.mxu0 %v3273
      %3570 = vmatpush.msra.mxu0 %v3272
      %3571 = vmatpush.msra.mxu0 %v3271
      %3572 = vmatmul.f32.gmra.mxu0 %v3149
      %v3573 = vpop.f32.mrf.mxu0
      %v3574 = vadd.f32 %v3554, %v3573
      %3575 = vdwg.mxu0
      %3576 = vmatpush.msra.mxu0 %v3302
      %3577 = vmatpush.msra.mxu0 %v3301
      %3578 = vmatpush.msra.mxu0 %v3300
      %3579 = vmatpush.msra.mxu0 %v3299
      %3580 = vmatpush.msra.mxu0 %v3298
      %3581 = vmatpush.msra.mxu0 %v3297
      %3582 = vmatpush.msra.mxu0 %v3296
      %3583 = vmatpush.msra.mxu0 %v3295
      %3584 = vmatpush.msra.mxu0 %v3294
      %3585 = vmatpush.msra.mxu0 %v3293
      %3586 = vmatpush.msra.mxu0 %v3292
      %3587 = vmatpush.msra.mxu0 %v3291
      %3588 = vmatpush.msra.mxu0 %v3290
      %3589 = vmatpush.msra.mxu0 %v3289
      %3590 = vmatpush.msra.mxu0 %v3288
      %3591 = vmatpush.msra.mxu0 %v3287
      %3592 = vmatmul.f32.gmra.mxu0 %v3150
      %v3593 = vpop.f32.mrf.mxu0
      %v3594 = vadd.f32 %v3574, %v3593
      %3595 = vdwg.mxu0
      %3596 = vmatpush.msra.mxu0 %v3318
      %3597 = vmatpush.msra.mxu0 %v3317
      %3598 = vmatpush.msra.mxu0 %v3316
      %3599 = vmatpush.msra.mxu0 %v3315
      %3600 = vmatpush.msra.mxu0 %v3314
      %3601 = vmatpush.msra.mxu0 %v3313
      %3602 = vmatpush.msra.mxu0 %v3312
      %3603 = vmatpush.msra.mxu0 %v3311
      %3604 = vmatpush.msra.mxu0 %v3310
      %3605 = vmatpush.msra.mxu0 %v3309
      %3606 = vmatpush.msra.mxu0 %v3308
      %3607 = vmatpush.msra.mxu0 %v3307
      %3608 = vmatpush.msra.mxu0 %v3306
      %3609 = vmatpush.msra.mxu0 %v3305
      %3610 = vmatpush.msra.mxu0 %v3304
      %3611 = vmatpush.msra.mxu0 %v3303
      %3612 = vmatmul.f32.gmra.mxu0 %v3151
      %v3613 = vpop.f32.mrf.mxu0
      %v3614 = vadd.f32 %v3594, %v3613
      %3615 = vdwg.mxu0
      %3616 = vmatpush.msra.mxu0 %v3334
      %3617 = vmatpush.msra.mxu0 %v3333
      %3618 = vmatpush.msra.mxu0 %v3332
      %3619 = vmatpush.msra.mxu0 %v3331
      %3620 = vmatpush.msra.mxu0 %v3330
      %3621 = vmatpush.msra.mxu0 %v3329
      %3622 = vmatpush.msra.mxu0 %v3328
      %3623 = vmatpush.msra.mxu0 %v3327
      %3624 = vmatpush.msra.mxu0 %v3326
      %3625 = vmatpush.msra.mxu0 %v3325
      %3626 = vmatpush.msra.mxu0 %v3324
      %3627 = vmatpush.msra.mxu0 %v3323
      %3628 = vmatpush.msra.mxu0 %v3322
      %3629 = vmatpush.msra.mxu0 %v3321
      %3630 = vmatpush.msra.mxu0 %v3320
      %3631 = vmatpush.msra.mxu0 %v3319
      %3632 = vmatmul.f32.gmra.mxu0 %v3152
      %v3633 = vpop.f32.mrf.mxu0
      %v3634 = vadd.f32 %v3614, %v3633
      %3635 = vdwg.mxu0
      %3636 = vmatpush.msra.mxu0 %v3350
      %3637 = vmatpush.msra.mxu0 %v3349
      %3638 = vmatpush.msra.mxu0 %v3348
      %3639 = vmatpush.msra.mxu0 %v3347
      %3640 = vmatpush.msra.mxu0 %v3346
      %3641 = vmatpush.msra.mxu0 %v3345
      %3642 = vmatpush.msra.mxu0 %v3344
      %3643 = vmatpush.msra.mxu0 %v3343
      %3644 = vmatpush.msra.mxu0 %v3342
      %3645 = vmatpush.msra.mxu0 %v3341
      %3646 = vmatpush.msra.mxu0 %v3340
      %3647 = vmatpush.msra.mxu0 %v3339
      %3648 = vmatpush.msra.mxu0 %v3338
      %3649 = vmatpush.msra.mxu0 %v3337
      %3650 = vmatpush.msra.mxu0 %v3336
      %3651 = vmatpush.msra.mxu0 %v3335
      %3652 = vmatmul.f32.gmra.mxu0 %v3153
      %v3653 = vpop.f32.mrf.mxu0
      %v3654 = vadd.f32 %v3634, %v3653
      %3655 = vdwg.mxu0
      %3656 = vmatpush.msra.mxu0 %v3366
      %3657 = vmatpush.msra.mxu0 %v3365
      %3658 = vmatpush.msra.mxu0 %v3364
      %3659 = vmatpush.msra.mxu0 %v3363
      %3660 = vmatpush.msra.mxu0 %v3362
      %3661 = vmatpush.msra.mxu0 %v3361
      %3662 = vmatpush.msra.mxu0 %v3360
      %3663 = vmatpush.msra.mxu0 %v3359
      %3664 = vmatpush.msra.mxu0 %v3358
      %3665 = vmatpush.msra.mxu0 %v3357
      %3666 = vmatpush.msra.mxu0 %v3356
      %3667 = vmatpush.msra.mxu0 %v3355
      %3668 = vmatpush.msra.mxu0 %v3354
      %3669 = vmatpush.msra.mxu0 %v3353
      %3670 = vmatpush.msra.mxu0 %v3352
      %3671 = vmatpush.msra.mxu0 %v3351
      %3672 = vmatmul.f32.gmra.mxu0 %v3154
      %v3673 = vpop.f32.mrf.mxu0
      %v3674 = vadd.f32 %v3654, %v3673
      %3675 = vdwg.mxu0
      %3676 = vmatpush.msra.mxu0 %v3382
      %3677 = vmatpush.msra.mxu0 %v3381
      %3678 = vmatpush.msra.mxu0 %v3380
      %3679 = vmatpush.msra.mxu0 %v3379
      %3680 = vmatpush.msra.mxu0 %v3378
      %3681 = vmatpush.msra.mxu0 %v3377
      %3682 = vmatpush.msra.mxu0 %v3376
      %3683 = vmatpush.msra.mxu0 %v3375
      %3684 = vmatpush.msra.mxu0 %v3374
      %3685 = vmatpush.msra.mxu0 %v3373
      %3686 = vmatpush.msra.mxu0 %v3372
      %3687 = vmatpush.msra.mxu0 %v3371
      %3688 = vmatpush.msra.mxu0 %v3370
      %3689 = vmatpush.msra.mxu0 %v3369
      %3690 = vmatpush.msra.mxu0 %v3368
      %3691 = vmatpush.msra.mxu0 %v3367
      %3692 = vmatmul.f32.gmra.mxu0 %v3155
      %v3693 = vpop.f32.mrf.mxu0
      %v3694 = vadd.f32 %v3674, %v3693
      %3695 = vdwg.mxu0
      %3696 = vmatpush.msra.mxu0 %v3398
      %3697 = vmatpush.msra.mxu0 %v3397
      %3698 = vmatpush.msra.mxu0 %v3396
      %3699 = vmatpush.msra.mxu0 %v3395
      %3700 = vmatpush.msra.mxu0 %v3394
      %3701 = vmatpush.msra.mxu0 %v3393
      %3702 = vmatpush.msra.mxu0 %v3392
      %3703 = vmatpush.msra.mxu0 %v3391
      %3704 = vmatpush.msra.mxu0 %v3390
      %3705 = vmatpush.msra.mxu0 %v3389
      %3706 = vmatpush.msra.mxu0 %v3388
      %3707 = vmatpush.msra.mxu0 %v3387
      %3708 = vmatpush.msra.mxu0 %v3386
      %3709 = vmatpush.msra.mxu0 %v3385
      %3710 = vmatpush.msra.mxu0 %v3384
      %3711 = vmatpush.msra.mxu0 %v3383
      %3712 = vmatmul.f32.gmra.mxu0 %v3156
      %v3713 = vpop.f32.mrf.mxu0
      %v3714 = vadd.f32 %v3694, %v3713
      %3715 = vdwg.mxu0
      %3716 = vmatpush.msra.mxu0 %v3414
      %3717 = vmatpush.msra.mxu0 %v3413
      %3718 = vmatpush.msra.mxu0 %v3412
      %3719 = vmatpush.msra.mxu0 %v3411
      %3720 = vmatpush.msra.mxu0 %v3410
      %3721 = vmatpush.msra.mxu0 %v3409
      %3722 = vmatpush.msra.mxu0 %v3408
      %3723 = vmatpush.msra.mxu0 %v3407
      %3724 = vmatpush.msra.mxu0 %v3406
      %3725 = vmatpush.msra.mxu0 %v3405
      %3726 = vmatpush.msra.mxu0 %v3404
      %3727 = vmatpush.msra.mxu0 %v3403
      %3728 = vmatpush.msra.mxu0 %v3402
      %3729 = vmatpush.msra.mxu0 %v3401
      %3730 = vmatpush.msra.mxu0 %v3400
      %3731 = vmatpush.msra.mxu0 %v3399
      %3732 = vmatmul.f32.gmra.mxu0 %v3157
      %v3733 = vpop.f32.mrf.mxu0
      %v3734 = vadd.f32 %v3714, %v3733
      %3735 = vdwg.mxu0
      %v3736 = vadd.f32 %v2604, %v3734
      %v3737 = vsel %vm335, %v3736, 0.0
      %3738 = vadd.xlane.f32.xlu0 %v3737
      %v3739 = vpop.xlane.xlu0 %3738
      %v3740 = vmul.f32 %v3739, %v870
      %v3741 = vsub.f32 %v3736, %v3740
      %v3742 = vmul.f32 %v3741, %v3741
      %v3743 = vsel %vm335, %v3742, 0.0
      %3744 = vadd.xlane.f32.xlu0 %v3743
      %v3745 = vpop.xlane.xlu0 %3744
      %v3746 = vmul.f32 %v3745, %v870
      %v3747 = vadd.f32 %v3746, 1e-05
      %v3748 = vrsqrt.pop %v3747
      %v3749 = vmul.f32 %v3748, %v3747
      %v3750 = vmul.f32 %v3749, %v3748
      %v3751 = vmul.f32 0.5, %v3750
      %v3752 = vsub.f32 1.5, %v3751
      %v3753 = vmul.f32 %v3748, %v3752
      %vm3754 = vweird.f32 %v3747
      %vm3755 = vweird.f32 %v3748
      %vm3756 = vmor %vm3754, %vm3755
      %v3757 = vsel %vm3756, %v3748, %v3753
      %v3758 = vmul.f32 %v3741, %v3757
      %v3759 = vperm.slane %v2067, 5
      %v3760 = vmul.f32 %v3758, %v3759
      %v3761 = vperm.slane %v2067, 6
      %v3762 = vadd.f32 %v3760, %v3761
      %3763 = vst.msk [vmem:[%s246] sm:$0xff] %vm335, %v3762
      %p3764 = scmp.lt.s32.totalorder %s17, 1
      %s3765 = scalar_select %p3764, %s17, 1
      %s3766 = smul.addr %s3765, 8
      %s3767 = scalar_lea.vmem %s6, %s3766
      // Predicated region
      $region45: #{encoder_forward.1} parent=43 // pred_check
        %p3768 = pneg %p166
      $region46: #{encoder_forward.1} parent=43 // pred_check_branch
        %3770 = sbr.rel (%p3768) target = $region48
      $region47: #{encoder_forward.1} parent=43 // pred_region
        _
      $region48: #{encoder_forward.1} parent=43 // pred_fallthru
        _
    $region44: #{encoder_forward.1} parent=5 // pred_fallthru
      _
    %p3771 = scmp.le.s32.totalorder 2, %s12
    // Predicated region
    $region49: #{encoder_forward.1} parent=5 // pred_check
      %p3772 = pneg %p3771
    $region50: #{encoder_forward.1} parent=5 // pred_check_branch
      %3774 = sbr.rel (%p3772) target = $region52
    $region51: #{encoder_forward.1} parent=5 // pred_region
      %s3775 = ssub.s32 %s12, 2
      // Predicated region
      $region53: #{encoder_forward.1} parent=51 // pred_check
        %p3776 = pneg %p172
      $region54: #{encoder_forward.1} parent=51 // pred_check_branch
        %3778 = sbr.rel (%p3776) target = $region56
      $region55: #{encoder_forward.1} parent=51 // pred_region
        %p3779 = scmp.lt.s32.totalorder %s18, 1
        %s3780 = scalar_select %p3779, %s18, 1
        %s3781 = smul.addr %s3780, 8
        %s3782 = scalar_lea.vmem %s6, %s3781
      $region56: #{encoder_forward.1} parent=51 // pred_fallthru
        _
    $region52: #{encoder_forward.1} parent=5 // pred_fallthru
      _
  $region6: #{encoder_forward.1} parent=0 // loop_footer
    %s16 = sadd.s32 1, %s12
  $region7: #{encoder_forward.1} parent=0 // loop_footer_branch
    %11 = sbr.rel target = $region3
  $region8: #{encoder_forward.1} parent=0 // loop_exit
    _

</llo_original>
